<compile_context>
chip_gen: v7x
topology: tpu7x:2x2x1
jax: 0.10.0
libtpu: 0.0.40
codegen_flags: <defaults>
</compile_context>

<pallas_src>
import functools

import jax
import jax.numpy as jnp
from jax import lax
from jax.experimental import pallas as pl
from jax.experimental.pallas import tpu as pltpu


# ---------------------------------------------------------------------------
# Shared math helpers (used in-kernel and by the pure-JAX reference)
# ---------------------------------------------------------------------------

def _layer_norm(z, gamma, beta, eps=1e-5):
    # f32 elementwise math (v5e VPU/EUP have no bf16 path).
    mu = jnp.mean(z, axis=-1, keepdims=True)
    var = jnp.mean(jnp.square(z - mu), axis=-1, keepdims=True)
    return (z - mu) * lax.rsqrt(var + eps) * gamma + beta


def _pick_tile(n, preferred):
    for cand in (preferred, 512, 256, 128, 64, 32, 16, 8):
        if cand <= n and n % cand == 0:
            return cand
    return n


def _vmem_limit_bytes():
    # ~96 MiB on 128 MiB parts (v5e/v6e), ~48 MiB on v7x (64 MiB physical).
    try:
        cap = int(pltpu.get_tpu_info().vmem_capacity_bytes)
        return (cap * 3) // 4
    except Exception:
        return 32 * 1024 * 1024   # conservative, known-safe fallback


# ---------------------------------------------------------------------------
# Transformer block kernel (one grid step == one batch element)
# ---------------------------------------------------------------------------

def _block_kernel(x_ref, *refs, num_heads, tr, tq, tk, fuse_gaussian):
    if fuse_gaussian:
        (g1, b1, wqkv, bqkv, wo, bo, g2, b2,
         w1, c1, w2, c2, wg, out_ref, q_scr, k_scr, v_scr) = refs
    else:
        (g1, b1, wqkv, bqkv, wo, bo, g2, b2,
         w1, c1, w2, c2, out_ref, q_scr, k_scr, v_scr) = refs
        wg = None

    S, D = x_ref.shape[1], x_ref.shape[2]
    H = num_heads
    dh = D // H
    scale = 1.0 / (dh ** 0.5)
    bf16 = jnp.bfloat16
    f32 = jnp.float32

    # ---- Pass 1: pre-LN + QKV projection, row-chunked -----------------------
    # q/k/v are written to head-major (H, S, dh) bf16 scratch via one static
    # per-head lane slice (the single up-front relayout).
    n_r = S // tr

    @pl.loop(0, n_r)
    def _(r):
        r0 = pl.multiple_of(r * tr, tr)
        rows = pl.ds(r0, tr)
        xc = x_ref[0, rows, :]                               # (tr, D) f32
        hc = _layer_norm(xc, g1[...], b1[...])
        qkv = jnp.dot(hc.astype(bf16), wqkv[...],
                      preferred_element_type=f32) + bqkv[...]   # (tr, 3D) f32
        for h in range(H):                   # static unroll, data move only
            lo = h * dh
            q_scr[h, rows, :] = (qkv[:, lo:lo + dh] * scale).astype(bf16)
            k_scr[h, rows, :] = qkv[:, D + lo:D + lo + dh].astype(bf16)
            v_scr[h, rows, :] = qkv[:, 2 * D + lo:2 * D + lo + dh].astype(bf16)

    # ---- Pass 2: flash attention + Wo + residual + FFN [+ to_gaussian] ------
    n_q = S // tq
    n_k = S // tk

    @pl.loop(0, n_q)
    def _(qi):
        q0 = pl.multiple_of(qi * tq, tq)
        qrows = pl.ds(q0, tq)
        q_t = q_scr[:, qrows, :]                             # (H, tq, dh) bf16

        def kv_step(ki, carry):
            m_i, l_i, acc = carry
            k0 = pl.multiple_of(ki * tk, tk)
            krows = pl.ds(k0, tk)
            k_t = k_scr[:, krows, :]                         # (H, tk, dh) bf16
            v_t = v_scr[:, krows, :]
            s = jnp.einsum('hqd,hkd->hqk', q_t, k_t,
                           preferred_element_type=f32)        # (H, tq, tk)
            m_new = jnp.maximum(m_i, jnp.max(s, axis=-1, keepdims=True))
            alpha = jnp.exp(m_i - m_new)
            p = jnp.exp(s - m_new)
            l_new = alpha * l_i + jnp.sum(p, axis=-1, keepdims=True)
            acc_new = alpha * acc + jnp.einsum(
                'hqk,hkd->hqd', p.astype(bf16), v_t,
                preferred_element_type=f32)
            return m_new, l_new, acc_new

        m0 = jnp.full((H, tq, 1), -1e30, f32)
        l0 = jnp.zeros((H, tq, 1), f32)
        a0 = jnp.zeros((H, tq, dh), f32)
        _mf, l_f, acc = lax.fori_loop(0, n_k, kv_step, (m0, l0, a0))

        ctx = acc * pl.reciprocal(l_f, approx=True)           # (H, tq, dh) f32
        # merge heads back to row-major (tq, D) with static lane concatenation
        ctx = jnp.concatenate([ctx[h] for h in range(H)], axis=-1)

        xq = x_ref[0, qrows, :]
        attn = jnp.dot(ctx.astype(bf16), wo[...],
                       preferred_element_type=f32) + bo[...]
        x1 = xq + attn

        h2 = _layer_norm(x1, g2[...], b2[...])
        m = jnp.dot(h2.astype(bf16), w1[...],
                    preferred_element_type=f32) + c1[...]      # (tq, Dff)
        m = jnp.maximum(m, 0.0)                                # ReLU
        y = x1 + jnp.dot(m.astype(bf16), w2[...],
                         preferred_element_type=f32) + c2[...]
        if wg is not None:                                     # fused to_gaussian
            y = jnp.dot(y.astype(bf16), wg[...],
                        preferred_element_type=f32)
        out_ref[0, qrows, :] = y.astype(out_ref.dtype)


def _gaussian_proj_kernel(x_ref, w_ref, out_ref):
    # Standalone to_gaussian (only used when there are zero layers).
    out_ref[...] = jnp.dot(x_ref[...].astype(jnp.bfloat16), w_ref[...],
                           preferred_element_type=jnp.float32)


# ---------------------------------------------------------------------------
# Wrappers
# ---------------------------------------------------------------------------

def _block_cost(B, S, D, Dff, H, Dout, fused):
    matmul_flops = 2 * B * S * (3 * D * D + D * D + 2 * D * Dff)
    attn_flops = 4 * B * H * S * S * (D // H)
    proj_flops = 2 * B * S * D * Dout if fused else 0
    transcendentals = B * H * S * S + 2 * B * S               # exp + rsqrt
    w_bytes = 2 * (4 * D * D + 2 * D * Dff + (D * Dout if fused else 0))
    act_bytes = 4 * B * S * (D + Dout)
    return pl.CostEstimate(flops=int(matmul_flops + attn_flops + proj_flops),
                           transcendentals=int(transcendentals),
                           bytes_accessed=int(w_bytes + act_bytes))


def _run_block(x, p, num_heads, w_gauss, single_buffer_weights):
    B, S, D = x.shape
    assert D % num_heads == 0, "dim must be divisible by num_heads"
    Dff = int(p["w1"].shape[1])
    fused = w_gauss is not None
    Dout = int(w_gauss.shape[1]) if fused else D
    H = num_heads
    dh = D // H

    tr = _pick_tile(S, 256)   # QKV / LN row-chunk size
    tq = _pick_tile(S, 256)   # flash-attention Q tile (also FFN row tile)
    tk = _pick_tile(S, 512)   # flash-attention KV tile

    def const_spec(shape):
        # Grid-invariant weights/biases: fetched once, revisited every grid
        # step -> single-buffer them so they do not burn double VMEM.
        nd = len(shape)
        if single_buffer_weights:
            return pl.BlockSpec(shape, lambda b, _n=nd: (0,) * _n,
                                pipeline_mode=pl.Buffered(1))
        return pl.BlockSpec(shape, lambda b, _n=nd: (0,) * _n)

    in_specs = [
        pl.BlockSpec((1, S, D), lambda b: (b, 0, 0)),   # x (per-batch block)
        const_spec((1, D)), const_spec((1, D)),         # ln1 gamma/beta
        const_spec((D, 3 * D)), const_spec((1, 3 * D)),  # Wqkv, bqkv
        const_spec((D, D)), const_spec((1, D)),          # Wo, bo
        const_spec((1, D)), const_spec((1, D)),          # ln2 gamma/beta
        const_spec((D, Dff)), const_spec((1, Dff)),      # W1, b1
        const_spec((Dff, D)), const_spec((1, D)),        # W2, b2
    ]
    args = [x, p["g1"], p["b1"], p["wqkv"], p["bqkv"], p["wo"], p["bo"],
            p["g2"], p["b2"], p["w1"], p["c1"], p["w2"], p["c2"]]
    if fused:
        in_specs.append(const_spec((D, Dout)))           # to_gaussian weight
        args.append(w_gauss)

    kernel = functools.partial(_block_kernel, num_heads=H, tr=tr, tq=tq,
                               tk=tk, fuse_gaussian=fused)

    return pl.pallas_call(
        kernel,
        out_shape=jax.ShapeDtypeStruct((B, S, Dout), jnp.float32),
        grid_spec=pltpu.PrefetchScalarGridSpec(
            num_scalar_prefetch=0,
            grid=(B,),
            in_specs=in_specs,
            out_specs=pl.BlockSpec((1, S, Dout), lambda b: (b, 0, 0)),
            scratch_shapes=[pltpu.VMEM((H, S, dh), jnp.bfloat16),
                            pltpu.VMEM((H, S, dh), jnp.bfloat16),
                            pltpu.VMEM((H, S, dh), jnp.bfloat16)],
        ),
        compiler_params=pltpu.CompilerParams(
            dimension_semantics=("parallel",),
            vmem_limit_bytes=_vmem_limit_bytes()),
        cost_estimate=_block_cost(B, S, D, Dff, H, Dout, fused),
    )(*args)


def run_transformer_block(x, p, num_heads, w_gauss=None):
    try:
        return _run_block(x, p, num_heads, w_gauss, single_buffer_weights=True)
    except Exception:
        # TODO(synk): pl.Buffered(1) pipeline_mode rejected by this jax
        # version; fall back to default (double-buffered) weight blocks.
        return _run_block(x, p, num_heads, w_gauss, single_buffer_weights=False)


def run_to_gaussian(x, w):
    # Row-tiled standalone projection (only hit when num_layers == 0).
    B, S, D = x.shape
    Dout = int(w.shape[1])
    rows = B * S
    xf = x.reshape(rows, D)
    TM = _pick_tile(rows, 512)
    out = pl.pallas_call(
        _gaussian_proj_kernel,
        out_shape=jax.ShapeDtypeStruct((rows, Dout), jnp.float32),
        grid_spec=pltpu.PrefetchScalarGridSpec(
            num_scalar_prefetch=0,
            grid=(rows // TM,),
            in_specs=[pl.BlockSpec((TM, D), lambda i: (i, 0)),
                      pl.BlockSpec((D, Dout), lambda i: (0, 0))],
            out_specs=pl.BlockSpec((TM, Dout), lambda i: (i, 0)),
        ),
        compiler_params=pltpu.CompilerParams(
            dimension_semantics=("parallel",),
            vmem_limit_bytes=_vmem_limit_bytes()),
        cost_estimate=pl.CostEstimate(
            flops=2 * rows * D * Dout, transcendentals=0,
            bytes_accessed=4 * rows * (D + Dout) + 2 * D * Dout),
    )(xf, w)
    return out.reshape(B, S, Dout)


def bitransformer_forward(tokens, params, num_heads):
    # Embedding gather is glue (pure table lookup, not a hot matmul path).
    x = jnp.take(params["embed"], tokens, axis=0)            # (B, S, D) f32
    layers = params["layers"]
    if not layers:
        return run_to_gaussian(x, params["to_gaussian"])
    for lp in layers[:-1]:
        x = run_transformer_block(x, lp, num_heads)
    # Last block has to_gaussian fused in (saves one HBM round-trip of x).
    return run_transformer_block(x, layers[-1], num_heads,
                                 w_gauss=params["to_gaussian"])


# ---------------------------------------------------------------------------
# Pure-JAX reference (f32 math, same bf16-stored weights) for tolerance check
# ---------------------------------------------------------------------------

def reference_forward(tokens, params, num_heads):
    f = lambda a: a.astype(jnp.float32)
    x = jnp.take(params["embed"], tokens, axis=0)
    B, S, D = x.shape
    H = num_heads
    dh = D // H
    for p in params["layers"]:
        h = _layer_norm(x, p["g1"], p["b1"])
        qkv = h @ f(p["wqkv"]) + p["bqkv"]
        q = qkv[..., :D].reshape(B, S, H, dh)
        k = qkv[..., D:2 * D].reshape(B, S, H, dh)
        v = qkv[..., 2 * D:].reshape(B, S, H, dh)
        s = jnp.einsum('bqhd,bkhd->bhqk', q, k) / (dh ** 0.5)
        pr = jax.nn.softmax(s, axis=-1)
        ctx = jnp.einsum('bhqk,bkhd->bqhd', pr, v).reshape(B, S, D)
        x = x + ctx @ f(p["wo"]) + p["bo"]
        h2 = _layer_norm(x, p["g2"], p["b2"])
        m = jnp.maximum(h2 @ f(p["w1"]) + p["c1"], 0.0)
        x = x + m @ f(p["w2"]) + p["c2"]
    return x @ f(params["to_gaussian"])


# ---------------------------------------------------------------------------
# Deterministic parameter initialization (matmul weights stored bf16)
# ---------------------------------------------------------------------------

def init_params(key, num_tokens, dim, num_layers, ffn_mult=4):
    keys = jax.random.split(key, 2 + max(num_layers, 1))
    w = lambda k, shape: (0.02 * jax.random.normal(k, shape, jnp.float32)
                          ).astype(jnp.bfloat16)
    params = {
        "embed": 0.02 * jax.random.normal(keys[0], (num_tokens, dim),
                                          jnp.float32),
        "to_gaussian": w(keys[1], (dim, 2 * dim)),
        "layers": [],
    }
    dff = ffn_mult * dim
    for i in range(num_layers):
        lk = jax.random.split(keys[2 + i], 6)
        params["layers"].append({
            "g1": jnp.ones((1, dim), jnp.float32),
            "b1": jnp.zeros((1, dim), jnp.float32),
            "wqkv": w(lk[0], (dim, 3 * dim)),
            "bqkv": jnp.zeros((1, 3 * dim), jnp.float32),
            "wo": w(lk[1], (dim, dim)),
            "bo": jnp.zeros((1, dim), jnp.float32),
            "g2": jnp.ones((1, dim), jnp.float32),
            "b2": jnp.zeros((1, dim), jnp.float32),
            "w1": w(lk[2], (dim, dff)),
            "c1": jnp.zeros((1, dff), jnp.float32),
            "w2": w(lk[3], (dff, dim)),
            "c2": jnp.zeros((1, dim), jnp.float32),
        })
    return params


# ---------------------------------------------------------------------------
# Main
# ---------------------------------------------------------------------------

if __name__ == "__main__":
    B, S = 2, 8
    num_tokens, dim = 50, 32
    num_layers, num_heads = 2, 4

    key = jax.random.PRNGKey(0)
    pkey, tkey = jax.random.split(key)
    params = init_params(pkey, num_tokens, dim, num_layers)
    tokens = jax.random.randint(tkey, (B, S), 0, num_tokens, dtype=jnp.int32)

    out = bitransformer_forward(tokens, params, num_heads)
    out = jax.block_until_ready(out)
    assert out.shape == (B, S, 2 * dim), out.shape
    assert bool(jnp.all(jnp.isfinite(out)))

    # Tolerance-asserted pure-JAX reference (bf16 operand casts + approx
    # reciprocal in the kernel are the only numeric deviations).
    ref = reference_forward(tokens, params, num_heads)
    err = float(jnp.max(jnp.abs(out - ref)))
    assert err < 2e-2, f"max abs error vs reference: {err}"

    print("KERNEL_OK")
</pallas_src>

<mosaic_0001>
module attributes {stable_mosaic.version = 11 : i64} {
  func.func @_block_kernel(%arg0: i32, %arg1: memref<1x8x32xf32, #tpu.memory_space<vmem>>, %arg2: memref<1x32xf32, #tpu.memory_space<vmem>>, %arg3: memref<1x32xf32, #tpu.memory_space<vmem>>, %arg4: memref<32x96xbf16, #tpu.memory_space<vmem>>, %arg5: memref<1x96xf32, #tpu.memory_space<vmem>>, %arg6: memref<32x32xbf16, #tpu.memory_space<vmem>>, %arg7: memref<1x32xf32, #tpu.memory_space<vmem>>, %arg8: memref<1x32xf32, #tpu.memory_space<vmem>>, %arg9: memref<1x32xf32, #tpu.memory_space<vmem>>, %arg10: memref<32x128xbf16, #tpu.memory_space<vmem>>, %arg11: memref<1x128xf32, #tpu.memory_space<vmem>>, %arg12: memref<128x32xbf16, #tpu.memory_space<vmem>>, %arg13: memref<1x32xf32, #tpu.memory_space<vmem>>, %arg14: memref<1x8x32xf32, #tpu.memory_space<vmem>>, %arg15: memref<4x8x8xbf16, #tpu.memory_space<vmem>>, %arg16: memref<4x8x8xbf16, #tpu.memory_space<vmem>>, %arg17: memref<4x8x8xbf16, #tpu.memory_space<vmem>>) attributes {dimension_semantics = [#tpu.dimension_semantics<parallel>], iteration_bounds = array<i64: 2>, scalar_prefetch = 0 : i64, scratch_operands = 3 : i64, tpu.core_type = #tpu.core_type<tc>, window_params = [{transform_indices = @transform_0, window_bounds = array<i64: 1, 8, 32>}, {pipeline_mode = #tpu.pipeline_mode<synchronous>, transform_indices = @transform_1, window_bounds = array<i64: 1, 32>}, {pipeline_mode = #tpu.pipeline_mode<synchronous>, transform_indices = @transform_2, window_bounds = array<i64: 1, 32>}, {pipeline_mode = #tpu.pipeline_mode<synchronous>, transform_indices = @transform_3, window_bounds = array<i64: 32, 96>}, {pipeline_mode = #tpu.pipeline_mode<synchronous>, transform_indices = @transform_4, window_bounds = array<i64: 1, 96>}, {pipeline_mode = #tpu.pipeline_mode<synchronous>, transform_indices = @transform_5, window_bounds = array<i64: 32, 32>}, {pipeline_mode = #tpu.pipeline_mode<synchronous>, transform_indices = @transform_6, window_bounds = array<i64: 1, 32>}, {pipeline_mode = #tpu.pipeline_mode<synchronous>, transform_indices = @transform_7, window_bounds = array<i64: 1, 32>}, {pipeline_mode = #tpu.pipeline_mode<synchronous>, transform_indices = @transform_8, window_bounds = array<i64: 1, 32>}, {pipeline_mode = #tpu.pipeline_mode<synchronous>, transform_indices = @transform_9, window_bounds = array<i64: 32, 128>}, {pipeline_mode = #tpu.pipeline_mode<synchronous>, transform_indices = @transform_10, window_bounds = array<i64: 1, 128>}, {pipeline_mode = #tpu.pipeline_mode<synchronous>, transform_indices = @transform_11, window_bounds = array<i64: 128, 32>}, {pipeline_mode = #tpu.pipeline_mode<synchronous>, transform_indices = @transform_12, window_bounds = array<i64: 1, 32>}, {transform_indices = @transform_13, window_bounds = array<i64: 1, 8, 32>}]} {
    %c0_i32 = arith.constant 0 : i32
    %c1_i32 = arith.constant 1 : i32
    %0 = arith.muli %c0_i32, %c1_i32 : i32
    %c0_i32_0 = arith.constant 0 : i32
    %1 = arith.addi %c0_i32_0, %0 : i32
    %c8_i32 = arith.constant 8 : i32
    %2 = arith.muli %1, %c8_i32 : i32
    %3 = tpu.assume_multiple %2, 8 : i32
    %c0 = arith.constant 0 : index
    %4 = arith.index_cast %3 : i32 to index
    %c0_1 = arith.constant 0 : index
    %5 = vector.load %arg1[%c0, %4, %c0_1] : memref<1x8x32xf32, #tpu.memory_space<vmem>>, vector<1x8x32xf32>
    %6 = vector.shape_cast %5 : vector<1x8x32xf32> to vector<8x32xf32>
    %c0_2 = arith.constant 0 : index
    %c0_3 = arith.constant 0 : index
    %7 = vector.load %arg2[%c0_2, %c0_3] : memref<1x32xf32, #tpu.memory_space<vmem>>, vector<1x32xf32>
    %c0_4 = arith.constant 0 : index
    %c0_5 = arith.constant 0 : index
    %8 = vector.load %arg3[%c0_4, %c0_5] : memref<1x32xf32, #tpu.memory_space<vmem>>, vector<1x32xf32>
    %cst = arith.constant dense<0.000000e+00> : vector<8xf32>
    %9 = vector.multi_reduction <add>, %6, %cst [1] : vector<8x32xf32> to vector<8xf32>
    %10 = vector.shape_cast %9 : vector<8xf32> to vector<8x1xf32>
    %cst_6 = arith.constant 3.200000e+01 : f32
    %11 = vector.broadcast %cst_6 : f32 to vector<8x1xf32>
    %12 = arith.divf %10, %11 : vector<8x1xf32>
    %13 = vector.broadcast %12 : vector<8x1xf32> to vector<8x32xf32>
    %14 = arith.subf %6, %13 : vector<8x32xf32>
    %15 = arith.mulf %14, %14 : vector<8x32xf32>
    %cst_7 = arith.constant dense<0.000000e+00> : vector<8xf32>
    %16 = vector.multi_reduction <add>, %15, %cst_7 [1] : vector<8x32xf32> to vector<8xf32>
    %17 = vector.shape_cast %16 : vector<8xf32> to vector<8x1xf32>
    %cst_8 = arith.constant 3.200000e+01 : f32
    %18 = vector.broadcast %cst_8 : f32 to vector<8x1xf32>
    %19 = arith.divf %17, %18 : vector<8x1xf32>
    %20 = vector.broadcast %12 : vector<8x1xf32> to vector<8x32xf32>
    %21 = arith.subf %6, %20 : vector<8x32xf32>
    %cst_9 = arith.constant 9.99999974E-6 : f32
    %22 = vector.broadcast %cst_9 : f32 to vector<8x1xf32>
    %23 = arith.addf %19, %22 : vector<8x1xf32>
    %24 = math.rsqrt %23 : vector<8x1xf32>
    %25 = vector.broadcast %24 : vector<8x1xf32> to vector<8x32xf32>
    %26 = arith.mulf %21, %25 : vector<8x32xf32>
    %27 = vector.broadcast %7 : vector<1x32xf32> to vector<8x32xf32>
    %28 = arith.mulf %26, %27 : vector<8x32xf32>
    %29 = vector.broadcast %8 : vector<1x32xf32> to vector<8x32xf32>
    %30 = arith.addf %28, %29 : vector<8x32xf32>
    %31 = arith.truncf %30 : vector<8x32xf32> to vector<8x32xbf16>
    %c0_10 = arith.constant 0 : index
    %c0_11 = arith.constant 0 : index
    %32 = vector.load %arg4[%c0_10, %c0_11] : memref<32x96xbf16, #tpu.memory_space<vmem>>, vector<32x96xbf16>
    %cst_12 = arith.constant dense<0.000000e+00> : vector<8x96xf32>
    %33 = tpu.matmul %31, %32, %cst_12 {dimension_numbers = #tpu.dot_dimension_numbers<[1], [0], [0], [1], [0, 0, 1, 1], [], []>} : vector<8x32xbf16>, vector<32x96xbf16>, vector<8x96xf32> -> vector<8x96xf32>
    %c0_13 = arith.constant 0 : index
    %c0_14 = arith.constant 0 : index
    %34 = vector.load %arg5[%c0_13, %c0_14] : memref<1x96xf32, #tpu.memory_space<vmem>>, vector<1x96xf32>
    %35 = vector.broadcast %34 : vector<1x96xf32> to vector<8x96xf32>
    %36 = arith.addf %33, %35 : vector<8x96xf32>
    %37 = vector.extract_strided_slice %36 {offsets = [0, 0], sizes = [8, 8], strides = [1, 1]} : vector<8x96xf32> to vector<8x8xf32>
    %cst_15 = arith.constant 0.353553385 : f32
    %38 = vector.broadcast %cst_15 : f32 to vector<8x8xf32>
    %39 = arith.mulf %37, %38 : vector<8x8xf32>
    %40 = arith.truncf %39 : vector<8x8xf32> to vector<8x8xbf16>
    %c0_16 = arith.constant 0 : index
    %41 = arith.index_cast %3 : i32 to index
    %c0_17 = arith.constant 0 : index
    %42 = vector.load %arg15[%c0_16, %41, %c0_17] : memref<4x8x8xbf16, #tpu.memory_space<vmem>>, vector<1x8x8xbf16>
    %43 = vector.shape_cast %42 : vector<1x8x8xbf16> to vector<8x8xbf16>
    %44 = vector.shape_cast %40 : vector<8x8xbf16> to vector<1x8x8xbf16>
    tpu.vector_store %arg15[%c0_16, %41, %c0_17], %44 {strides = array<i32>} : memref<4x8x8xbf16, #tpu.memory_space<vmem>>, vector<1x8x8xbf16>,
    %45 = vector.extract_strided_slice %36 {offsets = [0, 32], sizes = [8, 8], strides = [1, 1]} : vector<8x96xf32> to vector<8x8xf32>
    %46 = arith.truncf %45 : vector<8x8xf32> to vector<8x8xbf16>
    %c0_18 = arith.constant 0 : index
    %47 = arith.index_cast %3 : i32 to index
    %c0_19 = arith.constant 0 : index
    %48 = vector.load %arg16[%c0_18, %47, %c0_19] : memref<4x8x8xbf16, #tpu.memory_space<vmem>>, vector<1x8x8xbf16>
    %49 = vector.shape_cast %48 : vector<1x8x8xbf16> to vector<8x8xbf16>
    %50 = vector.shape_cast %46 : vector<8x8xbf16> to vector<1x8x8xbf16>
    tpu.vector_store %arg16[%c0_18, %47, %c0_19], %50 {strides = array<i32>} : memref<4x8x8xbf16, #tpu.memory_space<vmem>>, vector<1x8x8xbf16>,
    %51 = vector.extract_strided_slice %36 {offsets = [0, 64], sizes = [8, 8], strides = [1, 1]} : vector<8x96xf32> to vector<8x8xf32>
    %52 = arith.truncf %51 : vector<8x8xf32> to vector<8x8xbf16>
    %c0_20 = arith.constant 0 : index
    %53 = arith.index_cast %3 : i32 to index
    %c0_21 = arith.constant 0 : index
    %54 = vector.load %arg17[%c0_20, %53, %c0_21] : memref<4x8x8xbf16, #tpu.memory_space<vmem>>, vector<1x8x8xbf16>
    %55 = vector.shape_cast %54 : vector<1x8x8xbf16> to vector<8x8xbf16>
    %56 = vector.shape_cast %52 : vector<8x8xbf16> to vector<1x8x8xbf16>
    tpu.vector_store %arg17[%c0_20, %53, %c0_21], %56 {strides = array<i32>} : memref<4x8x8xbf16, #tpu.memory_space<vmem>>, vector<1x8x8xbf16>,
    %57 = vector.extract_strided_slice %36 {offsets = [0, 8], sizes = [8, 8], strides = [1, 1]} : vector<8x96xf32> to vector<8x8xf32>
    %cst_22 = arith.constant 0.353553385 : f32
    %58 = vector.broadcast %cst_22 : f32 to vector<8x8xf32>
    %59 = arith.mulf %57, %58 : vector<8x8xf32>
    %60 = arith.truncf %59 : vector<8x8xf32> to vector<8x8xbf16>
    %c1 = arith.constant 1 : index
    %61 = arith.index_cast %3 : i32 to index
    %c0_23 = arith.constant 0 : index
    %62 = vector.load %arg15[%c1, %61, %c0_23] : memref<4x8x8xbf16, #tpu.memory_space<vmem>>, vector<1x8x8xbf16>
    %63 = vector.shape_cast %62 : vector<1x8x8xbf16> to vector<8x8xbf16>
    %64 = vector.shape_cast %60 : vector<8x8xbf16> to vector<1x8x8xbf16>
    tpu.vector_store %arg15[%c1, %61, %c0_23], %64 {strides = array<i32>} : memref<4x8x8xbf16, #tpu.memory_space<vmem>>, vector<1x8x8xbf16>,
    %65 = vector.extract_strided_slice %36 {offsets = [0, 40], sizes = [8, 8], strides = [1, 1]} : vector<8x96xf32> to vector<8x8xf32>
    %66 = arith.truncf %65 : vector<8x8xf32> to vector<8x8xbf16>
    %c1_24 = arith.constant 1 : index
    %67 = arith.index_cast %3 : i32 to index
    %c0_25 = arith.constant 0 : index
    %68 = vector.load %arg16[%c1_24, %67, %c0_25] : memref<4x8x8xbf16, #tpu.memory_space<vmem>>, vector<1x8x8xbf16>
    %69 = vector.shape_cast %68 : vector<1x8x8xbf16> to vector<8x8xbf16>
    %70 = vector.shape_cast %66 : vector<8x8xbf16> to vector<1x8x8xbf16>
    tpu.vector_store %arg16[%c1_24, %67, %c0_25], %70 {strides = array<i32>} : memref<4x8x8xbf16, #tpu.memory_space<vmem>>, vector<1x8x8xbf16>,
    %71 = vector.extract_strided_slice %36 {offsets = [0, 72], sizes = [8, 8], strides = [1, 1]} : vector<8x96xf32> to vector<8x8xf32>
    %72 = arith.truncf %71 : vector<8x8xf32> to vector<8x8xbf16>
    %c1_26 = arith.constant 1 : index
    %73 = arith.index_cast %3 : i32 to index
    %c0_27 = arith.constant 0 : index
    %74 = vector.load %arg17[%c1_26, %73, %c0_27] : memref<4x8x8xbf16, #tpu.memory_space<vmem>>, vector<1x8x8xbf16>
    %75 = vector.shape_cast %74 : vector<1x8x8xbf16> to vector<8x8xbf16>
    %76 = vector.shape_cast %72 : vector<8x8xbf16> to vector<1x8x8xbf16>
    tpu.vector_store %arg17[%c1_26, %73, %c0_27], %76 {strides = array<i32>} : memref<4x8x8xbf16, #tpu.memory_space<vmem>>, vector<1x8x8xbf16>,
    %77 = vector.extract_strided_slice %36 {offsets = [0, 16], sizes = [8, 8], strides = [1, 1]} : vector<8x96xf32> to vector<8x8xf32>
    %cst_28 = arith.constant 0.353553385 : f32
    %78 = vector.broadcast %cst_28 : f32 to vector<8x8xf32>
    %79 = arith.mulf %77, %78 : vector<8x8xf32>
    %80 = arith.truncf %79 : vector<8x8xf32> to vector<8x8xbf16>
    %c2 = arith.constant 2 : index
    %81 = arith.index_cast %3 : i32 to index
    %c0_29 = arith.constant 0 : index
    %82 = vector.load %arg15[%c2, %81, %c0_29] : memref<4x8x8xbf16, #tpu.memory_space<vmem>>, vector<1x8x8xbf16>
    %83 = vector.shape_cast %82 : vector<1x8x8xbf16> to vector<8x8xbf16>
    %84 = vector.shape_cast %80 : vector<8x8xbf16> to vector<1x8x8xbf16>
    tpu.vector_store %arg15[%c2, %81, %c0_29], %84 {strides = array<i32>} : memref<4x8x8xbf16, #tpu.memory_space<vmem>>, vector<1x8x8xbf16>,
    %85 = vector.extract_strided_slice %36 {offsets = [0, 48], sizes = [8, 8], strides = [1, 1]} : vector<8x96xf32> to vector<8x8xf32>
    %86 = arith.truncf %85 : vector<8x8xf32> to vector<8x8xbf16>
    %c2_30 = arith.constant 2 : index
    %87 = arith.index_cast %3 : i32 to index
    %c0_31 = arith.constant 0 : index
    %88 = vector.load %arg16[%c2_30, %87, %c0_31] : memref<4x8x8xbf16, #tpu.memory_space<vmem>>, vector<1x8x8xbf16>
    %89 = vector.shape_cast %88 : vector<1x8x8xbf16> to vector<8x8xbf16>
    %90 = vector.shape_cast %86 : vector<8x8xbf16> to vector<1x8x8xbf16>
    tpu.vector_store %arg16[%c2_30, %87, %c0_31], %90 {strides = array<i32>} : memref<4x8x8xbf16, #tpu.memory_space<vmem>>, vector<1x8x8xbf16>,
    %91 = vector.extract_strided_slice %36 {offsets = [0, 80], sizes = [8, 8], strides = [1, 1]} : vector<8x96xf32> to vector<8x8xf32>
    %92 = arith.truncf %91 : vector<8x8xf32> to vector<8x8xbf16>
    %c2_32 = arith.constant 2 : index
    %93 = arith.index_cast %3 : i32 to index
    %c0_33 = arith.constant 0 : index
    %94 = vector.load %arg17[%c2_32, %93, %c0_33] : memref<4x8x8xbf16, #tpu.memory_space<vmem>>, vector<1x8x8xbf16>
    %95 = vector.shape_cast %94 : vector<1x8x8xbf16> to vector<8x8xbf16>
    %96 = vector.shape_cast %92 : vector<8x8xbf16> to vector<1x8x8xbf16>
    tpu.vector_store %arg17[%c2_32, %93, %c0_33], %96 {strides = array<i32>} : memref<4x8x8xbf16, #tpu.memory_space<vmem>>, vector<1x8x8xbf16>,
    %97 = vector.extract_strided_slice %36 {offsets = [0, 24], sizes = [8, 8], strides = [1, 1]} : vector<8x96xf32> to vector<8x8xf32>
    %cst_34 = arith.constant 0.353553385 : f32
    %98 = vector.broadcast %cst_34 : f32 to vector<8x8xf32>
    %99 = arith.mulf %97, %98 : vector<8x8xf32>
    %100 = arith.truncf %99 : vector<8x8xf32> to vector<8x8xbf16>
    %c3 = arith.constant 3 : index
    %101 = arith.index_cast %3 : i32 to index
    %c0_35 = arith.constant 0 : index
    %102 = vector.load %arg15[%c3, %101, %c0_35] : memref<4x8x8xbf16, #tpu.memory_space<vmem>>, vector<1x8x8xbf16>
    %103 = vector.shape_cast %102 : vector<1x8x8xbf16> to vector<8x8xbf16>
    %104 = vector.shape_cast %100 : vector<8x8xbf16> to vector<1x8x8xbf16>
    tpu.vector_store %arg15[%c3, %101, %c0_35], %104 {strides = array<i32>} : memref<4x8x8xbf16, #tpu.memory_space<vmem>>, vector<1x8x8xbf16>,
    %105 = vector.extract_strided_slice %36 {offsets = [0, 56], sizes = [8, 8], strides = [1, 1]} : vector<8x96xf32> to vector<8x8xf32>
    %106 = arith.truncf %105 : vector<8x8xf32> to vector<8x8xbf16>
    %c3_36 = arith.constant 3 : index
    %107 = arith.index_cast %3 : i32 to index
    %c0_37 = arith.constant 0 : index
    %108 = vector.load %arg16[%c3_36, %107, %c0_37] : memref<4x8x8xbf16, #tpu.memory_space<vmem>>, vector<1x8x8xbf16>
    %109 = vector.shape_cast %108 : vector<1x8x8xbf16> to vector<8x8xbf16>
    %110 = vector.shape_cast %106 : vector<8x8xbf16> to vector<1x8x8xbf16>
    tpu.vector_store %arg16[%c3_36, %107, %c0_37], %110 {strides = array<i32>} : memref<4x8x8xbf16, #tpu.memory_space<vmem>>, vector<1x8x8xbf16>,
    %111 = vector.extract_strided_slice %36 {offsets = [0, 88], sizes = [8, 8], strides = [1, 1]} : vector<8x96xf32> to vector<8x8xf32>
    %112 = arith.truncf %111 : vector<8x8xf32> to vector<8x8xbf16>
    %c3_38 = arith.constant 3 : index
    %113 = arith.index_cast %3 : i32 to index
    %c0_39 = arith.constant 0 : index
    %114 = vector.load %arg17[%c3_38, %113, %c0_39] : memref<4x8x8xbf16, #tpu.memory_space<vmem>>, vector<1x8x8xbf16>
    %115 = vector.shape_cast %114 : vector<1x8x8xbf16> to vector<8x8xbf16>
    %116 = vector.shape_cast %112 : vector<8x8xbf16> to vector<1x8x8xbf16>
    tpu.vector_store %arg17[%c3_38, %113, %c0_39], %116 {strides = array<i32>} : memref<4x8x8xbf16, #tpu.memory_space<vmem>>, vector<1x8x8xbf16>,
    %c1_i32_40 = arith.constant 1 : i32
    %c0_i32_41 = arith.constant 0 : i32
    %c1_i32_42 = arith.constant 1 : i32
    %117 = arith.muli %c0_i32_41, %c1_i32_42 : i32
    %c0_i32_43 = arith.constant 0 : i32
    %118 = arith.addi %c0_i32_43, %117 : i32
    %c8_i32_44 = arith.constant 8 : i32
    %119 = arith.muli %118, %c8_i32_44 : i32
    %120 = tpu.assume_multiple %119, 8 : i32
    %c0_45 = arith.constant 0 : index
    %121 = arith.index_cast %120 : i32 to index
    %c0_46 = arith.constant 0 : index
    %122 = vector.load %arg15[%c0_45, %121, %c0_46] : memref<4x8x8xbf16, #tpu.memory_space<vmem>>, vector<4x8x8xbf16>
    %cst_47 = arith.constant -1.000000e+30 : f32
    %123 = vector.broadcast %cst_47 : f32 to vector<4x8x1xf32>
    %cst_48 = arith.constant 0.000000e+00 : f32
    %124 = vector.broadcast %cst_48 : f32 to vector<4x8x1xf32>
    %cst_49 = arith.constant 0.000000e+00 : f32
    %125 = vector.broadcast %cst_49 : f32 to vector<4x8x8xf32>
    %c0_i32_50 = arith.constant 0 : i32
    %c8_i32_51 = arith.constant 8 : i32
    %126 = arith.muli %c0_i32_50, %c8_i32_51 : i32
    %127 = tpu.assume_multiple %126, 8 : i32
    %c0_52 = arith.constant 0 : index
    %128 = arith.index_cast %127 : i32 to index
    %c0_53 = arith.constant 0 : index
    %129 = vector.load %arg16[%c0_52, %128, %c0_53] : memref<4x8x8xbf16, #tpu.memory_space<vmem>>, vector<4x8x8xbf16>
    %c0_54 = arith.constant 0 : index
    %130 = arith.index_cast %127 : i32 to index
    %c0_55 = arith.constant 0 : index
    %131 = vector.load %arg17[%c0_54, %130, %c0_55] : memref<4x8x8xbf16, #tpu.memory_space<vmem>>, vector<4x8x8xbf16>
    "tpu.trace_start"() <{level = 10 : i32, message = "hqd,hkd->hqk"}> : () -> ()
    %cst_56 = arith.constant dense<0.000000e+00> : vector<4x8x8xf32>
    %132 = tpu.matmul %122, %129, %cst_56 {dimension_numbers = #tpu.dot_dimension_numbers<[2], [2], [1], [1], [0, 0, 0, 1, 1, 1], [0], [0]>} : vector<4x8x8xbf16>, vector<4x8x8xbf16>, vector<4x8x8xf32> -> vector<4x8x8xf32>
    "tpu.trace_stop"() : () -> ()
    %cst_57 = arith.constant dense<0xFF800000> : vector<4x8xf32>
    %133 = vector.multi_reduction <maximumf>, %132, %cst_57 [2] : vector<4x8x8xf32> to vector<4x8xf32>
    %134 = vector.shape_cast %133 : vector<4x8xf32> to vector<4x8x1xf32>
    %135 = arith.maximumf %123, %134 : vector<4x8x1xf32>
    %136 = arith.subf %123, %135 : vector<4x8x1xf32>
    %137 = math.exp %136 : vector<4x8x1xf32>
    %138 = vector.broadcast %135 : vector<4x8x1xf32> to vector<4x8x8xf32>
    %139 = arith.subf %132, %138 : vector<4x8x8xf32>
    %140 = math.exp %139 : vector<4x8x8xf32>
    %141 = arith.mulf %137, %124 : vector<4x8x1xf32>
    %cst_58 = arith.constant dense<0.000000e+00> : vector<4x8xf32>
    %142 = vector.multi_reduction <add>, %140, %cst_58 [2] : vector<4x8x8xf32> to vector<4x8xf32>
    %143 = vector.shape_cast %142 : vector<4x8xf32> to vector<4x8x1xf32>
    %144 = arith.addf %141, %143 : vector<4x8x1xf32>
    %145 = vector.broadcast %137 : vector<4x8x1xf32> to vector<4x8x8xf32>
    %146 = arith.mulf %145, %125 : vector<4x8x8xf32>
    %147 = arith.truncf %140 : vector<4x8x8xf32> to vector<4x8x8xbf16>
    "tpu.trace_start"() <{level = 10 : i32, message = "hqk,hkd->hqd"}> : () -> ()
    %cst_59 = arith.constant dense<0.000000e+00> : vector<4x8x8xf32>
    %148 = tpu.matmul %147, %131, %cst_59 {dimension_numbers = #tpu.dot_dimension_numbers<[2], [1], [1], [2], [0, 0, 0, 1, 1, 2], [0], [0]>} : vector<4x8x8xbf16>, vector<4x8x8xbf16>, vector<4x8x8xf32> -> vector<4x8x8xf32>
    "tpu.trace_stop"() : () -> ()
    %149 = arith.addf %146, %148 : vector<4x8x8xf32>
    %c1_i32_60 = arith.constant 1 : i32
    %150 = tpu.reciprocal %144 {approx = true} : vector<4x8x1xf32> -> vector<4x8x1xf32>
    %151 = vector.broadcast %150 : vector<4x8x1xf32> to vector<4x8x8xf32>
    %152 = arith.mulf %149, %151 : vector<4x8x8xf32>
    %153 = vector.extract_strided_slice %152 {offsets = [0, 0, 0], sizes = [1, 8, 8], strides = [1, 1, 1]} : vector<4x8x8xf32> to vector<1x8x8xf32>
    %154 = vector.shape_cast %153 : vector<1x8x8xf32> to vector<8x8xf32>
    %155 = vector.extract_strided_slice %152 {offsets = [1, 0, 0], sizes = [1, 8, 8], strides = [1, 1, 1]} : vector<4x8x8xf32> to vector<1x8x8xf32>
    %156 = vector.shape_cast %155 : vector<1x8x8xf32> to vector<8x8xf32>
    %157 = vector.extract_strided_slice %152 {offsets = [2, 0, 0], sizes = [1, 8, 8], strides = [1, 1, 1]} : vector<4x8x8xf32> to vector<1x8x8xf32>
    %158 = vector.shape_cast %157 : vector<1x8x8xf32> to vector<8x8xf32>
    %159 = vector.extract_strided_slice %152 {offsets = [3, 0, 0], sizes = [1, 8, 8], strides = [1, 1, 1]} : vector<4x8x8xf32> to vector<1x8x8xf32>
    %160 = vector.shape_cast %159 : vector<1x8x8xf32> to vector<8x8xf32>
    %161 = tpu.concatenate %154, %156, %158, %160 in 1 : vector<8x8xf32>, vector<8x8xf32>, vector<8x8xf32>, vector<8x8xf32> -> vector<8x32xf32>
    %c0_61 = arith.constant 0 : index
    %162 = arith.index_cast %120 : i32 to index
    %c0_62 = arith.constant 0 : index
    %163 = vector.load %arg1[%c0_61, %162, %c0_62] : memref<1x8x32xf32, #tpu.memory_space<vmem>>, vector<1x8x32xf32>
    %164 = vector.shape_cast %163 : vector<1x8x32xf32> to vector<8x32xf32>
    %165 = arith.truncf %161 : vector<8x32xf32> to vector<8x32xbf16>
    %c0_63 = arith.constant 0 : index
    %c0_64 = arith.constant 0 : index
    %166 = vector.load %arg6[%c0_63, %c0_64] : memref<32x32xbf16, #tpu.memory_space<vmem>>, vector<32x32xbf16>
    %cst_65 = arith.constant dense<0.000000e+00> : vector<8x32xf32>
    %167 = tpu.matmul %165, %166, %cst_65 {dimension_numbers = #tpu.dot_dimension_numbers<[1], [0], [0], [1], [0, 0, 1, 1], [], []>} : vector<8x32xbf16>, vector<32x32xbf16>, vector<8x32xf32> -> vector<8x32xf32>
    %c0_66 = arith.constant 0 : index
    %c0_67 = arith.constant 0 : index
    %168 = vector.load %arg7[%c0_66, %c0_67] : memref<1x32xf32, #tpu.memory_space<vmem>>, vector<1x32xf32>
    %169 = vector.broadcast %168 : vector<1x32xf32> to vector<8x32xf32>
    %170 = arith.addf %167, %169 : vector<8x32xf32>
    %171 = arith.addf %164, %170 : vector<8x32xf32>
    %c0_68 = arith.constant 0 : index
    %c0_69 = arith.constant 0 : index
    %172 = vector.load %arg8[%c0_68, %c0_69] : memref<1x32xf32, #tpu.memory_space<vmem>>, vector<1x32xf32>
    %c0_70 = arith.constant 0 : index
    %c0_71 = arith.constant 0 : index
    %173 = vector.load %arg9[%c0_70, %c0_71] : memref<1x32xf32, #tpu.memory_space<vmem>>, vector<1x32xf32>
    %cst_72 = arith.constant dense<0.000000e+00> : vector<8xf32>
    %174 = vector.multi_reduction <add>, %171, %cst_72 [1] : vector<8x32xf32> to vector<8xf32>
    %175 = vector.shape_cast %174 : vector<8xf32> to vector<8x1xf32>
    %cst_73 = arith.constant 3.200000e+01 : f32
    %176 = vector.broadcast %cst_73 : f32 to vector<8x1xf32>
    %177 = arith.divf %175, %176 : vector<8x1xf32>
    %178 = vector.broadcast %177 : vector<8x1xf32> to vector<8x32xf32>
    %179 = arith.subf %171, %178 : vector<8x32xf32>
    %180 = arith.mulf %179, %179 : vector<8x32xf32>
    %cst_74 = arith.constant dense<0.000000e+00> : vector<8xf32>
    %181 = vector.multi_reduction <add>, %180, %cst_74 [1] : vector<8x32xf32> to vector<8xf32>
    %182 = vector.shape_cast %181 : vector<8xf32> to vector<8x1xf32>
    %cst_75 = arith.constant 3.200000e+01 : f32
    %183 = vector.broadcast %cst_75 : f32 to vector<8x1xf32>
    %184 = arith.divf %182, %183 : vector<8x1xf32>
    %185 = vector.broadcast %177 : vector<8x1xf32> to vector<8x32xf32>
    %186 = arith.subf %171, %185 : vector<8x32xf32>
    %cst_76 = arith.constant 9.99999974E-6 : f32
    %187 = vector.broadcast %cst_76 : f32 to vector<8x1xf32>
    %188 = arith.addf %184, %187 : vector<8x1xf32>
    %189 = math.rsqrt %188 : vector<8x1xf32>
    %190 = vector.broadcast %189 : vector<8x1xf32> to vector<8x32xf32>
    %191 = arith.mulf %186, %190 : vector<8x32xf32>
    %192 = vector.broadcast %172 : vector<1x32xf32> to vector<8x32xf32>
    %193 = arith.mulf %191, %192 : vector<8x32xf32>
    %194 = vector.broadcast %173 : vector<1x32xf32> to vector<8x32xf32>
    %195 = arith.addf %193, %194 : vector<8x32xf32>
    %196 = arith.truncf %195 : vector<8x32xf32> to vector<8x32xbf16>
    %c0_77 = arith.constant 0 : index
    %c0_78 = arith.constant 0 : index
    %197 = vector.load %arg10[%c0_77, %c0_78] : memref<32x128xbf16, #tpu.memory_space<vmem>>, vector<32x128xbf16>
    %cst_79 = arith.constant dense<0.000000e+00> : vector<8x128xf32>
    %198 = tpu.matmul %196, %197, %cst_79 {dimension_numbers = #tpu.dot_dimension_numbers<[1], [0], [0], [1], [0, 0, 1, 1], [], []>} : vector<8x32xbf16>, vector<32x128xbf16>, vector<8x128xf32> -> vector<8x128xf32>
    %c0_80 = arith.constant 0 : index
    %c0_81 = arith.constant 0 : index
    %199 = vector.load %arg11[%c0_80, %c0_81] : memref<1x128xf32, #tpu.memory_space<vmem>>, vector<1x128xf32>
    %200 = vector.broadcast %199 : vector<1x128xf32> to vector<8x128xf32>
    %201 = arith.addf %198, %200 : vector<8x128xf32>
    %cst_82 = arith.constant 0.000000e+00 : f32
    %202 = vector.broadcast %cst_82 : f32 to vector<8x128xf32>
    %203 = arith.maximumf %201, %202 : vector<8x128xf32>
    %204 = arith.truncf %203 : vector<8x128xf32> to vector<8x128xbf16>
    %c0_83 = arith.constant 0 : index
    %c0_84 = arith.constant 0 : index
    %205 = vector.load %arg12[%c0_83, %c0_84] : memref<128x32xbf16, #tpu.memory_space<vmem>>, vector<128x32xbf16>
    %cst_85 = arith.constant dense<0.000000e+00> : vector<8x32xf32>
    %206 = tpu.matmul %204, %205, %cst_85 {dimension_numbers = #tpu.dot_dimension_numbers<[1], [0], [0], [1], [0, 0, 1, 1], [], []>} : vector<8x128xbf16>, vector<128x32xbf16>, vector<8x32xf32> -> vector<8x32xf32>
    %207 = arith.addf %171, %206 : vector<8x32xf32>
    %c0_86 = arith.constant 0 : index
    %c0_87 = arith.constant 0 : index
    %208 = vector.load %arg13[%c0_86, %c0_87] : memref<1x32xf32, #tpu.memory_space<vmem>>, vector<1x32xf32>
    %209 = vector.broadcast %208 : vector<1x32xf32> to vector<8x32xf32>
    %210 = arith.addf %207, %209 : vector<8x32xf32>
    %c0_88 = arith.constant 0 : index
    %211 = arith.index_cast %120 : i32 to index
    %c0_89 = arith.constant 0 : index
    %212 = vector.load %arg14[%c0_88, %211, %c0_89] : memref<1x8x32xf32, #tpu.memory_space<vmem>>, vector<1x8x32xf32>
    %213 = vector.shape_cast %212 : vector<1x8x32xf32> to vector<8x32xf32>
    %214 = vector.shape_cast %210 : vector<8x32xf32> to vector<1x8x32xf32>
    tpu.vector_store %arg14[%c0_88, %211, %c0_89], %214 {strides = array<i32>} : memref<1x8x32xf32, #tpu.memory_space<vmem>>, vector<1x8x32xf32>,
    %c1_i32_90 = arith.constant 1 : i32
    return
  }
  func.func @transform_0(%arg0: i32) -> (i32, i32, i32) {
    %c0_i32 = arith.constant 0 : i32
    %c0_i32_0 = arith.constant 0 : i32
    %c0_i32_1 = arith.constant 0 : i32
    return %arg0, %c0_i32, %c0_i32_0 : i32, i32, i32
  }
  func.func @transform_1(%arg0: i32) -> (i32, i32) {
    %c0_i32 = arith.constant 0 : i32
    %c0_i32_0 = arith.constant 0 : i32
    %c0_i32_1 = arith.constant 0 : i32
    return %c0_i32, %c0_i32_0 : i32, i32
  }
  func.func @transform_2(%arg0: i32) -> (i32, i32) {
    %c0_i32 = arith.constant 0 : i32
    %c0_i32_0 = arith.constant 0 : i32
    %c0_i32_1 = arith.constant 0 : i32
    return %c0_i32, %c0_i32_0 : i32, i32
  }
  func.func @transform_3(%arg0: i32) -> (i32, i32) {
    %c0_i32 = arith.constant 0 : i32
    %c0_i32_0 = arith.constant 0 : i32
    %c0_i32_1 = arith.constant 0 : i32
    return %c0_i32, %c0_i32_0 : i32, i32
  }
  func.func @transform_4(%arg0: i32) -> (i32, i32) {
    %c0_i32 = arith.constant 0 : i32
    %c0_i32_0 = arith.constant 0 : i32
    %c0_i32_1 = arith.constant 0 : i32
    return %c0_i32, %c0_i32_0 : i32, i32
  }
  func.func @transform_5(%arg0: i32) -> (i32, i32) {
    %c0_i32 = arith.constant 0 : i32
    %c0_i32_0 = arith.constant 0 : i32
    %c0_i32_1 = arith.constant 0 : i32
    return %c0_i32, %c0_i32_0 : i32, i32
  }
  func.func @transform_6(%arg0: i32) -> (i32, i32) {
    %c0_i32 = arith.constant 0 : i32
    %c0_i32_0 = arith.constant 0 : i32
    %c0_i32_1 = arith.constant 0 : i32
    return %c0_i32, %c0_i32_0 : i32, i32
  }
  func.func @transform_7(%arg0: i32) -> (i32, i32) {
    %c0_i32 = arith.constant 0 : i32
    %c0_i32_0 = arith.constant 0 : i32
    %c0_i32_1 = arith.constant 0 : i32
    return %c0_i32, %c0_i32_0 : i32, i32
  }
  func.func @transform_8(%arg0: i32) -> (i32, i32) {
    %c0_i32 = arith.constant 0 : i32
    %c0_i32_0 = arith.constant 0 : i32
    %c0_i32_1 = arith.constant 0 : i32
    return %c0_i32, %c0_i32_0 : i32, i32
  }
  func.func @transform_9(%arg0: i32) -> (i32, i32) {
    %c0_i32 = arith.constant 0 : i32
    %c0_i32_0 = arith.constant 0 : i32
    %c0_i32_1 = arith.constant 0 : i32
    return %c0_i32, %c0_i32_0 : i32, i32
  }
  func.func @transform_10(%arg0: i32) -> (i32, i32) {
    %c0_i32 = arith.constant 0 : i32
    %c0_i32_0 = arith.constant 0 : i32
    %c0_i32_1 = arith.constant 0 : i32
    return %c0_i32, %c0_i32_0 : i32, i32
  }
  func.func @transform_11(%arg0: i32) -> (i32, i32) {
    %c0_i32 = arith.constant 0 : i32
    %c0_i32_0 = arith.constant 0 : i32
    %c0_i32_1 = arith.constant 0 : i32
    return %c0_i32, %c0_i32_0 : i32, i32
  }
  func.func @transform_12(%arg0: i32) -> (i32, i32) {
    %c0_i32 = arith.constant 0 : i32
    %c0_i32_0 = arith.constant 0 : i32
    %c0_i32_1 = arith.constant 0 : i32
    return %c0_i32, %c0_i32_0 : i32, i32
  }
  func.func @transform_13(%arg0: i32) -> (i32, i32, i32) {
    %c0_i32 = arith.constant 0 : i32
    %c0_i32_0 = arith.constant 0 : i32
    %c0_i32_1 = arith.constant 0 : i32
    return %arg0, %c0_i32, %c0_i32_0 : i32, i32, i32
  }
}

module attributes {stable_mosaic.version = 11 : i64} {
  func.func @_block_kernel(%arg0: i32, %arg1: memref<1x8x32xf32, #tpu.memory_space<vmem>>, %arg2: memref<1x32xf32, #tpu.memory_space<vmem>>, %arg3: memref<1x32xf32, #tpu.memory_space<vmem>>, %arg4: memref<32x96xbf16, #tpu.memory_space<vmem>>, %arg5: memref<1x96xf32, #tpu.memory_space<vmem>>, %arg6: memref<32x32xbf16, #tpu.memory_space<vmem>>, %arg7: memref<1x32xf32, #tpu.memory_space<vmem>>, %arg8: memref<1x32xf32, #tpu.memory_space<vmem>>, %arg9: memref<1x32xf32, #tpu.memory_space<vmem>>, %arg10: memref<32x128xbf16, #tpu.memory_space<vmem>>, %arg11: memref<1x128xf32, #tpu.memory_space<vmem>>, %arg12: memref<128x32xbf16, #tpu.memory_space<vmem>>, %arg13: memref<1x32xf32, #tpu.memory_space<vmem>>, %arg14: memref<1x8x32xf32, #tpu.memory_space<vmem>>, %arg15: memref<4x8x8xbf16, #tpu.memory_space<vmem>>, %arg16: memref<4x8x8xbf16, #tpu.memory_space<vmem>>, %arg17: memref<4x8x8xbf16, #tpu.memory_space<vmem>>) attributes {dimension_semantics = [#tpu.dimension_semantics<parallel>], iteration_bounds = array<i64: 2>, scalar_prefetch = 0 : i64, scratch_operands = 3 : i64, tpu.core_type = #tpu.core_type<tc>, window_params = [{transform_indices = @transform_0, window_bounds = array<i64: 1, 8, 32>}, {pipeline_mode = #tpu.pipeline_mode<synchronous>, transform_indices = @transform_1, window_bounds = array<i64: 1, 32>}, {pipeline_mode = #tpu.pipeline_mode<synchronous>, transform_indices = @transform_2, window_bounds = array<i64: 1, 32>}, {pipeline_mode = #tpu.pipeline_mode<synchronous>, transform_indices = @transform_3, window_bounds = array<i64: 32, 96>}, {pipeline_mode = #tpu.pipeline_mode<synchronous>, transform_indices = @transform_4, window_bounds = array<i64: 1, 96>}, {pipeline_mode = #tpu.pipeline_mode<synchronous>, transform_indices = @transform_5, window_bounds = array<i64: 32, 32>}, {pipeline_mode = #tpu.pipeline_mode<synchronous>, transform_indices = @transform_6, window_bounds = array<i64: 1, 32>}, {pipeline_mode = #tpu.pipeline_mode<synchronous>, transform_indices = @transform_7, window_bounds = array<i64: 1, 32>}, {pipeline_mode = #tpu.pipeline_mode<synchronous>, transform_indices = @transform_8, window_bounds = array<i64: 1, 32>}, {pipeline_mode = #tpu.pipeline_mode<synchronous>, transform_indices = @transform_9, window_bounds = array<i64: 32, 128>}, {pipeline_mode = #tpu.pipeline_mode<synchronous>, transform_indices = @transform_10, window_bounds = array<i64: 1, 128>}, {pipeline_mode = #tpu.pipeline_mode<synchronous>, transform_indices = @transform_11, window_bounds = array<i64: 128, 32>}, {pipeline_mode = #tpu.pipeline_mode<synchronous>, transform_indices = @transform_12, window_bounds = array<i64: 1, 32>}, {transform_indices = @transform_13, window_bounds = array<i64: 1, 8, 32>}]} {
    %c0_i32 = arith.constant 0 : i32
    %c1_i32 = arith.constant 1 : i32
    %0 = arith.muli %c0_i32, %c1_i32 : i32
    %c0_i32_0 = arith.constant 0 : i32
    %1 = arith.addi %c0_i32_0, %0 : i32
    %c8_i32 = arith.constant 8 : i32
    %2 = arith.muli %1, %c8_i32 : i32
    %3 = tpu.assume_multiple %2, 8 : i32
    %c0 = arith.constant 0 : index
    %4 = arith.index_cast %3 : i32 to index
    %c0_1 = arith.constant 0 : index
    %5 = vector.load %arg1[%c0, %4, %c0_1] : memref<1x8x32xf32, #tpu.memory_space<vmem>>, vector<1x8x32xf32>
    %6 = vector.shape_cast %5 : vector<1x8x32xf32> to vector<8x32xf32>
    %c0_2 = arith.constant 0 : index
    %c0_3 = arith.constant 0 : index
    %7 = vector.load %arg2[%c0_2, %c0_3] : memref<1x32xf32, #tpu.memory_space<vmem>>, vector<1x32xf32>
    %c0_4 = arith.constant 0 : index
    %c0_5 = arith.constant 0 : index
    %8 = vector.load %arg3[%c0_4, %c0_5] : memref<1x32xf32, #tpu.memory_space<vmem>>, vector<1x32xf32>
    %cst = arith.constant dense<0.000000e+00> : vector<8xf32>
    %9 = vector.multi_reduction <add>, %6, %cst [1] : vector<8x32xf32> to vector<8xf32>
    %10 = vector.shape_cast %9 : vector<8xf32> to vector<8x1xf32>
    %cst_6 = arith.constant 3.200000e+01 : f32
    %11 = vector.broadcast %cst_6 : f32 to vector<8x1xf32>
    %12 = arith.divf %10, %11 : vector<8x1xf32>
    %13 = vector.broadcast %12 : vector<8x1xf32> to vector<8x32xf32>
    %14 = arith.subf %6, %13 : vector<8x32xf32>
    %15 = arith.mulf %14, %14 : vector<8x32xf32>
    %cst_7 = arith.constant dense<0.000000e+00> : vector<8xf32>
    %16 = vector.multi_reduction <add>, %15, %cst_7 [1] : vector<8x32xf32> to vector<8xf32>
    %17 = vector.shape_cast %16 : vector<8xf32> to vector<8x1xf32>
    %cst_8 = arith.constant 3.200000e+01 : f32
    %18 = vector.broadcast %cst_8 : f32 to vector<8x1xf32>
    %19 = arith.divf %17, %18 : vector<8x1xf32>
    %20 = vector.broadcast %12 : vector<8x1xf32> to vector<8x32xf32>
    %21 = arith.subf %6, %20 : vector<8x32xf32>
    %cst_9 = arith.constant 9.99999974E-6 : f32
    %22 = vector.broadcast %cst_9 : f32 to vector<8x1xf32>
    %23 = arith.addf %19, %22 : vector<8x1xf32>
    %24 = math.rsqrt %23 : vector<8x1xf32>
    %25 = vector.broadcast %24 : vector<8x1xf32> to vector<8x32xf32>
    %26 = arith.mulf %21, %25 : vector<8x32xf32>
    %27 = vector.broadcast %7 : vector<1x32xf32> to vector<8x32xf32>
    %28 = arith.mulf %26, %27 : vector<8x32xf32>
    %29 = vector.broadcast %8 : vector<1x32xf32> to vector<8x32xf32>
    %30 = arith.addf %28, %29 : vector<8x32xf32>
    %31 = arith.truncf %30 : vector<8x32xf32> to vector<8x32xbf16>
    %c0_10 = arith.constant 0 : index
    %c0_11 = arith.constant 0 : index
    %32 = vector.load %arg4[%c0_10, %c0_11] : memref<32x96xbf16, #tpu.memory_space<vmem>>, vector<32x96xbf16>
    %cst_12 = arith.constant dense<0.000000e+00> : vector<8x96xf32>
    %33 = tpu.matmul %31, %32, %cst_12 {dimension_numbers = #tpu.dot_dimension_numbers<[1], [0], [0], [1], [0, 0, 1, 1], [], []>} : vector<8x32xbf16>, vector<32x96xbf16>, vector<8x96xf32> -> vector<8x96xf32>
    %c0_13 = arith.constant 0 : index
    %c0_14 = arith.constant 0 : index
    %34 = vector.load %arg5[%c0_13, %c0_14] : memref<1x96xf32, #tpu.memory_space<vmem>>, vector<1x96xf32>
    %35 = vector.broadcast %34 : vector<1x96xf32> to vector<8x96xf32>
    %36 = arith.addf %33, %35 : vector<8x96xf32>
    %37 = vector.extract_strided_slice %36 {offsets = [0, 0], sizes = [8, 8], strides = [1, 1]} : vector<8x96xf32> to vector<8x8xf32>
    %cst_15 = arith.constant 0.353553385 : f32
    %38 = vector.broadcast %cst_15 : f32 to vector<8x8xf32>
    %39 = arith.mulf %37, %38 : vector<8x8xf32>
    %40 = arith.truncf %39 : vector<8x8xf32> to vector<8x8xbf16>
    %c0_16 = arith.constant 0 : index
    %41 = arith.index_cast %3 : i32 to index
    %c0_17 = arith.constant 0 : index
    %42 = vector.load %arg15[%c0_16, %41, %c0_17] : memref<4x8x8xbf16, #tpu.memory_space<vmem>>, vector<1x8x8xbf16>
    %43 = vector.shape_cast %42 : vector<1x8x8xbf16> to vector<8x8xbf16>
    %44 = vector.shape_cast %40 : vector<8x8xbf16> to vector<1x8x8xbf16>
    tpu.vector_store %arg15[%c0_16, %41, %c0_17], %44 {strides = array<i32>} : memref<4x8x8xbf16, #tpu.memory_space<vmem>>, vector<1x8x8xbf16>,
    %45 = vector.extract_strided_slice %36 {offsets = [0, 32], sizes = [8, 8], strides = [1, 1]} : vector<8x96xf32> to vector<8x8xf32>
    %46 = arith.truncf %45 : vector<8x8xf32> to vector<8x8xbf16>
    %c0_18 = arith.constant 0 : index
    %47 = arith.index_cast %3 : i32 to index
    %c0_19 = arith.constant 0 : index
    %48 = vector.load %arg16[%c0_18, %47, %c0_19] : memref<4x8x8xbf16, #tpu.memory_space<vmem>>, vector<1x8x8xbf16>
    %49 = vector.shape_cast %48 : vector<1x8x8xbf16> to vector<8x8xbf16>
    %50 = vector.shape_cast %46 : vector<8x8xbf16> to vector<1x8x8xbf16>
    tpu.vector_store %arg16[%c0_18, %47, %c0_19], %50 {strides = array<i32>} : memref<4x8x8xbf16, #tpu.memory_space<vmem>>, vector<1x8x8xbf16>,
    %51 = vector.extract_strided_slice %36 {offsets = [0, 64], sizes = [8, 8], strides = [1, 1]} : vector<8x96xf32> to vector<8x8xf32>
    %52 = arith.truncf %51 : vector<8x8xf32> to vector<8x8xbf16>
    %c0_20 = arith.constant 0 : index
    %53 = arith.index_cast %3 : i32 to index
    %c0_21 = arith.constant 0 : index
    %54 = vector.load %arg17[%c0_20, %53, %c0_21] : memref<4x8x8xbf16, #tpu.memory_space<vmem>>, vector<1x8x8xbf16>
    %55 = vector.shape_cast %54 : vector<1x8x8xbf16> to vector<8x8xbf16>
    %56 = vector.shape_cast %52 : vector<8x8xbf16> to vector<1x8x8xbf16>
    tpu.vector_store %arg17[%c0_20, %53, %c0_21], %56 {strides = array<i32>} : memref<4x8x8xbf16, #tpu.memory_space<vmem>>, vector<1x8x8xbf16>,
    %57 = vector.extract_strided_slice %36 {offsets = [0, 8], sizes = [8, 8], strides = [1, 1]} : vector<8x96xf32> to vector<8x8xf32>
    %cst_22 = arith.constant 0.353553385 : f32
    %58 = vector.broadcast %cst_22 : f32 to vector<8x8xf32>
    %59 = arith.mulf %57, %58 : vector<8x8xf32>
    %60 = arith.truncf %59 : vector<8x8xf32> to vector<8x8xbf16>
    %c1 = arith.constant 1 : index
    %61 = arith.index_cast %3 : i32 to index
    %c0_23 = arith.constant 0 : index
    %62 = vector.load %arg15[%c1, %61, %c0_23] : memref<4x8x8xbf16, #tpu.memory_space<vmem>>, vector<1x8x8xbf16>
    %63 = vector.shape_cast %62 : vector<1x8x8xbf16> to vector<8x8xbf16>
    %64 = vector.shape_cast %60 : vector<8x8xbf16> to vector<1x8x8xbf16>
    tpu.vector_store %arg15[%c1, %61, %c0_23], %64 {strides = array<i32>} : memref<4x8x8xbf16, #tpu.memory_space<vmem>>, vector<1x8x8xbf16>,
    %65 = vector.extract_strided_slice %36 {offsets = [0, 40], sizes = [8, 8], strides = [1, 1]} : vector<8x96xf32> to vector<8x8xf32>
    %66 = arith.truncf %65 : vector<8x8xf32> to vector<8x8xbf16>
    %c1_24 = arith.constant 1 : index
    %67 = arith.index_cast %3 : i32 to index
    %c0_25 = arith.constant 0 : index
    %68 = vector.load %arg16[%c1_24, %67, %c0_25] : memref<4x8x8xbf16, #tpu.memory_space<vmem>>, vector<1x8x8xbf16>
    %69 = vector.shape_cast %68 : vector<1x8x8xbf16> to vector<8x8xbf16>
    %70 = vector.shape_cast %66 : vector<8x8xbf16> to vector<1x8x8xbf16>
    tpu.vector_store %arg16[%c1_24, %67, %c0_25], %70 {strides = array<i32>} : memref<4x8x8xbf16, #tpu.memory_space<vmem>>, vector<1x8x8xbf16>,
    %71 = vector.extract_strided_slice %36 {offsets = [0, 72], sizes = [8, 8], strides = [1, 1]} : vector<8x96xf32> to vector<8x8xf32>
    %72 = arith.truncf %71 : vector<8x8xf32> to vector<8x8xbf16>
    %c1_26 = arith.constant 1 : index
    %73 = arith.index_cast %3 : i32 to index
    %c0_27 = arith.constant 0 : index
    %74 = vector.load %arg17[%c1_26, %73, %c0_27] : memref<4x8x8xbf16, #tpu.memory_space<vmem>>, vector<1x8x8xbf16>
    %75 = vector.shape_cast %74 : vector<1x8x8xbf16> to vector<8x8xbf16>
    %76 = vector.shape_cast %72 : vector<8x8xbf16> to vector<1x8x8xbf16>
    tpu.vector_store %arg17[%c1_26, %73, %c0_27], %76 {strides = array<i32>} : memref<4x8x8xbf16, #tpu.memory_space<vmem>>, vector<1x8x8xbf16>,
    %77 = vector.extract_strided_slice %36 {offsets = [0, 16], sizes = [8, 8], strides = [1, 1]} : vector<8x96xf32> to vector<8x8xf32>
    %cst_28 = arith.constant 0.353553385 : f32
    %78 = vector.broadcast %cst_28 : f32 to vector<8x8xf32>
    %79 = arith.mulf %77, %78 : vector<8x8xf32>
    %80 = arith.truncf %79 : vector<8x8xf32> to vector<8x8xbf16>
    %c2 = arith.constant 2 : index
    %81 = arith.index_cast %3 : i32 to index
    %c0_29 = arith.constant 0 : index
    %82 = vector.load %arg15[%c2, %81, %c0_29] : memref<4x8x8xbf16, #tpu.memory_space<vmem>>, vector<1x8x8xbf16>
    %83 = vector.shape_cast %82 : vector<1x8x8xbf16> to vector<8x8xbf16>
    %84 = vector.shape_cast %80 : vector<8x8xbf16> to vector<1x8x8xbf16>
    tpu.vector_store %arg15[%c2, %81, %c0_29], %84 {strides = array<i32>} : memref<4x8x8xbf16, #tpu.memory_space<vmem>>, vector<1x8x8xbf16>,
    %85 = vector.extract_strided_slice %36 {offsets = [0, 48], sizes = [8, 8], strides = [1, 1]} : vector<8x96xf32> to vector<8x8xf32>
    %86 = arith.truncf %85 : vector<8x8xf32> to vector<8x8xbf16>
    %c2_30 = arith.constant 2 : index
    %87 = arith.index_cast %3 : i32 to index
    %c0_31 = arith.constant 0 : index
    %88 = vector.load %arg16[%c2_30, %87, %c0_31] : memref<4x8x8xbf16, #tpu.memory_space<vmem>>, vector<1x8x8xbf16>
    %89 = vector.shape_cast %88 : vector<1x8x8xbf16> to vector<8x8xbf16>
    %90 = vector.shape_cast %86 : vector<8x8xbf16> to vector<1x8x8xbf16>
    tpu.vector_store %arg16[%c2_30, %87, %c0_31], %90 {strides = array<i32>} : memref<4x8x8xbf16, #tpu.memory_space<vmem>>, vector<1x8x8xbf16>,
    %91 = vector.extract_strided_slice %36 {offsets = [0, 80], sizes = [8, 8], strides = [1, 1]} : vector<8x96xf32> to vector<8x8xf32>
    %92 = arith.truncf %91 : vector<8x8xf32> to vector<8x8xbf16>
    %c2_32 = arith.constant 2 : index
    %93 = arith.index_cast %3 : i32 to index
    %c0_33 = arith.constant 0 : index
    %94 = vector.load %arg17[%c2_32, %93, %c0_33] : memref<4x8x8xbf16, #tpu.memory_space<vmem>>, vector<1x8x8xbf16>
    %95 = vector.shape_cast %94 : vector<1x8x8xbf16> to vector<8x8xbf16>
    %96 = vector.shape_cast %92 : vector<8x8xbf16> to vector<1x8x8xbf16>
    tpu.vector_store %arg17[%c2_32, %93, %c0_33], %96 {strides = array<i32>} : memref<4x8x8xbf16, #tpu.memory_space<vmem>>, vector<1x8x8xbf16>,
    %97 = vector.extract_strided_slice %36 {offsets = [0, 24], sizes = [8, 8], strides = [1, 1]} : vector<8x96xf32> to vector<8x8xf32>
    %cst_34 = arith.constant 0.353553385 : f32
    %98 = vector.broadcast %cst_34 : f32 to vector<8x8xf32>
    %99 = arith.mulf %97, %98 : vector<8x8xf32>
    %100 = arith.truncf %99 : vector<8x8xf32> to vector<8x8xbf16>
    %c3 = arith.constant 3 : index
    %101 = arith.index_cast %3 : i32 to index
    %c0_35 = arith.constant 0 : index
    %102 = vector.load %arg15[%c3, %101, %c0_35] : memref<4x8x8xbf16, #tpu.memory_space<vmem>>, vector<1x8x8xbf16>
    %103 = vector.shape_cast %102 : vector<1x8x8xbf16> to vector<8x8xbf16>
    %104 = vector.shape_cast %100 : vector<8x8xbf16> to vector<1x8x8xbf16>
    tpu.vector_store %arg15[%c3, %101, %c0_35], %104 {strides = array<i32>} : memref<4x8x8xbf16, #tpu.memory_space<vmem>>, vector<1x8x8xbf16>,
    %105 = vector.extract_strided_slice %36 {offsets = [0, 56], sizes = [8, 8], strides = [1, 1]} : vector<8x96xf32> to vector<8x8xf32>
    %106 = arith.truncf %105 : vector<8x8xf32> to vector<8x8xbf16>
    %c3_36 = arith.constant 3 : index
    %107 = arith.index_cast %3 : i32 to index
    %c0_37 = arith.constant 0 : index
    %108 = vector.load %arg16[%c3_36, %107, %c0_37] : memref<4x8x8xbf16, #tpu.memory_space<vmem>>, vector<1x8x8xbf16>
    %109 = vector.shape_cast %108 : vector<1x8x8xbf16> to vector<8x8xbf16>
    %110 = vector.shape_cast %106 : vector<8x8xbf16> to vector<1x8x8xbf16>
    tpu.vector_store %arg16[%c3_36, %107, %c0_37], %110 {strides = array<i32>} : memref<4x8x8xbf16, #tpu.memory_space<vmem>>, vector<1x8x8xbf16>,
    %111 = vector.extract_strided_slice %36 {offsets = [0, 88], sizes = [8, 8], strides = [1, 1]} : vector<8x96xf32> to vector<8x8xf32>
    %112 = arith.truncf %111 : vector<8x8xf32> to vector<8x8xbf16>
    %c3_38 = arith.constant 3 : index
    %113 = arith.index_cast %3 : i32 to index
    %c0_39 = arith.constant 0 : index
    %114 = vector.load %arg17[%c3_38, %113, %c0_39] : memref<4x8x8xbf16, #tpu.memory_space<vmem>>, vector<1x8x8xbf16>
    %115 = vector.shape_cast %114 : vector<1x8x8xbf16> to vector<8x8xbf16>
    %116 = vector.shape_cast %112 : vector<8x8xbf16> to vector<1x8x8xbf16>
    tpu.vector_store %arg17[%c3_38, %113, %c0_39], %116 {strides = array<i32>} : memref<4x8x8xbf16, #tpu.memory_space<vmem>>, vector<1x8x8xbf16>,
    %c1_i32_40 = arith.constant 1 : i32
    %c0_i32_41 = arith.constant 0 : i32
    %c1_i32_42 = arith.constant 1 : i32
    %117 = arith.muli %c0_i32_41, %c1_i32_42 : i32
    %c0_i32_43 = arith.constant 0 : i32
    %118 = arith.addi %c0_i32_43, %117 : i32
    %c8_i32_44 = arith.constant 8 : i32
    %119 = arith.muli %118, %c8_i32_44 : i32
    %120 = tpu.assume_multiple %119, 8 : i32
    %c0_45 = arith.constant 0 : index
    %121 = arith.index_cast %120 : i32 to index
    %c0_46 = arith.constant 0 : index
    %122 = vector.load %arg15[%c0_45, %121, %c0_46] : memref<4x8x8xbf16, #tpu.memory_space<vmem>>, vector<4x8x8xbf16>
    %cst_47 = arith.constant -1.000000e+30 : f32
    %123 = vector.broadcast %cst_47 : f32 to vector<4x8x1xf32>
    %cst_48 = arith.constant 0.000000e+00 : f32
    %124 = vector.broadcast %cst_48 : f32 to vector<4x8x1xf32>
    %cst_49 = arith.constant 0.000000e+00 : f32
    %125 = vector.broadcast %cst_49 : f32 to vector<4x8x8xf32>
    %c0_i32_50 = arith.constant 0 : i32
    %c8_i32_51 = arith.constant 8 : i32
    %126 = arith.muli %c0_i32_50, %c8_i32_51 : i32
    %127 = tpu.assume_multiple %126, 8 : i32
    %c0_52 = arith.constant 0 : index
    %128 = arith.index_cast %127 : i32 to index
    %c0_53 = arith.constant 0 : index
    %129 = vector.load %arg16[%c0_52, %128, %c0_53] : memref<4x8x8xbf16, #tpu.memory_space<vmem>>, vector<4x8x8xbf16>
    %c0_54 = arith.constant 0 : index
    %130 = arith.index_cast %127 : i32 to index
    %c0_55 = arith.constant 0 : index
    %131 = vector.load %arg17[%c0_54, %130, %c0_55] : memref<4x8x8xbf16, #tpu.memory_space<vmem>>, vector<4x8x8xbf16>
    "tpu.trace_start"() <{level = 10 : i32, message = "hqd,hkd->hqk"}> : () -> ()
    %cst_56 = arith.constant dense<0.000000e+00> : vector<4x8x8xf32>
    %132 = tpu.matmul %122, %129, %cst_56 {dimension_numbers = #tpu.dot_dimension_numbers<[2], [2], [1], [1], [0, 0, 0, 1, 1, 1], [0], [0]>} : vector<4x8x8xbf16>, vector<4x8x8xbf16>, vector<4x8x8xf32> -> vector<4x8x8xf32>
    "tpu.trace_stop"() : () -> ()
    %cst_57 = arith.constant dense<0xFF800000> : vector<4x8xf32>
    %133 = vector.multi_reduction <maximumf>, %132, %cst_57 [2] : vector<4x8x8xf32> to vector<4x8xf32>
    %134 = vector.shape_cast %133 : vector<4x8xf32> to vector<4x8x1xf32>
    %135 = arith.maximumf %123, %134 : vector<4x8x1xf32>
    %136 = arith.subf %123, %135 : vector<4x8x1xf32>
    %137 = math.exp %136 : vector<4x8x1xf32>
    %138 = vector.broadcast %135 : vector<4x8x1xf32> to vector<4x8x8xf32>
    %139 = arith.subf %132, %138 : vector<4x8x8xf32>
    %140 = math.exp %139 : vector<4x8x8xf32>
    %141 = arith.mulf %137, %124 : vector<4x8x1xf32>
    %cst_58 = arith.constant dense<0.000000e+00> : vector<4x8xf32>
    %142 = vector.multi_reduction <add>, %140, %cst_58 [2] : vector<4x8x8xf32> to vector<4x8xf32>
    %143 = vector.shape_cast %142 : vector<4x8xf32> to vector<4x8x1xf32>
    %144 = arith.addf %141, %143 : vector<4x8x1xf32>
    %145 = vector.broadcast %137 : vector<4x8x1xf32> to vector<4x8x8xf32>
    %146 = arith.mulf %145, %125 : vector<4x8x8xf32>
    %147 = arith.truncf %140 : vector<4x8x8xf32> to vector<4x8x8xbf16>
    "tpu.trace_start"() <{level = 10 : i32, message = "hqk,hkd->hqd"}> : () -> ()
    %cst_59 = arith.constant dense<0.000000e+00> : vector<4x8x8xf32>
    %148 = tpu.matmul %147, %131, %cst_59 {dimension_numbers = #tpu.dot_dimension_numbers<[2], [1], [1], [2], [0, 0, 0, 1, 1, 2], [0], [0]>} : vector<4x8x8xbf16>, vector<4x8x8xbf16>, vector<4x8x8xf32> -> vector<4x8x8xf32>
    "tpu.trace_stop"() : () -> ()
    %149 = arith.addf %146, %148 : vector<4x8x8xf32>
    %c1_i32_60 = arith.constant 1 : i32
    %150 = tpu.reciprocal %144 {approx = true} : vector<4x8x1xf32> -> vector<4x8x1xf32>
    %151 = vector.broadcast %150 : vector<4x8x1xf32> to vector<4x8x8xf32>
    %152 = arith.mulf %149, %151 : vector<4x8x8xf32>
    %153 = vector.extract_strided_slice %152 {offsets = [0, 0, 0], sizes = [1, 8, 8], strides = [1, 1, 1]} : vector<4x8x8xf32> to vector<1x8x8xf32>
    %154 = vector.shape_cast %153 : vector<1x8x8xf32> to vector<8x8xf32>
    %155 = vector.extract_strided_slice %152 {offsets = [1, 0, 0], sizes = [1, 8, 8], strides = [1, 1, 1]} : vector<4x8x8xf32> to vector<1x8x8xf32>
    %156 = vector.shape_cast %155 : vector<1x8x8xf32> to vector<8x8xf32>
    %157 = vector.extract_strided_slice %152 {offsets = [2, 0, 0], sizes = [1, 8, 8], strides = [1, 1, 1]} : vector<4x8x8xf32> to vector<1x8x8xf32>
    %158 = vector.shape_cast %157 : vector<1x8x8xf32> to vector<8x8xf32>
    %159 = vector.extract_strided_slice %152 {offsets = [3, 0, 0], sizes = [1, 8, 8], strides = [1, 1, 1]} : vector<4x8x8xf32> to vector<1x8x8xf32>
    %160 = vector.shape_cast %159 : vector<1x8x8xf32> to vector<8x8xf32>
    %161 = tpu.concatenate %154, %156, %158, %160 in 1 : vector<8x8xf32>, vector<8x8xf32>, vector<8x8xf32>, vector<8x8xf32> -> vector<8x32xf32>
    %c0_61 = arith.constant 0 : index
    %162 = arith.index_cast %120 : i32 to index
    %c0_62 = arith.constant 0 : index
    %163 = vector.load %arg1[%c0_61, %162, %c0_62] : memref<1x8x32xf32, #tpu.memory_space<vmem>>, vector<1x8x32xf32>
    %164 = vector.shape_cast %163 : vector<1x8x32xf32> to vector<8x32xf32>
    %165 = arith.truncf %161 : vector<8x32xf32> to vector<8x32xbf16>
    %c0_63 = arith.constant 0 : index
    %c0_64 = arith.constant 0 : index
    %166 = vector.load %arg6[%c0_63, %c0_64] : memref<32x32xbf16, #tpu.memory_space<vmem>>, vector<32x32xbf16>
    %cst_65 = arith.constant dense<0.000000e+00> : vector<8x32xf32>
    %167 = tpu.matmul %165, %166, %cst_65 {dimension_numbers = #tpu.dot_dimension_numbers<[1], [0], [0], [1], [0, 0, 1, 1], [], []>} : vector<8x32xbf16>, vector<32x32xbf16>, vector<8x32xf32> -> vector<8x32xf32>
    %c0_66 = arith.constant 0 : index
    %c0_67 = arith.constant 0 : index
    %168 = vector.load %arg7[%c0_66, %c0_67] : memref<1x32xf32, #tpu.memory_space<vmem>>, vector<1x32xf32>
    %169 = vector.broadcast %168 : vector<1x32xf32> to vector<8x32xf32>
    %170 = arith.addf %167, %169 : vector<8x32xf32>
    %171 = arith.addf %164, %170 : vector<8x32xf32>
    %c0_68 = arith.constant 0 : index
    %c0_69 = arith.constant 0 : index
    %172 = vector.load %arg8[%c0_68, %c0_69] : memref<1x32xf32, #tpu.memory_space<vmem>>, vector<1x32xf32>
    %c0_70 = arith.constant 0 : index
    %c0_71 = arith.constant 0 : index
    %173 = vector.load %arg9[%c0_70, %c0_71] : memref<1x32xf32, #tpu.memory_space<vmem>>, vector<1x32xf32>
    %cst_72 = arith.constant dense<0.000000e+00> : vector<8xf32>
    %174 = vector.multi_reduction <add>, %171, %cst_72 [1] : vector<8x32xf32> to vector<8xf32>
    %175 = vector.shape_cast %174 : vector<8xf32> to vector<8x1xf32>
    %cst_73 = arith.constant 3.200000e+01 : f32
    %176 = vector.broadcast %cst_73 : f32 to vector<8x1xf32>
    %177 = arith.divf %175, %176 : vector<8x1xf32>
    %178 = vector.broadcast %177 : vector<8x1xf32> to vector<8x32xf32>
    %179 = arith.subf %171, %178 : vector<8x32xf32>
    %180 = arith.mulf %179, %179 : vector<8x32xf32>
    %cst_74 = arith.constant dense<0.000000e+00> : vector<8xf32>
    %181 = vector.multi_reduction <add>, %180, %cst_74 [1] : vector<8x32xf32> to vector<8xf32>
    %182 = vector.shape_cast %181 : vector<8xf32> to vector<8x1xf32>
    %cst_75 = arith.constant 3.200000e+01 : f32
    %183 = vector.broadcast %cst_75 : f32 to vector<8x1xf32>
    %184 = arith.divf %182, %183 : vector<8x1xf32>
    %185 = vector.broadcast %177 : vector<8x1xf32> to vector<8x32xf32>
    %186 = arith.subf %171, %185 : vector<8x32xf32>
    %cst_76 = arith.constant 9.99999974E-6 : f32
    %187 = vector.broadcast %cst_76 : f32 to vector<8x1xf32>
    %188 = arith.addf %184, %187 : vector<8x1xf32>
    %189 = math.rsqrt %188 : vector<8x1xf32>
    %190 = vector.broadcast %189 : vector<8x1xf32> to vector<8x32xf32>
    %191 = arith.mulf %186, %190 : vector<8x32xf32>
    %192 = vector.broadcast %172 : vector<1x32xf32> to vector<8x32xf32>
    %193 = arith.mulf %191, %192 : vector<8x32xf32>
    %194 = vector.broadcast %173 : vector<1x32xf32> to vector<8x32xf32>
    %195 = arith.addf %193, %194 : vector<8x32xf32>
    %196 = arith.truncf %195 : vector<8x32xf32> to vector<8x32xbf16>
    %c0_77 = arith.constant 0 : index
    %c0_78 = arith.constant 0 : index
    %197 = vector.load %arg10[%c0_77, %c0_78] : memref<32x128xbf16, #tpu.memory_space<vmem>>, vector<32x128xbf16>
    %cst_79 = arith.constant dense<0.000000e+00> : vector<8x128xf32>
    %198 = tpu.matmul %196, %197, %cst_79 {dimension_numbers = #tpu.dot_dimension_numbers<[1], [0], [0], [1], [0, 0, 1, 1], [], []>} : vector<8x32xbf16>, vector<32x128xbf16>, vector<8x128xf32> -> vector<8x128xf32>
    %c0_80 = arith.constant 0 : index
    %c0_81 = arith.constant 0 : index
    %199 = vector.load %arg11[%c0_80, %c0_81] : memref<1x128xf32, #tpu.memory_space<vmem>>, vector<1x128xf32>
    %200 = vector.broadcast %199 : vector<1x128xf32> to vector<8x128xf32>
    %201 = arith.addf %198, %200 : vector<8x128xf32>
    %cst_82 = arith.constant 0.000000e+00 : f32
    %202 = vector.broadcast %cst_82 : f32 to vector<8x128xf32>
    %203 = arith.maximumf %201, %202 : vector<8x128xf32>
    %204 = arith.truncf %203 : vector<8x128xf32> to vector<8x128xbf16>
    %c0_83 = arith.constant 0 : index
    %c0_84 = arith.constant 0 : index
    %205 = vector.load %arg12[%c0_83, %c0_84] : memref<128x32xbf16, #tpu.memory_space<vmem>>, vector<128x32xbf16>
    %cst_85 = arith.constant dense<0.000000e+00> : vector<8x32xf32>
    %206 = tpu.matmul %204, %205, %cst_85 {dimension_numbers = #tpu.dot_dimension_numbers<[1], [0], [0], [1], [0, 0, 1, 1], [], []>} : vector<8x128xbf16>, vector<128x32xbf16>, vector<8x32xf32> -> vector<8x32xf32>
    %207 = arith.addf %171, %206 : vector<8x32xf32>
    %c0_86 = arith.constant 0 : index
    %c0_87 = arith.constant 0 : index
    %208 = vector.load %arg13[%c0_86, %c0_87] : memref<1x32xf32, #tpu.memory_space<vmem>>, vector<1x32xf32>
    %209 = vector.broadcast %208 : vector<1x32xf32> to vector<8x32xf32>
    %210 = arith.addf %207, %209 : vector<8x32xf32>
    %c0_88 = arith.constant 0 : index
    %211 = arith.index_cast %120 : i32 to index
    %c0_89 = arith.constant 0 : index
    %212 = vector.load %arg14[%c0_88, %211, %c0_89] : memref<1x8x32xf32, #tpu.memory_space<vmem>>, vector<1x8x32xf32>
    %213 = vector.shape_cast %212 : vector<1x8x32xf32> to vector<8x32xf32>
    %214 = vector.shape_cast %210 : vector<8x32xf32> to vector<1x8x32xf32>
    tpu.vector_store %arg14[%c0_88, %211, %c0_89], %214 {strides = array<i32>} : memref<1x8x32xf32, #tpu.memory_space<vmem>>, vector<1x8x32xf32>,
    %c1_i32_90 = arith.constant 1 : i32
    return
  }
  func.func @transform_0(%arg0: i32) -> (i32, i32, i32) {
    %c0_i32 = arith.constant 0 : i32
    %c0_i32_0 = arith.constant 0 : i32
    %c0_i32_1 = arith.constant 0 : i32
    return %arg0, %c0_i32, %c0_i32_0 : i32, i32, i32
  }
  func.func @transform_1(%arg0: i32) -> (i32, i32) {
    %c0_i32 = arith.constant 0 : i32
    %c0_i32_0 = arith.constant 0 : i32
    %c0_i32_1 = arith.constant 0 : i32
    return %c0_i32, %c0_i32_0 : i32, i32
  }
  func.func @transform_2(%arg0: i32) -> (i32, i32) {
    %c0_i32 = arith.constant 0 : i32
    %c0_i32_0 = arith.constant 0 : i32
    %c0_i32_1 = arith.constant 0 : i32
    return %c0_i32, %c0_i32_0 : i32, i32
  }
  func.func @transform_3(%arg0: i32) -> (i32, i32) {
    %c0_i32 = arith.constant 0 : i32
    %c0_i32_0 = arith.constant 0 : i32
    %c0_i32_1 = arith.constant 0 : i32
    return %c0_i32, %c0_i32_0 : i32, i32
  }
  func.func @transform_4(%arg0: i32) -> (i32, i32) {
    %c0_i32 = arith.constant 0 : i32
    %c0_i32_0 = arith.constant 0 : i32
    %c0_i32_1 = arith.constant 0 : i32
    return %c0_i32, %c0_i32_0 : i32, i32
  }
  func.func @transform_5(%arg0: i32) -> (i32, i32) {
    %c0_i32 = arith.constant 0 : i32
    %c0_i32_0 = arith.constant 0 : i32
    %c0_i32_1 = arith.constant 0 : i32
    return %c0_i32, %c0_i32_0 : i32, i32
  }
  func.func @transform_6(%arg0: i32) -> (i32, i32) {
    %c0_i32 = arith.constant 0 : i32
    %c0_i32_0 = arith.constant 0 : i32
    %c0_i32_1 = arith.constant 0 : i32
    return %c0_i32, %c0_i32_0 : i32, i32
  }
  func.func @transform_7(%arg0: i32) -> (i32, i32) {
    %c0_i32 = arith.constant 0 : i32
    %c0_i32_0 = arith.constant 0 : i32
    %c0_i32_1 = arith.constant 0 : i32
    return %c0_i32, %c0_i32_0 : i32, i32
  }
  func.func @transform_8(%arg0: i32) -> (i32, i32) {
    %c0_i32 = arith.constant 0 : i32
    %c0_i32_0 = arith.constant 0 : i32
    %c0_i32_1 = arith.constant 0 : i32
    return %c0_i32, %c0_i32_0 : i32, i32
  }
  func.func @transform_9(%arg0: i32) -> (i32, i32) {
    %c0_i32 = arith.constant 0 : i32
    %c0_i32_0 = arith.constant 0 : i32
    %c0_i32_1 = arith.constant 0 : i32
    return %c0_i32, %c0_i32_0 : i32, i32
  }
  func.func @transform_10(%arg0: i32) -> (i32, i32) {
    %c0_i32 = arith.constant 0 : i32
    %c0_i32_0 = arith.constant 0 : i32
    %c0_i32_1 = arith.constant 0 : i32
    return %c0_i32, %c0_i32_0 : i32, i32
  }
  func.func @transform_11(%arg0: i32) -> (i32, i32) {
    %c0_i32 = arith.constant 0 : i32
    %c0_i32_0 = arith.constant 0 : i32
    %c0_i32_1 = arith.constant 0 : i32
    return %c0_i32, %c0_i32_0 : i32, i32
  }
  func.func @transform_12(%arg0: i32) -> (i32, i32) {
    %c0_i32 = arith.constant 0 : i32
    %c0_i32_0 = arith.constant 0 : i32
    %c0_i32_1 = arith.constant 0 : i32
    return %c0_i32, %c0_i32_0 : i32, i32
  }
  func.func @transform_13(%arg0: i32) -> (i32, i32, i32) {
    %c0_i32 = arith.constant 0 : i32
    %c0_i32_0 = arith.constant 0 : i32
    %c0_i32_1 = arith.constant 0 : i32
    return %arg0, %c0_i32, %c0_i32_0 : i32, i32, i32
  }
}

</mosaic_0001>

<llo_original>
// kernel: tpu_custom_call.1
$region0: #{tpu_custom_call.1}
  #allocation0 [shape = 'u32[]', space=smem, size = 0x4, offset = 0x4, fixed_abs, tag = 'smem constant byte address 0x4 - core index']
  #allocation1 [shape = 'u32[144,128]{1,0:T(1,128)}', space=vmem, size = 0x12000, scoped, tag = 'internal scratch']
  #allocation2 [shape = 'bf16[4,8,8]{2,1,0:T(8,128)(2,1)}', space=vmem, size = 0x2000, scoped, tag = 'scratch operand']
  #allocation3 [shape = 'bf16[4,8,8]{2,1,0:T(8,128)(2,1)}', space=vmem, size = 0x2000, scoped, tag = 'scratch operand']
  #allocation4 [shape = 'bf16[4,8,8]{2,1,0:T(8,128)(2,1)}', space=vmem, size = 0x2000, scoped, tag = 'scratch operand']
  %s0 = inlined_call_operand.vmem [shape: f32[2,8,32], index: 0, kind: input, shape index: {}]
  %s1 = inlined_call_operand.vmem [shape: f32[1,32], index: 1, kind: input, shape index: {}]
  %s2 = inlined_call_operand.vmem [shape: f32[1,32], index: 2, kind: input, shape index: {}]
  %s3 = inlined_call_operand.vmem [shape: bf16[32,96], index: 3, kind: input, shape index: {}]
  %s4 = inlined_call_operand.vmem [shape: f32[1,96], index: 4, kind: input, shape index: {}]
  %s5 = inlined_call_operand.vmem [shape: bf16[32,32], index: 5, kind: input, shape index: {}]
  %s6 = inlined_call_operand.vmem [shape: f32[1,32], index: 6, kind: input, shape index: {}]
  %s7 = inlined_call_operand.vmem [shape: f32[1,32], index: 7, kind: input, shape index: {}]
  %s8 = inlined_call_operand.vmem [shape: f32[1,32], index: 8, kind: input, shape index: {}]
  %s9 = inlined_call_operand.vmem [shape: bf16[32,128], index: 9, kind: input, shape index: {}]
  %s10 = inlined_call_operand.vmem [shape: f32[1,128], index: 10, kind: input, shape index: {}]
  %s11 = inlined_call_operand.vmem [shape: bf16[128,32], index: 11, kind: input, shape index: {}]
  %s12 = inlined_call_operand.vmem [shape: f32[1,32], index: 12, kind: input, shape index: {}]
  %s13 = inlined_call_operand.hbm [shape: f32[2,8,32], index: 13, kind: output, shape index: {}]
  %s14 = sld [smem:[#allocation0]]
  $region85: #{tpu_custom_call.1} parent=0
    _
  %s16 = ssub.s32 1, %s14
  %s17 = scalar_select 0, %s16, %s14
  $region1: #{tpu_custom_call.1} parent=0
    #allocation5 [shape = 'u8[8192]{0}', space=vmem, size = 0x2000, scoped, tag = 'output window, operand 0']
    #allocation6 [shape = 's32[2]{0}', space=sflag, size = 0x8, scoped, tag = 'scoped memory for tpu_custom_call.1']
    %18 = vsyncpa [#allocation6], 0
    %s19 = scalar_lea.sflag [#allocation6], 1
    %20 = vsyncpa %s19, 0
    loop: start=0, step=1, limit=4
    $region2: #{tpu_custom_call.1} parent=1 // loop_pre_header
      _
    $region3: #{tpu_custom_call.1} parent=1 // loop_header
      %s22 = sphi 0, %s26
      %p23 = scmp.ge.s32.totalorder %s22, 4
      %s32 = sphi 0, %s34
      %s35 = sphi 0, %s32
      %s36 = sphi 0, %s35
      %s52 = sphi 0, %s36
      %s56 = sphi 0, %s56
      %s58 = sphi 0, %s56
      %s59 = sphi 0, %s58
      %s73 = sphi 0, %s59
      %s77 = sphi 0, %s77
      %s79 = sphi 0, %s77
      %s80 = sphi 0, %s79
      %s94 = sphi 0, %s80
      %s98 = sphi 0, %s98
      %s100 = sphi 0, %s98
      %s101 = sphi 0, %s100
      %s115 = sphi 0, %s101
      %s119 = sphi 0, %s119
      %s121 = sphi 0, %s119
      %s122 = sphi 0, %s121
      %s136 = sphi 0, %s122
      %s140 = sphi 0, %s140
      %s142 = sphi 0, %s140
      %s143 = sphi 0, %s142
      %s157 = sphi 0, %s143
      %s161 = sphi 0, %s161
      %s163 = sphi 0, %s161
      %s164 = sphi 0, %s163
      %s178 = sphi 0, %s164
      %s182 = sphi 0, %s182
      %s184 = sphi 0, %s182
      %s185 = sphi 0, %s184
      %s199 = sphi 0, %s185
      %s203 = sphi 0, %s203
      %s205 = sphi 0, %s203
      %s206 = sphi 0, %s205
      %s220 = sphi 0, %s206
      %s224 = sphi 0, %s224
      %s226 = sphi 0, %s224
      %s227 = sphi 0, %s226
      %s241 = sphi 0, %s227
      %s245 = sphi 0, %s245
      %s247 = sphi 0, %s245
      %s248 = sphi 0, %s247
      %s262 = sphi 0, %s248
      %s266 = sphi 0, %s266
      %s268 = sphi 0, %s266
      %s269 = sphi 0, %s268
      %s283 = sphi 0, %s269
      %s287 = sphi 0, %s287
      %s289 = sphi 0, %s287
      %s290 = sphi 0, %s289
      %s304 = sphi 0, %s290
      %s310 = sphi 0, %s312
      %s313 = sphi 0, %s310
      %s314 = sphi 0, %s313
      %s330 = sphi 0, %s314
    $region4: #{tpu_custom_call.1} parent=1 // loop_header_branch
      %25 = sbr.rel (%p23) target = $region8
    $region5: #{tpu_custom_call.1} parent=1 // loop_body
      %s27 = ssub.s32 %s22, 1
      %s28 = ssub.s32 %s22, 2
      %s29 = sadd.s32 %s22, 1
      %s30 = ssub.s32 %s22, %s29
      %p31 = scmp.eq.s32.totalorder %s30, 0
      %s33 = sadd.s32 %s32, 1
      %s34 = scalar_select %p31, %s32, %s33
      %p37 = pneg %p31
      %p38 = scmp.eq.s32.totalorder %s22, 1
      %p39 = por %p37, %p38
      %p40 = scmp.ne.s32.totalorder %s32, %s35
      %p41 = scmp.eq.s32.totalorder %s22, 0
      %p42 = por %p40, %p41
      %p43 = scmp.ne.s32.totalorder %s32, %s35
      %p44 = scmp.eq.s32.totalorder %s27, 1
      %p45 = por %p43, %p44
      %p46 = scmp.ne.s32.totalorder %s35, %s36
      %p47 = scmp.eq.s32.totalorder %s27, 0
      %p48 = por %p46, %p47
      %p49 = scmp.ne.s32.totalorder %s35, %s36
      %p50 = scmp.eq.s32.totalorder %s28, 1
      %p51 = por %p49, %p50
      %p53 = scmp.ne.s32.totalorder %s36, %s52
      %p54 = scmp.eq.s32.totalorder %s28, 0
      %p55 = por %p53, %p54
      %s57 = sadd.s32 %s56, 1
      %p60 = scmp.eq.s32.totalorder %s22, 1
      %p61 = scmp.ne.s32.totalorder %s56, %s58
      %p62 = scmp.eq.s32.totalorder %s22, 0
      %p63 = por %p61, %p62
      %p64 = scmp.ne.s32.totalorder %s56, %s58
      %p65 = scmp.eq.s32.totalorder %s27, 1
      %p66 = por %p64, %p65
      %p67 = scmp.ne.s32.totalorder %s58, %s59
      %p68 = scmp.eq.s32.totalorder %s27, 0
      %p69 = por %p67, %p68
      %p70 = scmp.ne.s32.totalorder %s58, %s59
      %p71 = scmp.eq.s32.totalorder %s28, 1
      %p72 = por %p70, %p71
      %p74 = scmp.ne.s32.totalorder %s59, %s73
      %p75 = scmp.eq.s32.totalorder %s28, 0
      %p76 = por %p74, %p75
      %s78 = sadd.s32 %s77, 1
      %p81 = scmp.eq.s32.totalorder %s22, 1
      %p82 = scmp.ne.s32.totalorder %s77, %s79
      %p83 = scmp.eq.s32.totalorder %s22, 0
      %p84 = por %p82, %p83
      %p85 = scmp.ne.s32.totalorder %s77, %s79
      %p86 = scmp.eq.s32.totalorder %s27, 1
      %p87 = por %p85, %p86
      %p88 = scmp.ne.s32.totalorder %s79, %s80
      %p89 = scmp.eq.s32.totalorder %s27, 0
      %p90 = por %p88, %p89
      %p91 = scmp.ne.s32.totalorder %s79, %s80
      %p92 = scmp.eq.s32.totalorder %s28, 1
      %p93 = por %p91, %p92
      %p95 = scmp.ne.s32.totalorder %s80, %s94
      %p96 = scmp.eq.s32.totalorder %s28, 0
      %p97 = por %p95, %p96
      %s99 = sadd.s32 %s98, 1
      %p102 = scmp.eq.s32.totalorder %s22, 1
      %p103 = scmp.ne.s32.totalorder %s98, %s100
      %p104 = scmp.eq.s32.totalorder %s22, 0
      %p105 = por %p103, %p104
      %p106 = scmp.ne.s32.totalorder %s98, %s100
      %p107 = scmp.eq.s32.totalorder %s27, 1
      %p108 = por %p106, %p107
      %p109 = scmp.ne.s32.totalorder %s100, %s101
      %p110 = scmp.eq.s32.totalorder %s27, 0
      %p111 = por %p109, %p110
      %p112 = scmp.ne.s32.totalorder %s100, %s101
      %p113 = scmp.eq.s32.totalorder %s28, 1
      %p114 = por %p112, %p113
      %p116 = scmp.ne.s32.totalorder %s101, %s115
      %p117 = scmp.eq.s32.totalorder %s28, 0
      %p118 = por %p116, %p117
      %s120 = sadd.s32 %s119, 1
      %p123 = scmp.eq.s32.totalorder %s22, 1
      %p124 = scmp.ne.s32.totalorder %s119, %s121
      %p125 = scmp.eq.s32.totalorder %s22, 0
      %p126 = por %p124, %p125
      %p127 = scmp.ne.s32.totalorder %s119, %s121
      %p128 = scmp.eq.s32.totalorder %s27, 1
      %p129 = por %p127, %p128
      %p130 = scmp.ne.s32.totalorder %s121, %s122
      %p131 = scmp.eq.s32.totalorder %s27, 0
      %p132 = por %p130, %p131
      %p133 = scmp.ne.s32.totalorder %s121, %s122
      %p134 = scmp.eq.s32.totalorder %s28, 1
      %p135 = por %p133, %p134
      %p137 = scmp.ne.s32.totalorder %s122, %s136
      %p138 = scmp.eq.s32.totalorder %s28, 0
      %p139 = por %p137, %p138
      %s141 = sadd.s32 %s140, 1
      %p144 = scmp.eq.s32.totalorder %s22, 1
      %p145 = scmp.ne.s32.totalorder %s140, %s142
      %p146 = scmp.eq.s32.totalorder %s22, 0
      %p147 = por %p145, %p146
      %p148 = scmp.ne.s32.totalorder %s140, %s142
      %p149 = scmp.eq.s32.totalorder %s27, 1
      %p150 = por %p148, %p149
      %p151 = scmp.ne.s32.totalorder %s142, %s143
      %p152 = scmp.eq.s32.totalorder %s27, 0
      %p153 = por %p151, %p152
      %p154 = scmp.ne.s32.totalorder %s142, %s143
      %p155 = scmp.eq.s32.totalorder %s28, 1
      %p156 = por %p154, %p155
      %p158 = scmp.ne.s32.totalorder %s143, %s157
      %p159 = scmp.eq.s32.totalorder %s28, 0
      %p160 = por %p158, %p159
      %s162 = sadd.s32 %s161, 1
      %p165 = scmp.eq.s32.totalorder %s22, 1
      %p166 = scmp.ne.s32.totalorder %s161, %s163
      %p167 = scmp.eq.s32.totalorder %s22, 0
      %p168 = por %p166, %p167
      %p169 = scmp.ne.s32.totalorder %s161, %s163
      %p170 = scmp.eq.s32.totalorder %s27, 1
      %p171 = por %p169, %p170
      %p172 = scmp.ne.s32.totalorder %s163, %s164
      %p173 = scmp.eq.s32.totalorder %s27, 0
      %p174 = por %p172, %p173
      %p175 = scmp.ne.s32.totalorder %s163, %s164
      %p176 = scmp.eq.s32.totalorder %s28, 1
      %p177 = por %p175, %p176
      %p179 = scmp.ne.s32.totalorder %s164, %s178
      %p180 = scmp.eq.s32.totalorder %s28, 0
      %p181 = por %p179, %p180
      %s183 = sadd.s32 %s182, 1
      %p186 = scmp.eq.s32.totalorder %s22, 1
      %p187 = scmp.ne.s32.totalorder %s182, %s184
      %p188 = scmp.eq.s32.totalorder %s22, 0
      %p189 = por %p187, %p188
      %p190 = scmp.ne.s32.totalorder %s182, %s184
      %p191 = scmp.eq.s32.totalorder %s27, 1
      %p192 = por %p190, %p191
      %p193 = scmp.ne.s32.totalorder %s184, %s185
      %p194 = scmp.eq.s32.totalorder %s27, 0
      %p195 = por %p193, %p194
      %p196 = scmp.ne.s32.totalorder %s184, %s185
      %p197 = scmp.eq.s32.totalorder %s28, 1
      %p198 = por %p196, %p197
      %p200 = scmp.ne.s32.totalorder %s185, %s199
      %p201 = scmp.eq.s32.totalorder %s28, 0
      %p202 = por %p200, %p201
      %s204 = sadd.s32 %s203, 1
      %p207 = scmp.eq.s32.totalorder %s22, 1
      %p208 = scmp.ne.s32.totalorder %s203, %s205
      %p209 = scmp.eq.s32.totalorder %s22, 0
      %p210 = por %p208, %p209
      %p211 = scmp.ne.s32.totalorder %s203, %s205
      %p212 = scmp.eq.s32.totalorder %s27, 1
      %p213 = por %p211, %p212
      %p214 = scmp.ne.s32.totalorder %s205, %s206
      %p215 = scmp.eq.s32.totalorder %s27, 0
      %p216 = por %p214, %p215
      %p217 = scmp.ne.s32.totalorder %s205, %s206
      %p218 = scmp.eq.s32.totalorder %s28, 1
      %p219 = por %p217, %p218
      %p221 = scmp.ne.s32.totalorder %s206, %s220
      %p222 = scmp.eq.s32.totalorder %s28, 0
      %p223 = por %p221, %p222
      %s225 = sadd.s32 %s224, 1
      %p228 = scmp.eq.s32.totalorder %s22, 1
      %p229 = scmp.ne.s32.totalorder %s224, %s226
      %p230 = scmp.eq.s32.totalorder %s22, 0
      %p231 = por %p229, %p230
      %p232 = scmp.ne.s32.totalorder %s224, %s226
      %p233 = scmp.eq.s32.totalorder %s27, 1
      %p234 = por %p232, %p233
      %p235 = scmp.ne.s32.totalorder %s226, %s227
      %p236 = scmp.eq.s32.totalorder %s27, 0
      %p237 = por %p235, %p236
      %p238 = scmp.ne.s32.totalorder %s226, %s227
      %p239 = scmp.eq.s32.totalorder %s28, 1
      %p240 = por %p238, %p239
      %p242 = scmp.ne.s32.totalorder %s227, %s241
      %p243 = scmp.eq.s32.totalorder %s28, 0
      %p244 = por %p242, %p243
      %s246 = sadd.s32 %s245, 1
      %p249 = scmp.eq.s32.totalorder %s22, 1
      %p250 = scmp.ne.s32.totalorder %s245, %s247
      %p251 = scmp.eq.s32.totalorder %s22, 0
      %p252 = por %p250, %p251
      %p253 = scmp.ne.s32.totalorder %s245, %s247
      %p254 = scmp.eq.s32.totalorder %s27, 1
      %p255 = por %p253, %p254
      %p256 = scmp.ne.s32.totalorder %s247, %s248
      %p257 = scmp.eq.s32.totalorder %s27, 0
      %p258 = por %p256, %p257
      %p259 = scmp.ne.s32.totalorder %s247, %s248
      %p260 = scmp.eq.s32.totalorder %s28, 1
      %p261 = por %p259, %p260
      %p263 = scmp.ne.s32.totalorder %s248, %s262
      %p264 = scmp.eq.s32.totalorder %s28, 0
      %p265 = por %p263, %p264
      %s267 = sadd.s32 %s266, 1
      %p270 = scmp.eq.s32.totalorder %s22, 1
      %p271 = scmp.ne.s32.totalorder %s266, %s268
      %p272 = scmp.eq.s32.totalorder %s22, 0
      %p273 = por %p271, %p272
      %p274 = scmp.ne.s32.totalorder %s266, %s268
      %p275 = scmp.eq.s32.totalorder %s27, 1
      %p276 = por %p274, %p275
      %p277 = scmp.ne.s32.totalorder %s268, %s269
      %p278 = scmp.eq.s32.totalorder %s27, 0
      %p279 = por %p277, %p278
      %p280 = scmp.ne.s32.totalorder %s268, %s269
      %p281 = scmp.eq.s32.totalorder %s28, 1
      %p282 = por %p280, %p281
      %p284 = scmp.ne.s32.totalorder %s269, %s283
      %p285 = scmp.eq.s32.totalorder %s28, 0
      %p286 = por %p284, %p285
      %s288 = sadd.s32 %s287, 1
      %p291 = scmp.eq.s32.totalorder %s22, 1
      %p292 = scmp.ne.s32.totalorder %s287, %s289
      %p293 = scmp.eq.s32.totalorder %s22, 0
      %p294 = por %p292, %p293
      %p295 = scmp.ne.s32.totalorder %s287, %s289
      %p296 = scmp.eq.s32.totalorder %s27, 1
      %p297 = por %p295, %p296
      %p298 = scmp.ne.s32.totalorder %s289, %s290
      %p299 = scmp.eq.s32.totalorder %s27, 0
      %p300 = por %p298, %p299
      %p301 = scmp.ne.s32.totalorder %s289, %s290
      %p302 = scmp.eq.s32.totalorder %s28, 1
      %p303 = por %p301, %p302
      %p305 = scmp.ne.s32.totalorder %s290, %s304
      %p306 = scmp.eq.s32.totalorder %s28, 0
      %p307 = por %p305, %p306
      %s308 = ssub.s32 %s22, %s29
      %p309 = scmp.eq.s32.totalorder %s308, 0
      %s311 = sadd.s32 %s310, 1
      %s312 = scalar_select %p309, %s310, %s311
      %p315 = pneg %p309
      %p316 = scmp.eq.s32.totalorder %s22, 1
      %p317 = por %p315, %p316
      %p318 = scmp.ne.s32.totalorder %s310, %s313
      %p319 = scmp.eq.s32.totalorder %s22, 0
      %p320 = por %p318, %p319
      %p321 = scmp.ne.s32.totalorder %s310, %s313
      %p322 = scmp.eq.s32.totalorder %s27, 1
      %p323 = por %p321, %p322
      %p324 = scmp.ne.s32.totalorder %s313, %s314
      %p325 = scmp.eq.s32.totalorder %s27, 0
      %p326 = por %p324, %p325
      %p327 = scmp.ne.s32.totalorder %s313, %s314
      %p328 = scmp.eq.s32.totalorder %s28, 1
      %p329 = por %p327, %p328
      %p331 = scmp.ne.s32.totalorder %s314, %s330
      %p332 = scmp.eq.s32.totalorder %s28, 0
      %p333 = por %p331, %p332
      %p334 = scmp.le.s32.totalorder 1, %s22
      %p335 = scmp.lt.s32.totalorder %s22, 3
      %p336 = pnand %p334, %p335
      %p337 = pneg %p336
      // Predicated region
      $region9: #{tpu_custom_call.1} parent=5 // pred_check
        _
      $region10: #{tpu_custom_call.1} parent=5 // pred_check_branch
        %339 = sbr.rel (%p336) target = $region12
      $region11: #{tpu_custom_call.1} parent=5 // pred_region
        %s340 = ssub.s32 %s22, 1
        // Predicated region
        $region13: #{tpu_custom_call.1} parent=11 // pred_check
          %p341 = pneg %p69
        $region14: #{tpu_custom_call.1} parent=11 // pred_check_branch
          %343 = sbr.rel (%p341) target = $region16
        $region15: #{tpu_custom_call.1} parent=11 // pred_region
          _
        $region16: #{tpu_custom_call.1} parent=11 // pred_fallthru
          _
        // Predicated region
        $region17: #{tpu_custom_call.1} parent=11 // pred_check
          %p344 = pneg %p90
        $region18: #{tpu_custom_call.1} parent=11 // pred_check_branch
          %346 = sbr.rel (%p344) target = $region20
        $region19: #{tpu_custom_call.1} parent=11 // pred_region
          _
        $region20: #{tpu_custom_call.1} parent=11 // pred_fallthru
          _
        // Predicated region
        $region21: #{tpu_custom_call.1} parent=11 // pred_check
          %p347 = pneg %p111
        $region22: #{tpu_custom_call.1} parent=11 // pred_check_branch
          %349 = sbr.rel (%p347) target = $region24
        $region23: #{tpu_custom_call.1} parent=11 // pred_region
          _
        $region24: #{tpu_custom_call.1} parent=11 // pred_fallthru
          _
        // Predicated region
        $region25: #{tpu_custom_call.1} parent=11 // pred_check
          %p350 = pneg %p132
        $region26: #{tpu_custom_call.1} parent=11 // pred_check_branch
          %352 = sbr.rel (%p350) target = $region28
        $region27: #{tpu_custom_call.1} parent=11 // pred_region
          _
        $region28: #{tpu_custom_call.1} parent=11 // pred_fallthru
          _
        // Predicated region
        $region29: #{tpu_custom_call.1} parent=11 // pred_check
          %p353 = pneg %p153
        $region30: #{tpu_custom_call.1} parent=11 // pred_check_branch
          %355 = sbr.rel (%p353) target = $region32
        $region31: #{tpu_custom_call.1} parent=11 // pred_region
          _
        $region32: #{tpu_custom_call.1} parent=11 // pred_fallthru
          _
        // Predicated region
        $region33: #{tpu_custom_call.1} parent=11 // pred_check
          %p356 = pneg %p174
        $region34: #{tpu_custom_call.1} parent=11 // pred_check_branch
          %358 = sbr.rel (%p356) target = $region36
        $region35: #{tpu_custom_call.1} parent=11 // pred_region
          _
        $region36: #{tpu_custom_call.1} parent=11 // pred_fallthru
          _
        // Predicated region
        $region37: #{tpu_custom_call.1} parent=11 // pred_check
          %p359 = pneg %p195
        $region38: #{tpu_custom_call.1} parent=11 // pred_check_branch
          %361 = sbr.rel (%p359) target = $region40
        $region39: #{tpu_custom_call.1} parent=11 // pred_region
          _
        $region40: #{tpu_custom_call.1} parent=11 // pred_fallthru
          _
        // Predicated region
        $region41: #{tpu_custom_call.1} parent=11 // pred_check
          %p362 = pneg %p216
        $region42: #{tpu_custom_call.1} parent=11 // pred_check_branch
          %364 = sbr.rel (%p362) target = $region44
        $region43: #{tpu_custom_call.1} parent=11 // pred_region
          _
        $region44: #{tpu_custom_call.1} parent=11 // pred_fallthru
          _
        // Predicated region
        $region45: #{tpu_custom_call.1} parent=11 // pred_check
          %p365 = pneg %p237
        $region46: #{tpu_custom_call.1} parent=11 // pred_check_branch
          %367 = sbr.rel (%p365) target = $region48
        $region47: #{tpu_custom_call.1} parent=11 // pred_region
          _
        $region48: #{tpu_custom_call.1} parent=11 // pred_fallthru
          _
        // Predicated region
        $region49: #{tpu_custom_call.1} parent=11 // pred_check
          %p368 = pneg %p258
        $region50: #{tpu_custom_call.1} parent=11 // pred_check_branch
          %370 = sbr.rel (%p368) target = $region52
        $region51: #{tpu_custom_call.1} parent=11 // pred_region
          _
        $region52: #{tpu_custom_call.1} parent=11 // pred_fallthru
          _
        // Predicated region
        $region53: #{tpu_custom_call.1} parent=11 // pred_check
          %p371 = pneg %p279
        $region54: #{tpu_custom_call.1} parent=11 // pred_check_branch
          %373 = sbr.rel (%p371) target = $region56
        $region55: #{tpu_custom_call.1} parent=11 // pred_region
          _
        $region56: #{tpu_custom_call.1} parent=11 // pred_fallthru
          _
        // Predicated region
        $region57: #{tpu_custom_call.1} parent=11 // pred_check
          %p374 = pneg %p300
        $region58: #{tpu_custom_call.1} parent=11 // pred_check_branch
          %376 = sbr.rel (%p374) target = $region60
        $region59: #{tpu_custom_call.1} parent=11 // pred_region
          _
        $region60: #{tpu_custom_call.1} parent=11 // pred_fallthru
          _
      $region12: #{tpu_custom_call.1} parent=5 // pred_fallthru
        _
      %p377 = scmp.lt.s32.totalorder %s22, 2
      // Predicated region
      $region61: #{tpu_custom_call.1} parent=5 // pred_check
        %p378 = pneg %p377
      $region62: #{tpu_custom_call.1} parent=5 // pred_check_branch
        %380 = sbr.rel (%p378) target = $region64
      $region63: #{tpu_custom_call.1} parent=5 // pred_region
        // Predicated region
        $region65: #{tpu_custom_call.1} parent=63 // pred_check
          %p381 = pneg %p42
        $region66: #{tpu_custom_call.1} parent=63 // pred_check_branch
          %383 = sbr.rel (%p381) target = $region68
        $region67: #{tpu_custom_call.1} parent=63 // pred_region
          %p384 = scmp.lt.s32.totalorder %s22, 1
          %s385 = scalar_select %p384, %s22, 1
          %s386 = smul.addr %s385, 8
          %s387 = scalar_lea.vmem %s0, %s386
        $region68: #{tpu_custom_call.1} parent=63 // pred_fallthru
          _
      $region64: #{tpu_custom_call.1} parent=5 // pred_fallthru
        _
      %p388 = scmp.le.s32.totalorder 1, %s22
      %p389 = scmp.lt.s32.totalorder %s22, 3
      %p390 = pnand %p388, %p389
      %p391 = pneg %p390
      // Predicated region
      $region69: #{tpu_custom_call.1} parent=5 // pred_check
        _
      $region70: #{tpu_custom_call.1} parent=5 // pred_check_branch
        %393 = sbr.rel (%p390) target = $region72
      $region71: #{tpu_custom_call.1} parent=5 // pred_region
        %s394 = ssub.s32 %s22, 1
        %p395 = scmp.lt.s32.totalorder %s27, 1
        %s396 = scalar_select %p395, %s27, 1
        %s397 = smul.addr %s396, 8
        %s398 = scalar_lea.vmem %s0, %s397
        %p399 = pneg %p48
        %p400 = pneg %p45
        %p401 = pneg %p69
        %p402 = pneg %p66
        %p403 = pneg %p90
        %p404 = pneg %p87
        %p405 = pneg %p111
        %p406 = pneg %p108
        %p407 = pneg %p132
        %p408 = pneg %p129
        %p409 = pneg %p153
        %p410 = pneg %p150
        %p411 = pneg %p174
        %p412 = pneg %p171
        %p413 = pneg %p195
        %p414 = pneg %p192
        %p415 = pneg %p216
        %p416 = pneg %p213
        %p417 = pneg %p237
        %p418 = pneg %p234
        %p419 = pneg %p258
        %p420 = pneg %p255
        %p421 = pneg %p279
        %p422 = pneg %p276
        %p423 = pneg %p300
        %p424 = pneg %p297
        %p425 = pneg %p326
        %p426 = pneg %p323
        %s427 = sand.u32 %s313, 1
        %s428 = scalar_lea.sflag [#allocation6], %s427
        %s429 = sand.u32 %s313, 1
        %s430 = smul.addr %s429, 8
        %s431 = scalar_lea.vmem [#allocation5], %s430
        %p432 = scmp.lt.s32.totalorder %s27, 1
        %s433 = scalar_select %p432, %s27, 1
        %s434 = smul.addr %s433, 8
        %s435 = scalar_lea.vmem %s0, %s434
        %v437 = vld [vmem:[%s435] sm:$0xff]
        %v438 = vld [vmem:[%s1] sm:$0x1]
        %v439 = vld [vmem:[%s2] sm:$0x1]
        %vm440 = vcmask 261120
        %v441 = vsel %vm440, %v437, 0.0
        %442 = vadd.xlane.f32.xlu0 %v441
        %v443 = vpop.xlane.xlu0 %442
        %v444 = vrcp.pop 32.0
        %v445 = vmul.f32 %v443, %v444
        %v446 = vsub.f32 %v437, %v445
        %v447 = vmul.f32 %v446, %v446
        %v448 = vsel %vm440, %v447, 0.0
        %449 = vadd.xlane.f32.xlu0 %v448
        %v450 = vpop.xlane.xlu0 %449
        %v451 = vmul.f32 %v450, %v444
        %v452 = vadd.f32 %v451, 1e-05
        %v453 = vrsqrt.pop %v452
        %v454 = vmul.f32 %v446, %v453
        %v456 = vlaneseq
        %v457 = vshrl.u32 %v456, 7
        %v458 = vsub.s32 0, %v457
        %v459 = vrot.slane %v438, %v458
        %v461 = vmul.f32 %v454, %v459
        %v463 = vlaneseq
        %v464 = vshrl.u32 %v463, 7
        %v465 = vsub.s32 0, %v464
        %v466 = vrot.slane %v439, %v465
        %v468 = vadd.f32 %v461, %v466
        %v469 = vpack.c.bf16 %v468, %v468
        %v470 = vld [vmem:[%s3] sm:$0xf]
        %v471 = vld [vmem:[%s3 + $0x4] sm:$0xf]
        %v472 = vld [vmem:[%s3 + $0x8] sm:$0xf]
        %v473 = vld [vmem:[%s3 + $0xc] sm:$0xf]
        %v474 = vld [vmem:[%s4] sm:$0x1]
        %v476 = vlaneseq
        %v477 = vshrl.u32 %v476, 7
        %v478 = vsub.s32 0, %v477
        %v479 = vrot.slane %v474, %v478
        %v485 = vunpack.c.l.b16 %v470
        %v486 = vunpack.c.l.b16 %v471
        %v487 = vunpack.c.l.b16 %v472
        %v488 = vunpack.c.l.b16 %v473
        %v489 = vpack.c.b16 %v486, %v485
        %v490 = vpack.c.b16 %v488, %v487
        %v494 = vsel %vm440, %v469, 0
        %496 = vmatprep.subr.bf16.mxu0 0
        %497 = vmatpush1.bf16.msra.mxu0 %v489
        %498 = vmatprep.subr.bf16.mxu0 0
        %499 = vmatpush1.bf16.msra.mxu0 %v490
        %500 = vmatprep.subr.bf16.mxu0 0
        %501 = vmatpush1.bf16.msra.mxu0 0
        %502 = vmatprep.subr.bf16.mxu0 0
        %503 = vmatpush1.bf16.msra.mxu0 0
        %504 = vmatprep.subr.bf16.mxu0 0
        %505 = vmatpush1.bf16.msra.mxu0 0
        %506 = vmatprep.subr.bf16.mxu0 0
        %507 = vmatpush1.bf16.msra.mxu0 0
        %508 = vmatprep.subr.bf16.mxu0 0
        %509 = vmatpush1.bf16.msra.mxu0 0
        %510 = vmatprep.subr.bf16.mxu0 0
        %511 = vmatpush1.bf16.msra.mxu0 0
        %512 = vmatprep.subr.bf16.mxu0 0
        %513 = vmatpush1.bf16.msra.mxu0 0
        %514 = vmatprep.subr.bf16.mxu0 0
        %515 = vmatpush1.bf16.msra.mxu0 0
        %516 = vmatprep.subr.bf16.mxu0 0
        %517 = vmatpush1.bf16.msra.mxu0 0
        %518 = vmatprep.subr.bf16.mxu0 0
        %519 = vmatpush1.bf16.msra.mxu0 0
        %520 = vmatprep.subr.bf16.mxu0 0
        %521 = vmatpush1.bf16.msra.mxu0 0
        %522 = vmatprep.subr.bf16.mxu0 0
        %523 = vmatpush1.bf16.msra.mxu0 0
        %524 = vmatprep.subr.bf16.mxu0 0
        %525 = vmatpush1.bf16.msra.mxu0 0
        %526 = vmatprep.subr.bf16.mxu0 0
        %527 = vmatpush1.bf16.msra.mxu0 0
        %528 = vmatprep.mubr.bf16.mxu0 0
        %529 = vmatmul.mubr.bf16.gmra.mrb[0].mxu0 %v494
        %v530 = vpop.f32.mrb[0].mxu0
        %v531 = vadd.f32 %v479, %v530
        %v532 = vpop.f32.mrb[0].mxu0
        %v533 = vpop.f32.mrb[0].mxu0
        %v534 = vpop.f32.mrb[0].mxu0
        %535 = vdwg.mxu0
        %v536 = vmul.f32 %v531, 0.35355338
        %v537 = vpack.c.bf16 %v536, %v536
        %vm538 = vcmask 60416
        %539 = vst.msk [vmem:[#allocation2] sm:$0xf] %vm538, %v537
        %v540 = vpack.c.bf16 %v531, %v531
        %v542 = vunpack.c.l.b16 %v540
        %v543 = vpack.c.b16 %v542, %v542
        %544 = vrot.lane.b32.xlu0 %v543, 96
        %v545 = vpop.permute.xlu0 %544
        %547 = vst.msk [vmem:[#allocation3] sm:$0xf] %vm538, %v545
        %548 = vrot.lane.b32.xlu0 %v543, 64
        %v549 = vpop.permute.xlu0 %548
        %551 = vst.msk [vmem:[#allocation4] sm:$0xf] %vm538, %v549
        %v553 = vunpack.c.l.b16 %v537
        %v554 = vpack.c.b16 %v553, %v553
        %555 = vrot.lane.b32.xlu0 %v554, 120
        %v556 = vpop.permute.xlu0 %555
        %s558 = sadd.s32 0, 1
        %s559 = smul.addr %s558, 4
        %s560 = scalar_lea.vmem [#allocation2], %s559
        %561 = vst.msk [vmem:[%s560] sm:$0xf] %vm538, %v556
        %562 = vrot.lane.b32.xlu0 %v543, 88
        %v563 = vpop.permute.xlu0 %562
        %s565 = smul.addr %s558, 4
        %s566 = scalar_lea.vmem [#allocation3], %s565
        %567 = vst.msk [vmem:[%s566] sm:$0xf] %vm538, %v563
        %568 = vrot.lane.b32.xlu0 %v543, 56
        %v569 = vpop.permute.xlu0 %568
        %s571 = smul.addr %s558, 4
        %s572 = scalar_lea.vmem [#allocation4], %s571
        %573 = vst.msk [vmem:[%s572] sm:$0xf] %vm538, %v569
        %574 = vrot.lane.b32.xlu0 %v554, 112
        %v575 = vpop.permute.xlu0 %574
        %s577 = sadd.s32 0, 2
        %s578 = smul.addr %s577, 4
        %s579 = scalar_lea.vmem [#allocation2], %s578
        %580 = vst.msk [vmem:[%s579] sm:$0xf] %vm538, %v575
        %581 = vrot.lane.b32.xlu0 %v543, 80
        %v582 = vpop.permute.xlu0 %581
        %s584 = smul.addr %s577, 4
        %s585 = scalar_lea.vmem [#allocation3], %s584
        %586 = vst.msk [vmem:[%s585] sm:$0xf] %vm538, %v582
        %587 = vrot.lane.b32.xlu0 %v543, 48
        %v588 = vpop.permute.xlu0 %587
        %s590 = smul.addr %s577, 4
        %s591 = scalar_lea.vmem [#allocation4], %s590
        %592 = vst.msk [vmem:[%s591] sm:$0xf] %vm538, %v588
        %593 = vrot.lane.b32.xlu0 %v554, 104
        %v594 = vpop.permute.xlu0 %593
        %s596 = sadd.s32 0, 3
        %s597 = smul.addr %s596, 4
        %s598 = scalar_lea.vmem [#allocation2], %s597
        %599 = vst.msk [vmem:[%s598] sm:$0xf] %vm538, %v594
        %600 = vrot.lane.b32.xlu0 %v543, 72
        %v601 = vpop.permute.xlu0 %600
        %s603 = smul.addr %s596, 4
        %s604 = scalar_lea.vmem [#allocation3], %s603
        %605 = vst.msk [vmem:[%s604] sm:$0xf] %vm538, %v601
        %606 = vrot.lane.b32.xlu0 %v543, 40
        %v607 = vpop.permute.xlu0 %606
        %s609 = smul.addr %s596, 4
        %s610 = scalar_lea.vmem [#allocation4], %s609
        %611 = vst.msk [vmem:[%s610] sm:$0xf] %vm538, %v607
        %v612 = vld [vmem:[#allocation2] sm:$0xf]
        %v613 = vld [vmem:[#allocation2 + $0x4] sm:$0xf]
        %v614 = vld [vmem:[#allocation2 + $0x8] sm:$0xf]
        %v615 = vld [vmem:[#allocation2 + $0xc] sm:$0xf]
        %v616 = vld [vmem:[#allocation3] sm:$0xf]
        %v617 = vld [vmem:[#allocation3 + $0x4] sm:$0xf]
        %v618 = vld [vmem:[#allocation3 + $0x8] sm:$0xf]
        %v619 = vld [vmem:[#allocation3 + $0xc] sm:$0xf]
        %v620 = vld [vmem:[#allocation4] sm:$0xf]
        %v621 = vld [vmem:[#allocation4 + $0x4] sm:$0xf]
        %v622 = vld [vmem:[#allocation4 + $0x8] sm:$0xf]
        %v623 = vld [vmem:[#allocation4 + $0xc] sm:$0xf]
        %vm624 = vcmask 64512
        %v626 = vsel %vm624, %v612, 0
        %v629 = vsel %vm624, %v616, 0
        %631 = vmatprep.subr.bf16.mxu0 0
        %632 = vmatpush1.bf16.xpose.msra.mxu0 %v629
        %633 = vmatprep.subr.bf16.mxu0 0
        %634 = vmatpush1.bf16.xpose.msra.mxu0 0
        %635 = vmatprep.subr.bf16.mxu0 0
        %636 = vmatpush1.bf16.xpose.msra.mxu0 0
        %637 = vmatprep.subr.bf16.mxu0 0
        %638 = vmatpush1.bf16.xpose.msra.mxu0 0
        %639 = vmatprep.subr.bf16.mxu0 0
        %640 = vmatpush1.bf16.xpose.msra.mxu0 0
        %641 = vmatprep.subr.bf16.mxu0 0
        %642 = vmatpush1.bf16.xpose.msra.mxu0 0
        %643 = vmatprep.subr.bf16.mxu0 0
        %644 = vmatpush1.bf16.xpose.msra.mxu0 0
        %645 = vmatprep.subr.bf16.mxu0 0
        %646 = vmatpush1.bf16.xpose.msra.mxu0 0
        %647 = vmatprep.subr.bf16.mxu0 0
        %648 = vmatpush1.bf16.xpose.msra.mxu0 0
        %649 = vmatprep.subr.bf16.mxu0 0
        %650 = vmatpush1.bf16.xpose.msra.mxu0 0
        %651 = vmatprep.subr.bf16.mxu0 0
        %652 = vmatpush1.bf16.xpose.msra.mxu0 0
        %653 = vmatprep.subr.bf16.mxu0 0
        %654 = vmatpush1.bf16.xpose.msra.mxu0 0
        %655 = vmatprep.subr.bf16.mxu0 0
        %656 = vmatpush1.bf16.xpose.msra.mxu0 0
        %657 = vmatprep.subr.bf16.mxu0 0
        %658 = vmatpush1.bf16.xpose.msra.mxu0 0
        %659 = vmatprep.subr.bf16.mxu0 0
        %660 = vmatpush1.bf16.xpose.msra.mxu0 0
        %661 = vmatprep.subr.bf16.mxu0 0
        %662 = vmatpush1.bf16.xpose.msra.mxu0 0
        %663 = vmatprep.mubr.bf16.mxu0 0
        %664 = vmatmul.mubr.bf16.gmra.mrb[0].mxu0 %v626
        %v665 = vpop.f32.mrb[0].mxu0
        %v666 = vadd.f32 0.0, %v665
        %v667 = vpop.f32.mrb[0].mxu0
        %v668 = vpop.f32.mrb[0].mxu0
        %v669 = vpop.f32.mrb[0].mxu0
        %670 = vdwg.mxu0
        %v672 = vsel %vm624, %v613, 0
        %v675 = vsel %vm624, %v617, 0
        %677 = vmatprep.subr.bf16.mxu0 0
        %678 = vmatpush1.bf16.xpose.msra.mxu0 %v675
        %679 = vmatprep.subr.bf16.mxu0 0
        %680 = vmatpush1.bf16.xpose.msra.mxu0 0
        %681 = vmatprep.subr.bf16.mxu0 0
        %682 = vmatpush1.bf16.xpose.msra.mxu0 0
        %683 = vmatprep.subr.bf16.mxu0 0
        %684 = vmatpush1.bf16.xpose.msra.mxu0 0
        %685 = vmatprep.subr.bf16.mxu0 0
        %686 = vmatpush1.bf16.xpose.msra.mxu0 0
        %687 = vmatprep.subr.bf16.mxu0 0
        %688 = vmatpush1.bf16.xpose.msra.mxu0 0
        %689 = vmatprep.subr.bf16.mxu0 0
        %690 = vmatpush1.bf16.xpose.msra.mxu0 0
        %691 = vmatprep.subr.bf16.mxu0 0
        %692 = vmatpush1.bf16.xpose.msra.mxu0 0
        %693 = vmatprep.subr.bf16.mxu0 0
        %694 = vmatpush1.bf16.xpose.msra.mxu0 0
        %695 = vmatprep.subr.bf16.mxu0 0
        %696 = vmatpush1.bf16.xpose.msra.mxu0 0
        %697 = vmatprep.subr.bf16.mxu0 0
        %698 = vmatpush1.bf16.xpose.msra.mxu0 0
        %699 = vmatprep.subr.bf16.mxu0 0
        %700 = vmatpush1.bf16.xpose.msra.mxu0 0
        %701 = vmatprep.subr.bf16.mxu0 0
        %702 = vmatpush1.bf16.xpose.msra.mxu0 0
        %703 = vmatprep.subr.bf16.mxu0 0
        %704 = vmatpush1.bf16.xpose.msra.mxu0 0
        %705 = vmatprep.subr.bf16.mxu0 0
        %706 = vmatpush1.bf16.xpose.msra.mxu0 0
        %707 = vmatprep.subr.bf16.mxu0 0
        %708 = vmatpush1.bf16.xpose.msra.mxu0 0
        %709 = vmatprep.mubr.bf16.mxu0 0
        %710 = vmatmul.mubr.bf16.gmra.mrb[0].mxu0 %v672
        %v711 = vpop.f32.mrb[0].mxu0
        %v712 = vadd.f32 0.0, %v711
        %v713 = vpop.f32.mrb[0].mxu0
        %v714 = vpop.f32.mrb[0].mxu0
        %v715 = vpop.f32.mrb[0].mxu0
        %716 = vdwg.mxu0
        %v718 = vsel %vm624, %v614, 0
        %v721 = vsel %vm624, %v618, 0
        %723 = vmatprep.subr.bf16.mxu0 0
        %724 = vmatpush1.bf16.xpose.msra.mxu0 %v721
        %725 = vmatprep.subr.bf16.mxu0 0
        %726 = vmatpush1.bf16.xpose.msra.mxu0 0
        %727 = vmatprep.subr.bf16.mxu0 0
        %728 = vmatpush1.bf16.xpose.msra.mxu0 0
        %729 = vmatprep.subr.bf16.mxu0 0
        %730 = vmatpush1.bf16.xpose.msra.mxu0 0
        %731 = vmatprep.subr.bf16.mxu0 0
        %732 = vmatpush1.bf16.xpose.msra.mxu0 0
        %733 = vmatprep.subr.bf16.mxu0 0
        %734 = vmatpush1.bf16.xpose.msra.mxu0 0
        %735 = vmatprep.subr.bf16.mxu0 0
        %736 = vmatpush1.bf16.xpose.msra.mxu0 0
        %737 = vmatprep.subr.bf16.mxu0 0
        %738 = vmatpush1.bf16.xpose.msra.mxu0 0
        %739 = vmatprep.subr.bf16.mxu0 0
        %740 = vmatpush1.bf16.xpose.msra.mxu0 0
        %741 = vmatprep.subr.bf16.mxu0 0
        %742 = vmatpush1.bf16.xpose.msra.mxu0 0
        %743 = vmatprep.subr.bf16.mxu0 0
        %744 = vmatpush1.bf16.xpose.msra.mxu0 0
        %745 = vmatprep.subr.bf16.mxu0 0
        %746 = vmatpush1.bf16.xpose.msra.mxu0 0
        %747 = vmatprep.subr.bf16.mxu0 0
        %748 = vmatpush1.bf16.xpose.msra.mxu0 0
        %749 = vmatprep.subr.bf16.mxu0 0
        %750 = vmatpush1.bf16.xpose.msra.mxu0 0
        %751 = vmatprep.subr.bf16.mxu0 0
        %752 = vmatpush1.bf16.xpose.msra.mxu0 0
        %753 = vmatprep.subr.bf16.mxu0 0
        %754 = vmatpush1.bf16.xpose.msra.mxu0 0
        %755 = vmatprep.mubr.bf16.mxu0 0
        %756 = vmatmul.mubr.bf16.gmra.mrb[0].mxu0 %v718
        %v757 = vpop.f32.mrb[0].mxu0
        %v758 = vadd.f32 0.0, %v757
        %v759 = vpop.f32.mrb[0].mxu0
        %v760 = vpop.f32.mrb[0].mxu0
        %v761 = vpop.f32.mrb[0].mxu0
        %762 = vdwg.mxu0
        %v764 = vsel %vm624, %v615, 0
        %v767 = vsel %vm624, %v619, 0
        %769 = vmatprep.subr.bf16.mxu0 0
        %770 = vmatpush1.bf16.xpose.msra.mxu0 %v767
        %771 = vmatprep.subr.bf16.mxu0 0
        %772 = vmatpush1.bf16.xpose.msra.mxu0 0
        %773 = vmatprep.subr.bf16.mxu0 0
        %774 = vmatpush1.bf16.xpose.msra.mxu0 0
        %775 = vmatprep.subr.bf16.mxu0 0
        %776 = vmatpush1.bf16.xpose.msra.mxu0 0
        %777 = vmatprep.subr.bf16.mxu0 0
        %778 = vmatpush1.bf16.xpose.msra.mxu0 0
        %779 = vmatprep.subr.bf16.mxu0 0
        %780 = vmatpush1.bf16.xpose.msra.mxu0 0
        %781 = vmatprep.subr.bf16.mxu0 0
        %782 = vmatpush1.bf16.xpose.msra.mxu0 0
        %783 = vmatprep.subr.bf16.mxu0 0
        %784 = vmatpush1.bf16.xpose.msra.mxu0 0
        %785 = vmatprep.subr.bf16.mxu0 0
        %786 = vmatpush1.bf16.xpose.msra.mxu0 0
        %787 = vmatprep.subr.bf16.mxu0 0
        %788 = vmatpush1.bf16.xpose.msra.mxu0 0
        %789 = vmatprep.subr.bf16.mxu0 0
        %790 = vmatpush1.bf16.xpose.msra.mxu0 0
        %791 = vmatprep.subr.bf16.mxu0 0
        %792 = vmatpush1.bf16.xpose.msra.mxu0 0
        %793 = vmatprep.subr.bf16.mxu0 0
        %794 = vmatpush1.bf16.xpose.msra.mxu0 0
        %795 = vmatprep.subr.bf16.mxu0 0
        %796 = vmatpush1.bf16.xpose.msra.mxu0 0
        %797 = vmatprep.subr.bf16.mxu0 0
        %798 = vmatpush1.bf16.xpose.msra.mxu0 0
        %799 = vmatprep.subr.bf16.mxu0 0
        %800 = vmatpush1.bf16.xpose.msra.mxu0 0
        %801 = vmatprep.mubr.bf16.mxu0 0
        %802 = vmatmul.mubr.bf16.gmra.mrb[0].mxu0 %v764
        %v803 = vpop.f32.mrb[0].mxu0
        %v804 = vadd.f32 0.0, %v803
        %v805 = vpop.f32.mrb[0].mxu0
        %v806 = vpop.f32.mrb[0].mxu0
        %v807 = vpop.f32.mrb[0].mxu0
        %808 = vdwg.mxu0
        %v809 = vsel %vm624, %v666, -inf
        %810 = vmax.xlane.f32.xlu0 %v809
        %v811 = vpop.xlane.xlu0 %810
        %v812 = vsel %vm624, %v712, -inf
        %813 = vmax.xlane.f32.xlu0 %v812
        %v814 = vpop.xlane.xlu0 %813
        %v815 = vsel %vm624, %v758, -inf
        %816 = vmax.xlane.f32.xlu0 %v815
        %v817 = vpop.xlane.xlu0 %816
        %v818 = vsel %vm624, %v804, -inf
        %819 = vmax.xlane.f32.xlu0 %v818
        %v820 = vpop.xlane.xlu0 %819
        %v821 = vmax.f32 %v811, -1e+30
        %v822 = vmax.f32 %v814, -1e+30
        %v823 = vmax.f32 %v817, -1e+30
        %v824 = vmax.f32 %v820, -1e+30
        %v825 = vsub.f32 -1e+30, %v821
        %v826 = vsub.f32 -1e+30, %v822
        %v827 = vsub.f32 -1e+30, %v823
        %v828 = vsub.f32 -1e+30, %v824
        %v829 = vmul.f32 %v825, 1.442695
        %v830 = vpow.pop %v829
        %v831 = vmul.f32 %v826, 1.442695
        %v832 = vpow.pop %v831
        %v833 = vmul.f32 %v827, 1.442695
        %v834 = vpow.pop %v833
        %v835 = vmul.f32 %v828, 1.442695
        %v836 = vpow.pop %v835
        %v837 = vsub.f32 %v666, %v821
        %v838 = vsub.f32 %v712, %v822
        %v839 = vsub.f32 %v758, %v823
        %v840 = vsub.f32 %v804, %v824
        %v841 = vmul.f32 %v837, 1.442695
        %v842 = vpow.pop %v841
        %v843 = vmul.f32 %v838, 1.442695
        %v844 = vpow.pop %v843
        %v845 = vmul.f32 %v839, 1.442695
        %v846 = vpow.pop %v845
        %v847 = vmul.f32 %v840, 1.442695
        %v848 = vpow.pop %v847
        %v849 = vmul.f32 %v830, 0.0
        %v850 = vmul.f32 %v832, 0.0
        %v851 = vmul.f32 %v834, 0.0
        %v852 = vmul.f32 %v836, 0.0
        %v853 = vsel %vm624, %v842, 0.0
        %854 = vadd.xlane.f32.xlu0 %v853
        %v855 = vpop.xlane.xlu0 %854
        %v856 = vsel %vm624, %v844, 0.0
        %857 = vadd.xlane.f32.xlu0 %v856
        %v858 = vpop.xlane.xlu0 %857
        %v859 = vsel %vm624, %v846, 0.0
        %860 = vadd.xlane.f32.xlu0 %v859
        %v861 = vpop.xlane.xlu0 %860
        %v862 = vsel %vm624, %v848, 0.0
        %863 = vadd.xlane.f32.xlu0 %v862
        %v864 = vpop.xlane.xlu0 %863
        %v865 = vadd.f32 %v849, %v855
        %v866 = vadd.f32 %v850, %v858
        %v867 = vadd.f32 %v851, %v861
        %v868 = vadd.f32 %v852, %v864
        %v869 = vpack.c.bf16 %v842, %v842
        %v870 = vpack.c.bf16 %v844, %v844
        %v871 = vpack.c.bf16 %v846, %v846
        %v872 = vpack.c.bf16 %v848, %v848
        %v874 = vsel %vm624, %v869, 0
        %vm876 = vcmask 1043456
        %v878 = vsel %vm876, %v620, 0
        %880 = vmatprep.subr.bf16.mxu0 0
        %881 = vmatpush1.bf16.msra.mxu0 %v878
        %882 = vmatprep.subr.bf16.mxu0 0
        %883 = vmatpush1.bf16.msra.mxu0 0
        %884 = vmatprep.subr.bf16.mxu0 0
        %885 = vmatpush1.bf16.msra.mxu0 0
        %886 = vmatprep.subr.bf16.mxu0 0
        %887 = vmatpush1.bf16.msra.mxu0 0
        %888 = vmatprep.subr.bf16.mxu0 0
        %889 = vmatpush1.bf16.msra.mxu0 0
        %890 = vmatprep.subr.bf16.mxu0 0
        %891 = vmatpush1.bf16.msra.mxu0 0
        %892 = vmatprep.subr.bf16.mxu0 0
        %893 = vmatpush1.bf16.msra.mxu0 0
        %894 = vmatprep.subr.bf16.mxu0 0
        %895 = vmatpush1.bf16.msra.mxu0 0
        %896 = vmatprep.subr.bf16.mxu0 0
        %897 = vmatpush1.bf16.msra.mxu0 0
        %898 = vmatprep.subr.bf16.mxu0 0
        %899 = vmatpush1.bf16.msra.mxu0 0
        %900 = vmatprep.subr.bf16.mxu0 0
        %901 = vmatpush1.bf16.msra.mxu0 0
        %902 = vmatprep.subr.bf16.mxu0 0
        %903 = vmatpush1.bf16.msra.mxu0 0
        %904 = vmatprep.subr.bf16.mxu0 0
        %905 = vmatpush1.bf16.msra.mxu0 0
        %906 = vmatprep.subr.bf16.mxu0 0
        %907 = vmatpush1.bf16.msra.mxu0 0
        %908 = vmatprep.subr.bf16.mxu0 0
        %909 = vmatpush1.bf16.msra.mxu0 0
        %910 = vmatprep.subr.bf16.mxu0 0
        %911 = vmatpush1.bf16.msra.mxu0 0
        %912 = vmatprep.mubr.bf16.mxu0 0
        %913 = vmatmul.mubr.bf16.gmra.mrb[0].mxu0 %v874
        %v914 = vpop.f32.mrb[0].mxu0
        %v915 = vadd.f32 0.0, %v914
        %v916 = vpop.f32.mrb[0].mxu0
        %v917 = vpop.f32.mrb[0].mxu0
        %v918 = vpop.f32.mrb[0].mxu0
        %919 = vdwg.mxu0
        %v921 = vsel %vm624, %v870, 0
        %v924 = vsel %vm876, %v621, 0
        %926 = vmatprep.subr.bf16.mxu0 0
        %927 = vmatpush1.bf16.msra.mxu0 %v924
        %928 = vmatprep.subr.bf16.mxu0 0
        %929 = vmatpush1.bf16.msra.mxu0 0
        %930 = vmatprep.subr.bf16.mxu0 0
        %931 = vmatpush1.bf16.msra.mxu0 0
        %932 = vmatprep.subr.bf16.mxu0 0
        %933 = vmatpush1.bf16.msra.mxu0 0
        %934 = vmatprep.subr.bf16.mxu0 0
        %935 = vmatpush1.bf16.msra.mxu0 0
        %936 = vmatprep.subr.bf16.mxu0 0
        %937 = vmatpush1.bf16.msra.mxu0 0
        %938 = vmatprep.subr.bf16.mxu0 0
        %939 = vmatpush1.bf16.msra.mxu0 0
        %940 = vmatprep.subr.bf16.mxu0 0
        %941 = vmatpush1.bf16.msra.mxu0 0
        %942 = vmatprep.subr.bf16.mxu0 0
        %943 = vmatpush1.bf16.msra.mxu0 0
        %944 = vmatprep.subr.bf16.mxu0 0
        %945 = vmatpush1.bf16.msra.mxu0 0
        %946 = vmatprep.subr.bf16.mxu0 0
        %947 = vmatpush1.bf16.msra.mxu0 0
        %948 = vmatprep.subr.bf16.mxu0 0
        %949 = vmatpush1.bf16.msra.mxu0 0
        %950 = vmatprep.subr.bf16.mxu0 0
        %951 = vmatpush1.bf16.msra.mxu0 0
        %952 = vmatprep.subr.bf16.mxu0 0
        %953 = vmatpush1.bf16.msra.mxu0 0
        %954 = vmatprep.subr.bf16.mxu0 0
        %955 = vmatpush1.bf16.msra.mxu0 0
        %956 = vmatprep.subr.bf16.mxu0 0
        %957 = vmatpush1.bf16.msra.mxu0 0
        %958 = vmatprep.mubr.bf16.mxu0 0
        %959 = vmatmul.mubr.bf16.gmra.mrb[0].mxu0 %v921
        %v960 = vpop.f32.mrb[0].mxu0
        %v961 = vadd.f32 0.0, %v960
        %v962 = vpop.f32.mrb[0].mxu0
        %v963 = vpop.f32.mrb[0].mxu0
        %v964 = vpop.f32.mrb[0].mxu0
        %965 = vdwg.mxu0
        %v967 = vsel %vm624, %v871, 0
        %v970 = vsel %vm876, %v622, 0
        %972 = vmatprep.subr.bf16.mxu0 0
        %973 = vmatpush1.bf16.msra.mxu0 %v970
        %974 = vmatprep.subr.bf16.mxu0 0
        %975 = vmatpush1.bf16.msra.mxu0 0
        %976 = vmatprep.subr.bf16.mxu0 0
        %977 = vmatpush1.bf16.msra.mxu0 0
        %978 = vmatprep.subr.bf16.mxu0 0
        %979 = vmatpush1.bf16.msra.mxu0 0
        %980 = vmatprep.subr.bf16.mxu0 0
        %981 = vmatpush1.bf16.msra.mxu0 0
        %982 = vmatprep.subr.bf16.mxu0 0
        %983 = vmatpush1.bf16.msra.mxu0 0
        %984 = vmatprep.subr.bf16.mxu0 0
        %985 = vmatpush1.bf16.msra.mxu0 0
        %986 = vmatprep.subr.bf16.mxu0 0
        %987 = vmatpush1.bf16.msra.mxu0 0
        %988 = vmatprep.subr.bf16.mxu0 0
        %989 = vmatpush1.bf16.msra.mxu0 0
        %990 = vmatprep.subr.bf16.mxu0 0
        %991 = vmatpush1.bf16.msra.mxu0 0
        %992 = vmatprep.subr.bf16.mxu0 0
        %993 = vmatpush1.bf16.msra.mxu0 0
        %994 = vmatprep.subr.bf16.mxu0 0
        %995 = vmatpush1.bf16.msra.mxu0 0
        %996 = vmatprep.subr.bf16.mxu0 0
        %997 = vmatpush1.bf16.msra.mxu0 0
        %998 = vmatprep.subr.bf16.mxu0 0
        %999 = vmatpush1.bf16.msra.mxu0 0
        %1000 = vmatprep.subr.bf16.mxu0 0
        %1001 = vmatpush1.bf16.msra.mxu0 0
        %1002 = vmatprep.subr.bf16.mxu0 0
        %1003 = vmatpush1.bf16.msra.mxu0 0
        %1004 = vmatprep.mubr.bf16.mxu0 0
        %1005 = vmatmul.mubr.bf16.gmra.mrb[0].mxu0 %v967
        %v1006 = vpop.f32.mrb[0].mxu0
        %v1007 = vadd.f32 0.0, %v1006
        %v1008 = vpop.f32.mrb[0].mxu0
        %v1009 = vpop.f32.mrb[0].mxu0
        %v1010 = vpop.f32.mrb[0].mxu0
        %1011 = vdwg.mxu0
        %v1013 = vsel %vm624, %v872, 0
        %v1016 = vsel %vm876, %v623, 0
        %1018 = vmatprep.subr.bf16.mxu0 0
        %1019 = vmatpush1.bf16.msra.mxu0 %v1016
        %1020 = vmatprep.subr.bf16.mxu0 0
        %1021 = vmatpush1.bf16.msra.mxu0 0
        %1022 = vmatprep.subr.bf16.mxu0 0
        %1023 = vmatpush1.bf16.msra.mxu0 0
        %1024 = vmatprep.subr.bf16.mxu0 0
        %1025 = vmatpush1.bf16.msra.mxu0 0
        %1026 = vmatprep.subr.bf16.mxu0 0
        %1027 = vmatpush1.bf16.msra.mxu0 0
        %1028 = vmatprep.subr.bf16.mxu0 0
        %1029 = vmatpush1.bf16.msra.mxu0 0
        %1030 = vmatprep.subr.bf16.mxu0 0
        %1031 = vmatpush1.bf16.msra.mxu0 0
        %1032 = vmatprep.subr.bf16.mxu0 0
        %1033 = vmatpush1.bf16.msra.mxu0 0
        %1034 = vmatprep.subr.bf16.mxu0 0
        %1035 = vmatpush1.bf16.msra.mxu0 0
        %1036 = vmatprep.subr.bf16.mxu0 0
        %1037 = vmatpush1.bf16.msra.mxu0 0
        %1038 = vmatprep.subr.bf16.mxu0 0
        %1039 = vmatpush1.bf16.msra.mxu0 0
        %1040 = vmatprep.subr.bf16.mxu0 0
        %1041 = vmatpush1.bf16.msra.mxu0 0
        %1042 = vmatprep.subr.bf16.mxu0 0
        %1043 = vmatpush1.bf16.msra.mxu0 0
        %1044 = vmatprep.subr.bf16.mxu0 0
        %1045 = vmatpush1.bf16.msra.mxu0 0
        %1046 = vmatprep.subr.bf16.mxu0 0
        %1047 = vmatpush1.bf16.msra.mxu0 0
        %1048 = vmatprep.subr.bf16.mxu0 0
        %1049 = vmatpush1.bf16.msra.mxu0 0
        %1050 = vmatprep.mubr.bf16.mxu0 0
        %1051 = vmatmul.mubr.bf16.gmra.mrb[0].mxu0 %v1013
        %v1052 = vpop.f32.mrb[0].mxu0
        %v1053 = vadd.f32 0.0, %v1052
        %v1054 = vpop.f32.mrb[0].mxu0
        %v1055 = vpop.f32.mrb[0].mxu0
        %v1056 = vpop.f32.mrb[0].mxu0
        %1057 = vdwg.mxu0
        %v1058 = vadd.f32 %v849, %v915
        %v1059 = vadd.f32 %v850, %v961
        %v1060 = vadd.f32 %v851, %v1007
        %v1061 = vadd.f32 %v852, %v1053
        %v1062 = vrcp.pop %v865
        %v1063 = vrcp.pop %v866
        %v1064 = vrcp.pop %v867
        %v1065 = vrcp.pop %v868
        %v1066 = vmul.f32 %v1058, %v1062
        %v1067 = vmul.f32 %v1059, %v1063
        %v1068 = vmul.f32 %v1060, %v1064
        %v1069 = vmul.f32 %v1061, %v1065
        %1071 = vrot.lane.b32.xlu0 %v1067, 8
        %v1072 = vpop.permute.xlu0 %1071
        %1075 = vrot.lane.b32.xlu0 %v1068, 16
        %v1076 = vpop.permute.xlu0 %1075
        %1079 = vrot.lane.b32.xlu0 %v1069, 24
        %v1080 = vpop.permute.xlu0 %1079
        %v1082 = vsel %vm624, %v1066, %v1072
        %vm1083 = vcmask 130048
        %v1084 = vsel %vm1083, %v1082, %v1076
        %vm1085 = vcmask 195584
        %v1086 = vsel %vm1085, %v1084, %v1080
        %v1087 = vld [vmem:[%s435] sm:$0xff]
        %v1088 = vpack.c.bf16 %v1086, %v1086
        %v1089 = vld [vmem:[%s5] sm:$0xf]
        %v1090 = vld [vmem:[%s5 + $0x4] sm:$0xf]
        %v1091 = vld [vmem:[%s5 + $0x8] sm:$0xf]
        %v1092 = vld [vmem:[%s5 + $0xc] sm:$0xf]
        %v1093 = vld [vmem:[%s6] sm:$0x1]
        %v1095 = vlaneseq
        %v1096 = vshrl.u32 %v1095, 7
        %v1097 = vsub.s32 0, %v1096
        %v1098 = vrot.slane %v1093, %v1097
        %v1104 = vunpack.c.l.b16 %v1089
        %v1105 = vunpack.c.l.b16 %v1090
        %v1106 = vunpack.c.l.b16 %v1091
        %v1107 = vunpack.c.l.b16 %v1092
        %v1108 = vpack.c.b16 %v1105, %v1104
        %v1109 = vpack.c.b16 %v1107, %v1106
        %v1113 = vsel %vm440, %v1088, 0
        %1115 = vmatprep.subr.bf16.mxu0 0
        %1116 = vmatpush1.bf16.msra.mxu0 %v1108
        %1117 = vmatprep.subr.bf16.mxu0 0
        %1118 = vmatpush1.bf16.msra.mxu0 %v1109
        %1119 = vmatprep.subr.bf16.mxu0 0
        %1120 = vmatpush1.bf16.msra.mxu0 0
        %1121 = vmatprep.subr.bf16.mxu0 0
        %1122 = vmatpush1.bf16.msra.mxu0 0
        %1123 = vmatprep.subr.bf16.mxu0 0
        %1124 = vmatpush1.bf16.msra.mxu0 0
        %1125 = vmatprep.subr.bf16.mxu0 0
        %1126 = vmatpush1.bf16.msra.mxu0 0
        %1127 = vmatprep.subr.bf16.mxu0 0
        %1128 = vmatpush1.bf16.msra.mxu0 0
        %1129 = vmatprep.subr.bf16.mxu0 0
        %1130 = vmatpush1.bf16.msra.mxu0 0
        %1131 = vmatprep.subr.bf16.mxu0 0
        %1132 = vmatpush1.bf16.msra.mxu0 0
        %1133 = vmatprep.subr.bf16.mxu0 0
        %1134 = vmatpush1.bf16.msra.mxu0 0
        %1135 = vmatprep.subr.bf16.mxu0 0
        %1136 = vmatpush1.bf16.msra.mxu0 0
        %1137 = vmatprep.subr.bf16.mxu0 0
        %1138 = vmatpush1.bf16.msra.mxu0 0
        %1139 = vmatprep.subr.bf16.mxu0 0
        %1140 = vmatpush1.bf16.msra.mxu0 0
        %1141 = vmatprep.subr.bf16.mxu0 0
        %1142 = vmatpush1.bf16.msra.mxu0 0
        %1143 = vmatprep.subr.bf16.mxu0 0
        %1144 = vmatpush1.bf16.msra.mxu0 0
        %1145 = vmatprep.subr.bf16.mxu0 0
        %1146 = vmatpush1.bf16.msra.mxu0 0
        %1147 = vmatprep.mubr.bf16.mxu0 0
        %1148 = vmatmul.mubr.bf16.gmra.mrb[0].mxu0 %v1113
        %v1149 = vpop.f32.mrb[0].mxu0
        %v1150 = vadd.f32 %v1098, %v1149
        %v1151 = vpop.f32.mrb[0].mxu0
        %v1152 = vpop.f32.mrb[0].mxu0
        %v1153 = vpop.f32.mrb[0].mxu0
        %1154 = vdwg.mxu0
        %v1155 = vadd.f32 %v1087, %v1150
        %v1156 = vld [vmem:[%s7] sm:$0x1]
        %v1157 = vld [vmem:[%s8] sm:$0x1]
        %v1158 = vsel %vm440, %v1155, 0.0
        %1159 = vadd.xlane.f32.xlu0 %v1158
        %v1160 = vpop.xlane.xlu0 %1159
        %v1161 = vmul.f32 %v1160, %v444
        %v1162 = vsub.f32 %v1155, %v1161
        %v1163 = vmul.f32 %v1162, %v1162
        %v1164 = vsel %vm440, %v1163, 0.0
        %1165 = vadd.xlane.f32.xlu0 %v1164
        %v1166 = vpop.xlane.xlu0 %1165
        %v1167 = vmul.f32 %v1166, %v444
        %v1168 = vadd.f32 %v1167, 1e-05
        %v1169 = vrsqrt.pop %v1168
        %v1170 = vmul.f32 %v1162, %v1169
        %v1172 = vlaneseq
        %v1173 = vshrl.u32 %v1172, 7
        %v1174 = vsub.s32 0, %v1173
        %v1175 = vrot.slane %v1156, %v1174
        %v1177 = vmul.f32 %v1170, %v1175
        %v1179 = vlaneseq
        %v1180 = vshrl.u32 %v1179, 7
        %v1181 = vsub.s32 0, %v1180
        %v1182 = vrot.slane %v1157, %v1181
        %v1184 = vadd.f32 %v1177, %v1182
        %v1185 = vpack.c.bf16 %v1184, %v1184
        %v1186 = vld [vmem:[%s9] sm:$0xf]
        %v1187 = vld [vmem:[%s9 + $0x4] sm:$0xf]
        %v1188 = vld [vmem:[%s9 + $0x8] sm:$0xf]
        %v1189 = vld [vmem:[%s9 + $0xc] sm:$0xf]
        %v1190 = vld [vmem:[%s10] sm:$0x1]
        %v1192 = vlaneseq
        %v1193 = vshrl.u32 %v1192, 7
        %v1194 = vsub.s32 0, %v1193
        %v1195 = vrot.slane %v1190, %v1194
        %v1201 = vunpack.c.l.b16 %v1186
        %v1202 = vunpack.c.l.b16 %v1187
        %v1203 = vunpack.c.l.b16 %v1188
        %v1204 = vunpack.c.l.b16 %v1189
        %v1205 = vpack.c.b16 %v1202, %v1201
        %v1206 = vpack.c.b16 %v1204, %v1203
        %v1210 = vsel %vm440, %v1185, 0
        %1212 = vmatprep.subr.bf16.mxu0 0
        %1213 = vmatpush1.bf16.msra.mxu0 %v1205
        %1214 = vmatprep.subr.bf16.mxu0 0
        %1215 = vmatpush1.bf16.msra.mxu0 %v1206
        %1216 = vmatprep.subr.bf16.mxu0 0
        %1217 = vmatpush1.bf16.msra.mxu0 0
        %1218 = vmatprep.subr.bf16.mxu0 0
        %1219 = vmatpush1.bf16.msra.mxu0 0
        %1220 = vmatprep.subr.bf16.mxu0 0
        %1221 = vmatpush1.bf16.msra.mxu0 0
        %1222 = vmatprep.subr.bf16.mxu0 0
        %1223 = vmatpush1.bf16.msra.mxu0 0
        %1224 = vmatprep.subr.bf16.mxu0 0
        %1225 = vmatpush1.bf16.msra.mxu0 0
        %1226 = vmatprep.subr.bf16.mxu0 0
        %1227 = vmatpush1.bf16.msra.mxu0 0
        %1228 = vmatprep.subr.bf16.mxu0 0
        %1229 = vmatpush1.bf16.msra.mxu0 0
        %1230 = vmatprep.subr.bf16.mxu0 0
        %1231 = vmatpush1.bf16.msra.mxu0 0
        %1232 = vmatprep.subr.bf16.mxu0 0
        %1233 = vmatpush1.bf16.msra.mxu0 0
        %1234 = vmatprep.subr.bf16.mxu0 0
        %1235 = vmatpush1.bf16.msra.mxu0 0
        %1236 = vmatprep.subr.bf16.mxu0 0
        %1237 = vmatpush1.bf16.msra.mxu0 0
        %1238 = vmatprep.subr.bf16.mxu0 0
        %1239 = vmatpush1.bf16.msra.mxu0 0
        %1240 = vmatprep.subr.bf16.mxu0 0
        %1241 = vmatpush1.bf16.msra.mxu0 0
        %1242 = vmatprep.subr.bf16.mxu0 0
        %1243 = vmatpush1.bf16.msra.mxu0 0
        %1244 = vmatprep.mubr.bf16.mxu0 0
        %1245 = vmatmul.mubr.bf16.gmra.mrb[0].mxu0 %v1210
        %v1246 = vpop.f32.mrb[0].mxu0
        %v1247 = vadd.f32 %v1195, %v1246
        %v1248 = vpop.f32.mrb[0].mxu0
        %v1249 = vpop.f32.mrb[0].mxu0
        %v1250 = vpop.f32.mrb[0].mxu0
        %1251 = vdwg.mxu0
        %v1252 = vmax.f32 %v1247, 0.0
        %v1253 = vpack.c.bf16 %v1252, %v1252
        %v1254 = vld [vmem:[%s11] sm:$0xf]
        %v1255 = vld [vmem:[%s11 + $0x4] sm:$0xf]
        %v1256 = vld [vmem:[%s11 + $0x8] sm:$0xf]
        %v1257 = vld [vmem:[%s11 + $0xc] sm:$0xf]
        %v1258 = vld [vmem:[%s11 + $0x10] sm:$0xf]
        %v1259 = vld [vmem:[%s11 + $0x14] sm:$0xf]
        %v1260 = vld [vmem:[%s11 + $0x18] sm:$0xf]
        %v1261 = vld [vmem:[%s11 + $0x1c] sm:$0xf]
        %v1262 = vld [vmem:[%s11 + $0x20] sm:$0xf]
        %v1263 = vld [vmem:[%s11 + $0x24] sm:$0xf]
        %v1264 = vld [vmem:[%s11 + $0x28] sm:$0xf]
        %v1265 = vld [vmem:[%s11 + $0x2c] sm:$0xf]
        %v1266 = vld [vmem:[%s11 + $0x30] sm:$0xf]
        %v1267 = vld [vmem:[%s11 + $0x34] sm:$0xf]
        %v1268 = vld [vmem:[%s11 + $0x38] sm:$0xf]
        %v1269 = vld [vmem:[%s11 + $0x3c] sm:$0xf]
        %v1286 = vunpack.c.l.b16 %v1254
        %v1287 = vunpack.c.l.b16 %v1255
        %v1288 = vunpack.c.l.b16 %v1256
        %v1289 = vunpack.c.l.b16 %v1257
        %v1290 = vunpack.c.l.b16 %v1258
        %v1291 = vunpack.c.l.b16 %v1259
        %v1292 = vunpack.c.l.b16 %v1260
        %v1293 = vunpack.c.l.b16 %v1261
        %v1294 = vunpack.c.l.b16 %v1262
        %v1295 = vunpack.c.l.b16 %v1263
        %v1296 = vunpack.c.l.b16 %v1264
        %v1297 = vunpack.c.l.b16 %v1265
        %v1298 = vunpack.c.l.b16 %v1266
        %v1299 = vunpack.c.l.b16 %v1267
        %v1300 = vunpack.c.l.b16 %v1268
        %v1301 = vunpack.c.l.b16 %v1269
        %v1302 = vpack.c.b16 %v1287, %v1286
        %v1303 = vpack.c.b16 %v1289, %v1288
        %v1304 = vpack.c.b16 %v1291, %v1290
        %v1305 = vpack.c.b16 %v1293, %v1292
        %v1306 = vpack.c.b16 %v1295, %v1294
        %v1307 = vpack.c.b16 %v1297, %v1296
        %v1308 = vpack.c.b16 %v1299, %v1298
        %v1309 = vpack.c.b16 %v1301, %v1300
        %1318 = vmatprep.subr.bf16.mxu0 0
        %1319 = vmatpush1.bf16.msra.mxu0 %v1302
        %1320 = vmatprep.subr.bf16.mxu0 0
        %1321 = vmatpush1.bf16.msra.mxu0 %v1303
        %1322 = vmatprep.subr.bf16.mxu0 0
        %1323 = vmatpush1.bf16.msra.mxu0 %v1304
        %1324 = vmatprep.subr.bf16.mxu0 0
        %1325 = vmatpush1.bf16.msra.mxu0 %v1305
        %1326 = vmatprep.subr.bf16.mxu0 0
        %1327 = vmatpush1.bf16.msra.mxu0 %v1306
        %1328 = vmatprep.subr.bf16.mxu0 0
        %1329 = vmatpush1.bf16.msra.mxu0 %v1307
        %1330 = vmatprep.subr.bf16.mxu0 0
        %1331 = vmatpush1.bf16.msra.mxu0 %v1308
        %1332 = vmatprep.subr.bf16.mxu0 0
        %1333 = vmatpush1.bf16.msra.mxu0 %v1309
        %1334 = vmatprep.subr.bf16.mxu0 0
        %1335 = vmatpush1.bf16.msra.mxu0 0
        %1336 = vmatprep.subr.bf16.mxu0 0
        %1337 = vmatpush1.bf16.msra.mxu0 0
        %1338 = vmatprep.subr.bf16.mxu0 0
        %1339 = vmatpush1.bf16.msra.mxu0 0
        %1340 = vmatprep.subr.bf16.mxu0 0
        %1341 = vmatpush1.bf16.msra.mxu0 0
        %1342 = vmatprep.subr.bf16.mxu0 0
        %1343 = vmatpush1.bf16.msra.mxu0 0
        %1344 = vmatprep.subr.bf16.mxu0 0
        %1345 = vmatpush1.bf16.msra.mxu0 0
        %1346 = vmatprep.subr.bf16.mxu0 0
        %1347 = vmatpush1.bf16.msra.mxu0 0
        %1348 = vmatprep.subr.bf16.mxu0 0
        %1349 = vmatpush1.bf16.msra.mxu0 0
        %1350 = vmatprep.mubr.bf16.mxu0 0
        %1351 = vmatmul.mubr.bf16.gmra.mrb[0].mxu0 %v1253
        %v1352 = vpop.f32.mrb[0].mxu0
        %v1353 = vadd.f32 0.0, %v1352
        %v1354 = vpop.f32.mrb[0].mxu0
        %v1355 = vpop.f32.mrb[0].mxu0
        %v1356 = vpop.f32.mrb[0].mxu0
        %1357 = vdwg.mxu0
        %v1358 = vadd.f32 %v1155, %v1353
        %v1359 = vld [vmem:[%s12] sm:$0x1]
        %v1361 = vlaneseq
        %v1362 = vshrl.u32 %v1361, 7
        %v1363 = vsub.s32 0, %v1362
        %v1364 = vrot.slane %v1359, %v1363
        %v1366 = vadd.f32 %v1358, %v1364
        %1367 = vst.msk [vmem:[%s431] sm:$0xff] %vm440, %v1366
        %s1368 = sand.u32 %s313, 1
        %s1369 = scalar_lea.sflag [#allocation6], %s1368
        %s1370 = sand.u32 %s313, 1
        %s1371 = smul.addr %s1370, 8
        %s1372 = scalar_lea.vmem [#allocation5], %s1371
        // Predicated region
        $region73: #{tpu_custom_call.1} parent=71 // pred_check
          %p1373 = pneg %p323
        $region74: #{tpu_custom_call.1} parent=71 // pred_check_branch
          %1375 = sbr.rel (%p1373) target = $region76
        $region75: #{tpu_custom_call.1} parent=71 // pred_region
          %s1377 = ssub.s32 128, 128
          %1378 = vsyncadd %s1369, %s1377
          %s1379 = smul.addr %s27, 128
          %s1380 = scalar_lea.hbm %s13, %s1379
          %s1382 = sshll.u32 %s1372, 4
          %s1383 = int_to_ptr.vmem [resolvable:$true] %s1382
          %1385 = dma.vmem_to_hbm [thread:$0]  %s1383, 128, %s1380, %s1369
        $region76: #{tpu_custom_call.1} parent=71 // pred_fallthru
          _
      $region72: #{tpu_custom_call.1} parent=5 // pred_fallthru
        _
      %p1386 = scmp.le.s32.totalorder 2, %s22
      // Predicated region
      $region77: #{tpu_custom_call.1} parent=5 // pred_check
        %p1387 = pneg %p1386
      $region78: #{tpu_custom_call.1} parent=5 // pred_check_branch
        %1389 = sbr.rel (%p1387) target = $region80
      $region79: #{tpu_custom_call.1} parent=5 // pred_region
        %s1390 = ssub.s32 %s22, 2
        // Predicated region
        $region81: #{tpu_custom_call.1} parent=79 // pred_check
          %p1391 = pneg %p329
        $region82: #{tpu_custom_call.1} parent=79 // pred_check_branch
          %1393 = sbr.rel (%p1391) target = $region84
        $region83: #{tpu_custom_call.1} parent=79 // pred_region
          %s1394 = sand.u32 %s314, 1
          %s1395 = scalar_lea.sflag [#allocation6], %s1394
          %s1396 = sand.u32 %s314, 1
          %s1397 = smul.addr %s1396, 8
          %s1398 = scalar_lea.vmem [#allocation5], %s1397
          %1399 = dma.done %s1395, 128
        $region84: #{tpu_custom_call.1} parent=79 // pred_fallthru
          _
      $region80: #{tpu_custom_call.1} parent=5 // pred_fallthru
        _
    $region6: #{tpu_custom_call.1} parent=1 // loop_footer
      %s26 = sadd.s32 1, %s22
    $region7: #{tpu_custom_call.1} parent=1 // loop_footer_branch
      %21 = sbr.rel target = $region3
    $region8: #{tpu_custom_call.1} parent=1 // loop_exit
      _
    %1400 = vsyncpa [#allocation6], 1
    %s1401 = scalar_lea.sflag [#allocation6], 1
    %1402 = vsyncpa %s1401, 1

// kernel: tpu_custom_call.1
$region0: #{tpu_custom_call.1}
  #allocation0 [shape = 'u32[]', space=smem, size = 0x4, offset = 0x4, fixed_abs, tag = 'smem constant byte address 0x4 - core index']
  #allocation1 [shape = 'u32[144,128]{1,0:T(1,128)}', space=vmem, size = 0x12000, scoped, tag = 'internal scratch']
  #allocation2 [shape = 'bf16[4,8,8]{2,1,0:T(8,128)(2,1)}', space=vmem, size = 0x2000, scoped, tag = 'scratch operand']
  #allocation3 [shape = 'bf16[4,8,8]{2,1,0:T(8,128)(2,1)}', space=vmem, size = 0x2000, scoped, tag = 'scratch operand']
  #allocation4 [shape = 'bf16[4,8,8]{2,1,0:T(8,128)(2,1)}', space=vmem, size = 0x2000, scoped, tag = 'scratch operand']
  %s0 = inlined_call_operand.vmem [shape: f32[2,8,32], index: 0, kind: input, shape index: {}]
  %s1 = inlined_call_operand.vmem [shape: f32[1,32], index: 1, kind: input, shape index: {}]
  %s2 = inlined_call_operand.vmem [shape: f32[1,32], index: 2, kind: input, shape index: {}]
  %s3 = inlined_call_operand.vmem [shape: bf16[32,96], index: 3, kind: input, shape index: {}]
  %s4 = inlined_call_operand.vmem [shape: f32[1,96], index: 4, kind: input, shape index: {}]
  %s5 = inlined_call_operand.vmem [shape: bf16[32,32], index: 5, kind: input, shape index: {}]
  %s6 = inlined_call_operand.vmem [shape: f32[1,32], index: 6, kind: input, shape index: {}]
  %s7 = inlined_call_operand.vmem [shape: f32[1,32], index: 7, kind: input, shape index: {}]
  %s8 = inlined_call_operand.vmem [shape: f32[1,32], index: 8, kind: input, shape index: {}]
  %s9 = inlined_call_operand.vmem [shape: bf16[32,128], index: 9, kind: input, shape index: {}]
  %s10 = inlined_call_operand.vmem [shape: f32[1,128], index: 10, kind: input, shape index: {}]
  %s11 = inlined_call_operand.vmem [shape: bf16[128,32], index: 11, kind: input, shape index: {}]
  %s12 = inlined_call_operand.vmem [shape: f32[1,32], index: 12, kind: input, shape index: {}]
  %s13 = inlined_call_operand.hbm [shape: f32[2,8,32], index: 13, kind: output, shape index: {}]
  %s14 = sld [smem:[#allocation0]]
  $region85: #{tpu_custom_call.1} parent=0
    _
  %s16 = ssub.s32 1, %s14
  %s17 = scalar_select 0, %s16, %s14
  $region1: #{tpu_custom_call.1} parent=0
    #allocation5 [shape = 'u8[8192]{0}', space=vmem, size = 0x2000, scoped, tag = 'output window, operand 0']
    #allocation6 [shape = 's32[2]{0}', space=sflag, size = 0x8, scoped, tag = 'scoped memory for tpu_custom_call.1']
    %18 = vsyncpa [#allocation6], 0
    %s19 = scalar_lea.sflag [#allocation6], 1
    %20 = vsyncpa %s19, 0
    loop: start=0, step=1, limit=4
    $region2: #{tpu_custom_call.1} parent=1 // loop_pre_header
      _
    $region3: #{tpu_custom_call.1} parent=1 // loop_header
      %s22 = sphi 0, %s26
      %p23 = scmp.ge.s32.totalorder %s22, 4
      %s32 = sphi 0, %s34
      %s35 = sphi 0, %s32
      %s36 = sphi 0, %s35
      %s52 = sphi 0, %s36
      %s56 = sphi 0, %s56
      %s58 = sphi 0, %s56
      %s59 = sphi 0, %s58
      %s73 = sphi 0, %s59
      %s77 = sphi 0, %s77
      %s79 = sphi 0, %s77
      %s80 = sphi 0, %s79
      %s94 = sphi 0, %s80
      %s98 = sphi 0, %s98
      %s100 = sphi 0, %s98
      %s101 = sphi 0, %s100
      %s115 = sphi 0, %s101
      %s119 = sphi 0, %s119
      %s121 = sphi 0, %s119
      %s122 = sphi 0, %s121
      %s136 = sphi 0, %s122
      %s140 = sphi 0, %s140
      %s142 = sphi 0, %s140
      %s143 = sphi 0, %s142
      %s157 = sphi 0, %s143
      %s161 = sphi 0, %s161
      %s163 = sphi 0, %s161
      %s164 = sphi 0, %s163
      %s178 = sphi 0, %s164
      %s182 = sphi 0, %s182
      %s184 = sphi 0, %s182
      %s185 = sphi 0, %s184
      %s199 = sphi 0, %s185
      %s203 = sphi 0, %s203
      %s205 = sphi 0, %s203
      %s206 = sphi 0, %s205
      %s220 = sphi 0, %s206
      %s224 = sphi 0, %s224
      %s226 = sphi 0, %s224
      %s227 = sphi 0, %s226
      %s241 = sphi 0, %s227
      %s245 = sphi 0, %s245
      %s247 = sphi 0, %s245
      %s248 = sphi 0, %s247
      %s262 = sphi 0, %s248
      %s266 = sphi 0, %s266
      %s268 = sphi 0, %s266
      %s269 = sphi 0, %s268
      %s283 = sphi 0, %s269
      %s287 = sphi 0, %s287
      %s289 = sphi 0, %s287
      %s290 = sphi 0, %s289
      %s304 = sphi 0, %s290
      %s310 = sphi 0, %s312
      %s313 = sphi 0, %s310
      %s314 = sphi 0, %s313
      %s330 = sphi 0, %s314
    $region4: #{tpu_custom_call.1} parent=1 // loop_header_branch
      %25 = sbr.rel (%p23) target = $region8
    $region5: #{tpu_custom_call.1} parent=1 // loop_body
      %s27 = ssub.s32 %s22, 1
      %s28 = ssub.s32 %s22, 2
      %s29 = sadd.s32 %s22, 1
      %s30 = ssub.s32 %s22, %s29
      %p31 = scmp.eq.s32.totalorder %s30, 0
      %s33 = sadd.s32 %s32, 1
      %s34 = scalar_select %p31, %s32, %s33
      %p37 = pneg %p31
      %p38 = scmp.eq.s32.totalorder %s22, 1
      %p39 = por %p37, %p38
      %p40 = scmp.ne.s32.totalorder %s32, %s35
      %p41 = scmp.eq.s32.totalorder %s22, 0
      %p42 = por %p40, %p41
      %p43 = scmp.ne.s32.totalorder %s32, %s35
      %p44 = scmp.eq.s32.totalorder %s27, 1
      %p45 = por %p43, %p44
      %p46 = scmp.ne.s32.totalorder %s35, %s36
      %p47 = scmp.eq.s32.totalorder %s27, 0
      %p48 = por %p46, %p47
      %p49 = scmp.ne.s32.totalorder %s35, %s36
      %p50 = scmp.eq.s32.totalorder %s28, 1
      %p51 = por %p49, %p50
      %p53 = scmp.ne.s32.totalorder %s36, %s52
      %p54 = scmp.eq.s32.totalorder %s28, 0
      %p55 = por %p53, %p54
      %s57 = sadd.s32 %s56, 1
      %p60 = scmp.eq.s32.totalorder %s22, 1
      %p61 = scmp.ne.s32.totalorder %s56, %s58
      %p62 = scmp.eq.s32.totalorder %s22, 0
      %p63 = por %p61, %p62
      %p64 = scmp.ne.s32.totalorder %s56, %s58
      %p65 = scmp.eq.s32.totalorder %s27, 1
      %p66 = por %p64, %p65
      %p67 = scmp.ne.s32.totalorder %s58, %s59
      %p68 = scmp.eq.s32.totalorder %s27, 0
      %p69 = por %p67, %p68
      %p70 = scmp.ne.s32.totalorder %s58, %s59
      %p71 = scmp.eq.s32.totalorder %s28, 1
      %p72 = por %p70, %p71
      %p74 = scmp.ne.s32.totalorder %s59, %s73
      %p75 = scmp.eq.s32.totalorder %s28, 0
      %p76 = por %p74, %p75
      %s78 = sadd.s32 %s77, 1
      %p81 = scmp.eq.s32.totalorder %s22, 1
      %p82 = scmp.ne.s32.totalorder %s77, %s79
      %p83 = scmp.eq.s32.totalorder %s22, 0
      %p84 = por %p82, %p83
      %p85 = scmp.ne.s32.totalorder %s77, %s79
      %p86 = scmp.eq.s32.totalorder %s27, 1
      %p87 = por %p85, %p86
      %p88 = scmp.ne.s32.totalorder %s79, %s80
      %p89 = scmp.eq.s32.totalorder %s27, 0
      %p90 = por %p88, %p89
      %p91 = scmp.ne.s32.totalorder %s79, %s80
      %p92 = scmp.eq.s32.totalorder %s28, 1
      %p93 = por %p91, %p92
      %p95 = scmp.ne.s32.totalorder %s80, %s94
      %p96 = scmp.eq.s32.totalorder %s28, 0
      %p97 = por %p95, %p96
      %s99 = sadd.s32 %s98, 1
      %p102 = scmp.eq.s32.totalorder %s22, 1
      %p103 = scmp.ne.s32.totalorder %s98, %s100
      %p104 = scmp.eq.s32.totalorder %s22, 0
      %p105 = por %p103, %p104
      %p106 = scmp.ne.s32.totalorder %s98, %s100
      %p107 = scmp.eq.s32.totalorder %s27, 1
      %p108 = por %p106, %p107
      %p109 = scmp.ne.s32.totalorder %s100, %s101
      %p110 = scmp.eq.s32.totalorder %s27, 0
      %p111 = por %p109, %p110
      %p112 = scmp.ne.s32.totalorder %s100, %s101
      %p113 = scmp.eq.s32.totalorder %s28, 1
      %p114 = por %p112, %p113
      %p116 = scmp.ne.s32.totalorder %s101, %s115
      %p117 = scmp.eq.s32.totalorder %s28, 0
      %p118 = por %p116, %p117
      %s120 = sadd.s32 %s119, 1
      %p123 = scmp.eq.s32.totalorder %s22, 1
      %p124 = scmp.ne.s32.totalorder %s119, %s121
      %p125 = scmp.eq.s32.totalorder %s22, 0
      %p126 = por %p124, %p125
      %p127 = scmp.ne.s32.totalorder %s119, %s121
      %p128 = scmp.eq.s32.totalorder %s27, 1
      %p129 = por %p127, %p128
      %p130 = scmp.ne.s32.totalorder %s121, %s122
      %p131 = scmp.eq.s32.totalorder %s27, 0
      %p132 = por %p130, %p131
      %p133 = scmp.ne.s32.totalorder %s121, %s122
      %p134 = scmp.eq.s32.totalorder %s28, 1
      %p135 = por %p133, %p134
      %p137 = scmp.ne.s32.totalorder %s122, %s136
      %p138 = scmp.eq.s32.totalorder %s28, 0
      %p139 = por %p137, %p138
      %s141 = sadd.s32 %s140, 1
      %p144 = scmp.eq.s32.totalorder %s22, 1
      %p145 = scmp.ne.s32.totalorder %s140, %s142
      %p146 = scmp.eq.s32.totalorder %s22, 0
      %p147 = por %p145, %p146
      %p148 = scmp.ne.s32.totalorder %s140, %s142
      %p149 = scmp.eq.s32.totalorder %s27, 1
      %p150 = por %p148, %p149
      %p151 = scmp.ne.s32.totalorder %s142, %s143
      %p152 = scmp.eq.s32.totalorder %s27, 0
      %p153 = por %p151, %p152
      %p154 = scmp.ne.s32.totalorder %s142, %s143
      %p155 = scmp.eq.s32.totalorder %s28, 1
      %p156 = por %p154, %p155
      %p158 = scmp.ne.s32.totalorder %s143, %s157
      %p159 = scmp.eq.s32.totalorder %s28, 0
      %p160 = por %p158, %p159
      %s162 = sadd.s32 %s161, 1
      %p165 = scmp.eq.s32.totalorder %s22, 1
      %p166 = scmp.ne.s32.totalorder %s161, %s163
      %p167 = scmp.eq.s32.totalorder %s22, 0
      %p168 = por %p166, %p167
      %p169 = scmp.ne.s32.totalorder %s161, %s163
      %p170 = scmp.eq.s32.totalorder %s27, 1
      %p171 = por %p169, %p170
      %p172 = scmp.ne.s32.totalorder %s163, %s164
      %p173 = scmp.eq.s32.totalorder %s27, 0
      %p174 = por %p172, %p173
      %p175 = scmp.ne.s32.totalorder %s163, %s164
      %p176 = scmp.eq.s32.totalorder %s28, 1
      %p177 = por %p175, %p176
      %p179 = scmp.ne.s32.totalorder %s164, %s178
      %p180 = scmp.eq.s32.totalorder %s28, 0
      %p181 = por %p179, %p180
      %s183 = sadd.s32 %s182, 1
      %p186 = scmp.eq.s32.totalorder %s22, 1
      %p187 = scmp.ne.s32.totalorder %s182, %s184
      %p188 = scmp.eq.s32.totalorder %s22, 0
      %p189 = por %p187, %p188
      %p190 = scmp.ne.s32.totalorder %s182, %s184
      %p191 = scmp.eq.s32.totalorder %s27, 1
      %p192 = por %p190, %p191
      %p193 = scmp.ne.s32.totalorder %s184, %s185
      %p194 = scmp.eq.s32.totalorder %s27, 0
      %p195 = por %p193, %p194
      %p196 = scmp.ne.s32.totalorder %s184, %s185
      %p197 = scmp.eq.s32.totalorder %s28, 1
      %p198 = por %p196, %p197
      %p200 = scmp.ne.s32.totalorder %s185, %s199
      %p201 = scmp.eq.s32.totalorder %s28, 0
      %p202 = por %p200, %p201
      %s204 = sadd.s32 %s203, 1
      %p207 = scmp.eq.s32.totalorder %s22, 1
      %p208 = scmp.ne.s32.totalorder %s203, %s205
      %p209 = scmp.eq.s32.totalorder %s22, 0
      %p210 = por %p208, %p209
      %p211 = scmp.ne.s32.totalorder %s203, %s205
      %p212 = scmp.eq.s32.totalorder %s27, 1
      %p213 = por %p211, %p212
      %p214 = scmp.ne.s32.totalorder %s205, %s206
      %p215 = scmp.eq.s32.totalorder %s27, 0
      %p216 = por %p214, %p215
      %p217 = scmp.ne.s32.totalorder %s205, %s206
      %p218 = scmp.eq.s32.totalorder %s28, 1
      %p219 = por %p217, %p218
      %p221 = scmp.ne.s32.totalorder %s206, %s220
      %p222 = scmp.eq.s32.totalorder %s28, 0
      %p223 = por %p221, %p222
      %s225 = sadd.s32 %s224, 1
      %p228 = scmp.eq.s32.totalorder %s22, 1
      %p229 = scmp.ne.s32.totalorder %s224, %s226
      %p230 = scmp.eq.s32.totalorder %s22, 0
      %p231 = por %p229, %p230
      %p232 = scmp.ne.s32.totalorder %s224, %s226
      %p233 = scmp.eq.s32.totalorder %s27, 1
      %p234 = por %p232, %p233
      %p235 = scmp.ne.s32.totalorder %s226, %s227
      %p236 = scmp.eq.s32.totalorder %s27, 0
      %p237 = por %p235, %p236
      %p238 = scmp.ne.s32.totalorder %s226, %s227
      %p239 = scmp.eq.s32.totalorder %s28, 1
      %p240 = por %p238, %p239
      %p242 = scmp.ne.s32.totalorder %s227, %s241
      %p243 = scmp.eq.s32.totalorder %s28, 0
      %p244 = por %p242, %p243
      %s246 = sadd.s32 %s245, 1
      %p249 = scmp.eq.s32.totalorder %s22, 1
      %p250 = scmp.ne.s32.totalorder %s245, %s247
      %p251 = scmp.eq.s32.totalorder %s22, 0
      %p252 = por %p250, %p251
      %p253 = scmp.ne.s32.totalorder %s245, %s247
      %p254 = scmp.eq.s32.totalorder %s27, 1
      %p255 = por %p253, %p254
      %p256 = scmp.ne.s32.totalorder %s247, %s248
      %p257 = scmp.eq.s32.totalorder %s27, 0
      %p258 = por %p256, %p257
      %p259 = scmp.ne.s32.totalorder %s247, %s248
      %p260 = scmp.eq.s32.totalorder %s28, 1
      %p261 = por %p259, %p260
      %p263 = scmp.ne.s32.totalorder %s248, %s262
      %p264 = scmp.eq.s32.totalorder %s28, 0
      %p265 = por %p263, %p264
      %s267 = sadd.s32 %s266, 1
      %p270 = scmp.eq.s32.totalorder %s22, 1
      %p271 = scmp.ne.s32.totalorder %s266, %s268
      %p272 = scmp.eq.s32.totalorder %s22, 0
      %p273 = por %p271, %p272
      %p274 = scmp.ne.s32.totalorder %s266, %s268
      %p275 = scmp.eq.s32.totalorder %s27, 1
      %p276 = por %p274, %p275
      %p277 = scmp.ne.s32.totalorder %s268, %s269
      %p278 = scmp.eq.s32.totalorder %s27, 0
      %p279 = por %p277, %p278
      %p280 = scmp.ne.s32.totalorder %s268, %s269
      %p281 = scmp.eq.s32.totalorder %s28, 1
      %p282 = por %p280, %p281
      %p284 = scmp.ne.s32.totalorder %s269, %s283
      %p285 = scmp.eq.s32.totalorder %s28, 0
      %p286 = por %p284, %p285
      %s288 = sadd.s32 %s287, 1
      %p291 = scmp.eq.s32.totalorder %s22, 1
      %p292 = scmp.ne.s32.totalorder %s287, %s289
      %p293 = scmp.eq.s32.totalorder %s22, 0
      %p294 = por %p292, %p293
      %p295 = scmp.ne.s32.totalorder %s287, %s289
      %p296 = scmp.eq.s32.totalorder %s27, 1
      %p297 = por %p295, %p296
      %p298 = scmp.ne.s32.totalorder %s289, %s290
      %p299 = scmp.eq.s32.totalorder %s27, 0
      %p300 = por %p298, %p299
      %p301 = scmp.ne.s32.totalorder %s289, %s290
      %p302 = scmp.eq.s32.totalorder %s28, 1
      %p303 = por %p301, %p302
      %p305 = scmp.ne.s32.totalorder %s290, %s304
      %p306 = scmp.eq.s32.totalorder %s28, 0
      %p307 = por %p305, %p306
      %s308 = ssub.s32 %s22, %s29
      %p309 = scmp.eq.s32.totalorder %s308, 0
      %s311 = sadd.s32 %s310, 1
      %s312 = scalar_select %p309, %s310, %s311
      %p315 = pneg %p309
      %p316 = scmp.eq.s32.totalorder %s22, 1
      %p317 = por %p315, %p316
      %p318 = scmp.ne.s32.totalorder %s310, %s313
      %p319 = scmp.eq.s32.totalorder %s22, 0
      %p320 = por %p318, %p319
      %p321 = scmp.ne.s32.totalorder %s310, %s313
      %p322 = scmp.eq.s32.totalorder %s27, 1
      %p323 = por %p321, %p322
      %p324 = scmp.ne.s32.totalorder %s313, %s314
      %p325 = scmp.eq.s32.totalorder %s27, 0
      %p326 = por %p324, %p325
      %p327 = scmp.ne.s32.totalorder %s313, %s314
      %p328 = scmp.eq.s32.totalorder %s28, 1
      %p329 = por %p327, %p328
      %p331 = scmp.ne.s32.totalorder %s314, %s330
      %p332 = scmp.eq.s32.totalorder %s28, 0
      %p333 = por %p331, %p332
      %p334 = scmp.le.s32.totalorder 1, %s22
      %p335 = scmp.lt.s32.totalorder %s22, 3
      %p336 = pnand %p334, %p335
      %p337 = pneg %p336
      // Predicated region
      $region9: #{tpu_custom_call.1} parent=5 // pred_check
        _
      $region10: #{tpu_custom_call.1} parent=5 // pred_check_branch
        %339 = sbr.rel (%p336) target = $region12
      $region11: #{tpu_custom_call.1} parent=5 // pred_region
        %s340 = ssub.s32 %s22, 1
        // Predicated region
        $region13: #{tpu_custom_call.1} parent=11 // pred_check
          %p341 = pneg %p69
        $region14: #{tpu_custom_call.1} parent=11 // pred_check_branch
          %343 = sbr.rel (%p341) target = $region16
        $region15: #{tpu_custom_call.1} parent=11 // pred_region
          _
        $region16: #{tpu_custom_call.1} parent=11 // pred_fallthru
          _
        // Predicated region
        $region17: #{tpu_custom_call.1} parent=11 // pred_check
          %p344 = pneg %p90
        $region18: #{tpu_custom_call.1} parent=11 // pred_check_branch
          %346 = sbr.rel (%p344) target = $region20
        $region19: #{tpu_custom_call.1} parent=11 // pred_region
          _
        $region20: #{tpu_custom_call.1} parent=11 // pred_fallthru
          _
        // Predicated region
        $region21: #{tpu_custom_call.1} parent=11 // pred_check
          %p347 = pneg %p111
        $region22: #{tpu_custom_call.1} parent=11 // pred_check_branch
          %349 = sbr.rel (%p347) target = $region24
        $region23: #{tpu_custom_call.1} parent=11 // pred_region
          _
        $region24: #{tpu_custom_call.1} parent=11 // pred_fallthru
          _
        // Predicated region
        $region25: #{tpu_custom_call.1} parent=11 // pred_check
          %p350 = pneg %p132
        $region26: #{tpu_custom_call.1} parent=11 // pred_check_branch
          %352 = sbr.rel (%p350) target = $region28
        $region27: #{tpu_custom_call.1} parent=11 // pred_region
          _
        $region28: #{tpu_custom_call.1} parent=11 // pred_fallthru
          _
        // Predicated region
        $region29: #{tpu_custom_call.1} parent=11 // pred_check
          %p353 = pneg %p153
        $region30: #{tpu_custom_call.1} parent=11 // pred_check_branch
          %355 = sbr.rel (%p353) target = $region32
        $region31: #{tpu_custom_call.1} parent=11 // pred_region
          _
        $region32: #{tpu_custom_call.1} parent=11 // pred_fallthru
          _
        // Predicated region
        $region33: #{tpu_custom_call.1} parent=11 // pred_check
          %p356 = pneg %p174
        $region34: #{tpu_custom_call.1} parent=11 // pred_check_branch
          %358 = sbr.rel (%p356) target = $region36
        $region35: #{tpu_custom_call.1} parent=11 // pred_region
          _
        $region36: #{tpu_custom_call.1} parent=11 // pred_fallthru
          _
        // Predicated region
        $region37: #{tpu_custom_call.1} parent=11 // pred_check
          %p359 = pneg %p195
        $region38: #{tpu_custom_call.1} parent=11 // pred_check_branch
          %361 = sbr.rel (%p359) target = $region40
        $region39: #{tpu_custom_call.1} parent=11 // pred_region
          _
        $region40: #{tpu_custom_call.1} parent=11 // pred_fallthru
          _
        // Predicated region
        $region41: #{tpu_custom_call.1} parent=11 // pred_check
          %p362 = pneg %p216
        $region42: #{tpu_custom_call.1} parent=11 // pred_check_branch
          %364 = sbr.rel (%p362) target = $region44
        $region43: #{tpu_custom_call.1} parent=11 // pred_region
          _
        $region44: #{tpu_custom_call.1} parent=11 // pred_fallthru
          _
        // Predicated region
        $region45: #{tpu_custom_call.1} parent=11 // pred_check
          %p365 = pneg %p237
        $region46: #{tpu_custom_call.1} parent=11 // pred_check_branch
          %367 = sbr.rel (%p365) target = $region48
        $region47: #{tpu_custom_call.1} parent=11 // pred_region
          _
        $region48: #{tpu_custom_call.1} parent=11 // pred_fallthru
          _
        // Predicated region
        $region49: #{tpu_custom_call.1} parent=11 // pred_check
          %p368 = pneg %p258
        $region50: #{tpu_custom_call.1} parent=11 // pred_check_branch
          %370 = sbr.rel (%p368) target = $region52
        $region51: #{tpu_custom_call.1} parent=11 // pred_region
          _
        $region52: #{tpu_custom_call.1} parent=11 // pred_fallthru
          _
        // Predicated region
        $region53: #{tpu_custom_call.1} parent=11 // pred_check
          %p371 = pneg %p279
        $region54: #{tpu_custom_call.1} parent=11 // pred_check_branch
          %373 = sbr.rel (%p371) target = $region56
        $region55: #{tpu_custom_call.1} parent=11 // pred_region
          _
        $region56: #{tpu_custom_call.1} parent=11 // pred_fallthru
          _
        // Predicated region
        $region57: #{tpu_custom_call.1} parent=11 // pred_check
          %p374 = pneg %p300
        $region58: #{tpu_custom_call.1} parent=11 // pred_check_branch
          %376 = sbr.rel (%p374) target = $region60
        $region59: #{tpu_custom_call.1} parent=11 // pred_region
          _
        $region60: #{tpu_custom_call.1} parent=11 // pred_fallthru
          _
      $region12: #{tpu_custom_call.1} parent=5 // pred_fallthru
        _
      %p377 = scmp.lt.s32.totalorder %s22, 2
      // Predicated region
      $region61: #{tpu_custom_call.1} parent=5 // pred_check
        %p378 = pneg %p377
      $region62: #{tpu_custom_call.1} parent=5 // pred_check_branch
        %380 = sbr.rel (%p378) target = $region64
      $region63: #{tpu_custom_call.1} parent=5 // pred_region
        // Predicated region
        $region65: #{tpu_custom_call.1} parent=63 // pred_check
          %p381 = pneg %p42
        $region66: #{tpu_custom_call.1} parent=63 // pred_check_branch
          %383 = sbr.rel (%p381) target = $region68
        $region67: #{tpu_custom_call.1} parent=63 // pred_region
          %p384 = scmp.lt.s32.totalorder %s22, 1
          %s385 = scalar_select %p384, %s22, 1
          %s386 = smul.addr %s385, 8
          %s387 = scalar_lea.vmem %s0, %s386
        $region68: #{tpu_custom_call.1} parent=63 // pred_fallthru
          _
      $region64: #{tpu_custom_call.1} parent=5 // pred_fallthru
        _
      %p388 = scmp.le.s32.totalorder 1, %s22
      %p389 = scmp.lt.s32.totalorder %s22, 3
      %p390 = pnand %p388, %p389
      %p391 = pneg %p390
      // Predicated region
      $region69: #{tpu_custom_call.1} parent=5 // pred_check
        _
      $region70: #{tpu_custom_call.1} parent=5 // pred_check_branch
        %393 = sbr.rel (%p390) target = $region72
      $region71: #{tpu_custom_call.1} parent=5 // pred_region
        %s394 = ssub.s32 %s22, 1
        %p395 = scmp.lt.s32.totalorder %s27, 1
        %s396 = scalar_select %p395, %s27, 1
        %s397 = smul.addr %s396, 8
        %s398 = scalar_lea.vmem %s0, %s397
        %p399 = pneg %p48
        %p400 = pneg %p45
        %p401 = pneg %p69
        %p402 = pneg %p66
        %p403 = pneg %p90
        %p404 = pneg %p87
        %p405 = pneg %p111
        %p406 = pneg %p108
        %p407 = pneg %p132
        %p408 = pneg %p129
        %p409 = pneg %p153
        %p410 = pneg %p150
        %p411 = pneg %p174
        %p412 = pneg %p171
        %p413 = pneg %p195
        %p414 = pneg %p192
        %p415 = pneg %p216
        %p416 = pneg %p213
        %p417 = pneg %p237
        %p418 = pneg %p234
        %p419 = pneg %p258
        %p420 = pneg %p255
        %p421 = pneg %p279
        %p422 = pneg %p276
        %p423 = pneg %p300
        %p424 = pneg %p297
        %p425 = pneg %p326
        %p426 = pneg %p323
        %s427 = sand.u32 %s313, 1
        %s428 = scalar_lea.sflag [#allocation6], %s427
        %s429 = sand.u32 %s313, 1
        %s430 = smul.addr %s429, 8
        %s431 = scalar_lea.vmem [#allocation5], %s430
        %p432 = scmp.lt.s32.totalorder %s27, 1
        %s433 = scalar_select %p432, %s27, 1
        %s434 = smul.addr %s433, 8
        %s435 = scalar_lea.vmem %s0, %s434
        %v437 = vld [vmem:[%s435] sm:$0xff]
        %v438 = vld [vmem:[%s1] sm:$0x1]
        %v439 = vld [vmem:[%s2] sm:$0x1]
        %vm440 = vcmask 261120
        %v441 = vsel %vm440, %v437, 0.0
        %442 = vadd.xlane.f32.xlu0 %v441
        %v443 = vpop.xlane.xlu0 %442
        %v444 = vrcp.pop 32.0
        %v445 = vmul.f32 %v443, %v444
        %v446 = vsub.f32 %v437, %v445
        %v447 = vmul.f32 %v446, %v446
        %v448 = vsel %vm440, %v447, 0.0
        %449 = vadd.xlane.f32.xlu0 %v448
        %v450 = vpop.xlane.xlu0 %449
        %v451 = vmul.f32 %v450, %v444
        %v452 = vadd.f32 %v451, 1e-05
        %v453 = vrsqrt.pop %v452
        %v454 = vmul.f32 %v446, %v453
        %v456 = vlaneseq
        %v457 = vshrl.u32 %v456, 7
        %v458 = vsub.s32 0, %v457
        %v459 = vrot.slane %v438, %v458
        %v461 = vmul.f32 %v454, %v459
        %v463 = vlaneseq
        %v464 = vshrl.u32 %v463, 7
        %v465 = vsub.s32 0, %v464
        %v466 = vrot.slane %v439, %v465
        %v468 = vadd.f32 %v461, %v466
        %v469 = vpack.c.bf16 %v468, %v468
        %v470 = vld [vmem:[%s3] sm:$0xf]
        %v471 = vld [vmem:[%s3 + $0x4] sm:$0xf]
        %v472 = vld [vmem:[%s3 + $0x8] sm:$0xf]
        %v473 = vld [vmem:[%s3 + $0xc] sm:$0xf]
        %v474 = vld [vmem:[%s4] sm:$0x1]
        %v476 = vlaneseq
        %v477 = vshrl.u32 %v476, 7
        %v478 = vsub.s32 0, %v477
        %v479 = vrot.slane %v474, %v478
        %v485 = vunpack.c.l.b16 %v470
        %v486 = vunpack.c.l.b16 %v471
        %v487 = vunpack.c.l.b16 %v472
        %v488 = vunpack.c.l.b16 %v473
        %v489 = vpack.c.b16 %v486, %v485
        %v490 = vpack.c.b16 %v488, %v487
        %v494 = vsel %vm440, %v469, 0
        %496 = vmatprep.subr.bf16.mxu0 0
        %497 = vmatpush1.bf16.msra.mxu0 %v489
        %498 = vmatprep.subr.bf16.mxu0 0
        %499 = vmatpush1.bf16.msra.mxu0 %v490
        %500 = vmatprep.subr.bf16.mxu0 0
        %501 = vmatpush1.bf16.msra.mxu0 0
        %502 = vmatprep.subr.bf16.mxu0 0
        %503 = vmatpush1.bf16.msra.mxu0 0
        %504 = vmatprep.subr.bf16.mxu0 0
        %505 = vmatpush1.bf16.msra.mxu0 0
        %506 = vmatprep.subr.bf16.mxu0 0
        %507 = vmatpush1.bf16.msra.mxu0 0
        %508 = vmatprep.subr.bf16.mxu0 0
        %509 = vmatpush1.bf16.msra.mxu0 0
        %510 = vmatprep.subr.bf16.mxu0 0
        %511 = vmatpush1.bf16.msra.mxu0 0
        %512 = vmatprep.subr.bf16.mxu0 0
        %513 = vmatpush1.bf16.msra.mxu0 0
        %514 = vmatprep.subr.bf16.mxu0 0
        %515 = vmatpush1.bf16.msra.mxu0 0
        %516 = vmatprep.subr.bf16.mxu0 0
        %517 = vmatpush1.bf16.msra.mxu0 0
        %518 = vmatprep.subr.bf16.mxu0 0
        %519 = vmatpush1.bf16.msra.mxu0 0
        %520 = vmatprep.subr.bf16.mxu0 0
        %521 = vmatpush1.bf16.msra.mxu0 0
        %522 = vmatprep.subr.bf16.mxu0 0
        %523 = vmatpush1.bf16.msra.mxu0 0
        %524 = vmatprep.subr.bf16.mxu0 0
        %525 = vmatpush1.bf16.msra.mxu0 0
        %526 = vmatprep.subr.bf16.mxu0 0
        %527 = vmatpush1.bf16.msra.mxu0 0
        %528 = vmatprep.mubr.bf16.mxu0 0
        %529 = vmatmul.mubr.bf16.gmra.mrb[0].mxu0 %v494
        %v530 = vpop.f32.mrb[0].mxu0
        %v531 = vadd.f32 %v479, %v530
        %v532 = vpop.f32.mrb[0].mxu0
        %v533 = vpop.f32.mrb[0].mxu0
        %v534 = vpop.f32.mrb[0].mxu0
        %535 = vdwg.mxu0
        %v536 = vmul.f32 %v531, 0.35355338
        %v537 = vpack.c.bf16 %v536, %v536
        %vm538 = vcmask 60416
        %539 = vst.msk [vmem:[#allocation2] sm:$0xf] %vm538, %v537
        %v540 = vpack.c.bf16 %v531, %v531
        %v542 = vunpack.c.l.b16 %v540
        %v543 = vpack.c.b16 %v542, %v542
        %544 = vrot.lane.b32.xlu0 %v543, 96
        %v545 = vpop.permute.xlu0 %544
        %547 = vst.msk [vmem:[#allocation3] sm:$0xf] %vm538, %v545
        %548 = vrot.lane.b32.xlu0 %v543, 64
        %v549 = vpop.permute.xlu0 %548
        %551 = vst.msk [vmem:[#allocation4] sm:$0xf] %vm538, %v549
        %v553 = vunpack.c.l.b16 %v537
        %v554 = vpack.c.b16 %v553, %v553
        %555 = vrot.lane.b32.xlu0 %v554, 120
        %v556 = vpop.permute.xlu0 %555
        %s558 = sadd.s32 0, 1
        %s559 = smul.addr %s558, 4
        %s560 = scalar_lea.vmem [#allocation2], %s559
        %561 = vst.msk [vmem:[%s560] sm:$0xf] %vm538, %v556
        %562 = vrot.lane.b32.xlu0 %v543, 88
        %v563 = vpop.permute.xlu0 %562
        %s565 = smul.addr %s558, 4
        %s566 = scalar_lea.vmem [#allocation3], %s565
        %567 = vst.msk [vmem:[%s566] sm:$0xf] %vm538, %v563
        %568 = vrot.lane.b32.xlu0 %v543, 56
        %v569 = vpop.permute.xlu0 %568
        %s571 = smul.addr %s558, 4
        %s572 = scalar_lea.vmem [#allocation4], %s571
        %573 = vst.msk [vmem:[%s572] sm:$0xf] %vm538, %v569
        %574 = vrot.lane.b32.xlu0 %v554, 112
        %v575 = vpop.permute.xlu0 %574
        %s577 = sadd.s32 0, 2
        %s578 = smul.addr %s577, 4
        %s579 = scalar_lea.vmem [#allocation2], %s578
        %580 = vst.msk [vmem:[%s579] sm:$0xf] %vm538, %v575
        %581 = vrot.lane.b32.xlu0 %v543, 80
        %v582 = vpop.permute.xlu0 %581
        %s584 = smul.addr %s577, 4
        %s585 = scalar_lea.vmem [#allocation3], %s584
        %586 = vst.msk [vmem:[%s585] sm:$0xf] %vm538, %v582
        %587 = vrot.lane.b32.xlu0 %v543, 48
        %v588 = vpop.permute.xlu0 %587
        %s590 = smul.addr %s577, 4
        %s591 = scalar_lea.vmem [#allocation4], %s590
        %592 = vst.msk [vmem:[%s591] sm:$0xf] %vm538, %v588
        %593 = vrot.lane.b32.xlu0 %v554, 104
        %v594 = vpop.permute.xlu0 %593
        %s596 = sadd.s32 0, 3
        %s597 = smul.addr %s596, 4
        %s598 = scalar_lea.vmem [#allocation2], %s597
        %599 = vst.msk [vmem:[%s598] sm:$0xf] %vm538, %v594
        %600 = vrot.lane.b32.xlu0 %v543, 72
        %v601 = vpop.permute.xlu0 %600
        %s603 = smul.addr %s596, 4
        %s604 = scalar_lea.vmem [#allocation3], %s603
        %605 = vst.msk [vmem:[%s604] sm:$0xf] %vm538, %v601
        %606 = vrot.lane.b32.xlu0 %v543, 40
        %v607 = vpop.permute.xlu0 %606
        %s609 = smul.addr %s596, 4
        %s610 = scalar_lea.vmem [#allocation4], %s609
        %611 = vst.msk [vmem:[%s610] sm:$0xf] %vm538, %v607
        %v612 = vld [vmem:[#allocation2] sm:$0xf]
        %v613 = vld [vmem:[#allocation2 + $0x4] sm:$0xf]
        %v614 = vld [vmem:[#allocation2 + $0x8] sm:$0xf]
        %v615 = vld [vmem:[#allocation2 + $0xc] sm:$0xf]
        %v616 = vld [vmem:[#allocation3] sm:$0xf]
        %v617 = vld [vmem:[#allocation3 + $0x4] sm:$0xf]
        %v618 = vld [vmem:[#allocation3 + $0x8] sm:$0xf]
        %v619 = vld [vmem:[#allocation3 + $0xc] sm:$0xf]
        %v620 = vld [vmem:[#allocation4] sm:$0xf]
        %v621 = vld [vmem:[#allocation4 + $0x4] sm:$0xf]
        %v622 = vld [vmem:[#allocation4 + $0x8] sm:$0xf]
        %v623 = vld [vmem:[#allocation4 + $0xc] sm:$0xf]
        %vm624 = vcmask 64512
        %v626 = vsel %vm624, %v612, 0
        %v629 = vsel %vm624, %v616, 0
        %631 = vmatprep.subr.bf16.mxu0 0
        %632 = vmatpush1.bf16.xpose.msra.mxu0 %v629
        %633 = vmatprep.subr.bf16.mxu0 0
        %634 = vmatpush1.bf16.xpose.msra.mxu0 0
        %635 = vmatprep.subr.bf16.mxu0 0
        %636 = vmatpush1.bf16.xpose.msra.mxu0 0
        %637 = vmatprep.subr.bf16.mxu0 0
        %638 = vmatpush1.bf16.xpose.msra.mxu0 0
        %639 = vmatprep.subr.bf16.mxu0 0
        %640 = vmatpush1.bf16.xpose.msra.mxu0 0
        %641 = vmatprep.subr.bf16.mxu0 0
        %642 = vmatpush1.bf16.xpose.msra.mxu0 0
        %643 = vmatprep.subr.bf16.mxu0 0
        %644 = vmatpush1.bf16.xpose.msra.mxu0 0
        %645 = vmatprep.subr.bf16.mxu0 0
        %646 = vmatpush1.bf16.xpose.msra.mxu0 0
        %647 = vmatprep.subr.bf16.mxu0 0
        %648 = vmatpush1.bf16.xpose.msra.mxu0 0
        %649 = vmatprep.subr.bf16.mxu0 0
        %650 = vmatpush1.bf16.xpose.msra.mxu0 0
        %651 = vmatprep.subr.bf16.mxu0 0
        %652 = vmatpush1.bf16.xpose.msra.mxu0 0
        %653 = vmatprep.subr.bf16.mxu0 0
        %654 = vmatpush1.bf16.xpose.msra.mxu0 0
        %655 = vmatprep.subr.bf16.mxu0 0
        %656 = vmatpush1.bf16.xpose.msra.mxu0 0
        %657 = vmatprep.subr.bf16.mxu0 0
        %658 = vmatpush1.bf16.xpose.msra.mxu0 0
        %659 = vmatprep.subr.bf16.mxu0 0
        %660 = vmatpush1.bf16.xpose.msra.mxu0 0
        %661 = vmatprep.subr.bf16.mxu0 0
        %662 = vmatpush1.bf16.xpose.msra.mxu0 0
        %663 = vmatprep.mubr.bf16.mxu0 0
        %664 = vmatmul.mubr.bf16.gmra.mrb[0].mxu0 %v626
        %v665 = vpop.f32.mrb[0].mxu0
        %v666 = vadd.f32 0.0, %v665
        %v667 = vpop.f32.mrb[0].mxu0
        %v668 = vpop.f32.mrb[0].mxu0
        %v669 = vpop.f32.mrb[0].mxu0
        %670 = vdwg.mxu0
        %v672 = vsel %vm624, %v613, 0
        %v675 = vsel %vm624, %v617, 0
        %677 = vmatprep.subr.bf16.mxu0 0
        %678 = vmatpush1.bf16.xpose.msra.mxu0 %v675
        %679 = vmatprep.subr.bf16.mxu0 0
        %680 = vmatpush1.bf16.xpose.msra.mxu0 0
        %681 = vmatprep.subr.bf16.mxu0 0
        %682 = vmatpush1.bf16.xpose.msra.mxu0 0
        %683 = vmatprep.subr.bf16.mxu0 0
        %684 = vmatpush1.bf16.xpose.msra.mxu0 0
        %685 = vmatprep.subr.bf16.mxu0 0
        %686 = vmatpush1.bf16.xpose.msra.mxu0 0
        %687 = vmatprep.subr.bf16.mxu0 0
        %688 = vmatpush1.bf16.xpose.msra.mxu0 0
        %689 = vmatprep.subr.bf16.mxu0 0
        %690 = vmatpush1.bf16.xpose.msra.mxu0 0
        %691 = vmatprep.subr.bf16.mxu0 0
        %692 = vmatpush1.bf16.xpose.msra.mxu0 0
        %693 = vmatprep.subr.bf16.mxu0 0
        %694 = vmatpush1.bf16.xpose.msra.mxu0 0
        %695 = vmatprep.subr.bf16.mxu0 0
        %696 = vmatpush1.bf16.xpose.msra.mxu0 0
        %697 = vmatprep.subr.bf16.mxu0 0
        %698 = vmatpush1.bf16.xpose.msra.mxu0 0
        %699 = vmatprep.subr.bf16.mxu0 0
        %700 = vmatpush1.bf16.xpose.msra.mxu0 0
        %701 = vmatprep.subr.bf16.mxu0 0
        %702 = vmatpush1.bf16.xpose.msra.mxu0 0
        %703 = vmatprep.subr.bf16.mxu0 0
        %704 = vmatpush1.bf16.xpose.msra.mxu0 0
        %705 = vmatprep.subr.bf16.mxu0 0
        %706 = vmatpush1.bf16.xpose.msra.mxu0 0
        %707 = vmatprep.subr.bf16.mxu0 0
        %708 = vmatpush1.bf16.xpose.msra.mxu0 0
        %709 = vmatprep.mubr.bf16.mxu0 0
        %710 = vmatmul.mubr.bf16.gmra.mrb[0].mxu0 %v672
        %v711 = vpop.f32.mrb[0].mxu0
        %v712 = vadd.f32 0.0, %v711
        %v713 = vpop.f32.mrb[0].mxu0
        %v714 = vpop.f32.mrb[0].mxu0
        %v715 = vpop.f32.mrb[0].mxu0
        %716 = vdwg.mxu0
        %v718 = vsel %vm624, %v614, 0
        %v721 = vsel %vm624, %v618, 0
        %723 = vmatprep.subr.bf16.mxu0 0
        %724 = vmatpush1.bf16.xpose.msra.mxu0 %v721
        %725 = vmatprep.subr.bf16.mxu0 0
        %726 = vmatpush1.bf16.xpose.msra.mxu0 0
        %727 = vmatprep.subr.bf16.mxu0 0
        %728 = vmatpush1.bf16.xpose.msra.mxu0 0
        %729 = vmatprep.subr.bf16.mxu0 0
        %730 = vmatpush1.bf16.xpose.msra.mxu0 0
        %731 = vmatprep.subr.bf16.mxu0 0
        %732 = vmatpush1.bf16.xpose.msra.mxu0 0
        %733 = vmatprep.subr.bf16.mxu0 0
        %734 = vmatpush1.bf16.xpose.msra.mxu0 0
        %735 = vmatprep.subr.bf16.mxu0 0
        %736 = vmatpush1.bf16.xpose.msra.mxu0 0
        %737 = vmatprep.subr.bf16.mxu0 0
        %738 = vmatpush1.bf16.xpose.msra.mxu0 0
        %739 = vmatprep.subr.bf16.mxu0 0
        %740 = vmatpush1.bf16.xpose.msra.mxu0 0
        %741 = vmatprep.subr.bf16.mxu0 0
        %742 = vmatpush1.bf16.xpose.msra.mxu0 0
        %743 = vmatprep.subr.bf16.mxu0 0
        %744 = vmatpush1.bf16.xpose.msra.mxu0 0
        %745 = vmatprep.subr.bf16.mxu0 0
        %746 = vmatpush1.bf16.xpose.msra.mxu0 0
        %747 = vmatprep.subr.bf16.mxu0 0
        %748 = vmatpush1.bf16.xpose.msra.mxu0 0
        %749 = vmatprep.subr.bf16.mxu0 0
        %750 = vmatpush1.bf16.xpose.msra.mxu0 0
        %751 = vmatprep.subr.bf16.mxu0 0
        %752 = vmatpush1.bf16.xpose.msra.mxu0 0
        %753 = vmatprep.subr.bf16.mxu0 0
        %754 = vmatpush1.bf16.xpose.msra.mxu0 0
        %755 = vmatprep.mubr.bf16.mxu0 0
        %756 = vmatmul.mubr.bf16.gmra.mrb[0].mxu0 %v718
        %v757 = vpop.f32.mrb[0].mxu0
        %v758 = vadd.f32 0.0, %v757
        %v759 = vpop.f32.mrb[0].mxu0
        %v760 = vpop.f32.mrb[0].mxu0
        %v761 = vpop.f32.mrb[0].mxu0
        %762 = vdwg.mxu0
        %v764 = vsel %vm624, %v615, 0
        %v767 = vsel %vm624, %v619, 0
        %769 = vmatprep.subr.bf16.mxu0 0
        %770 = vmatpush1.bf16.xpose.msra.mxu0 %v767
        %771 = vmatprep.subr.bf16.mxu0 0
        %772 = vmatpush1.bf16.xpose.msra.mxu0 0
        %773 = vmatprep.subr.bf16.mxu0 0
        %774 = vmatpush1.bf16.xpose.msra.mxu0 0
        %775 = vmatprep.subr.bf16.mxu0 0
        %776 = vmatpush1.bf16.xpose.msra.mxu0 0
        %777 = vmatprep.subr.bf16.mxu0 0
        %778 = vmatpush1.bf16.xpose.msra.mxu0 0
        %779 = vmatprep.subr.bf16.mxu0 0
        %780 = vmatpush1.bf16.xpose.msra.mxu0 0
        %781 = vmatprep.subr.bf16.mxu0 0
        %782 = vmatpush1.bf16.xpose.msra.mxu0 0
        %783 = vmatprep.subr.bf16.mxu0 0
        %784 = vmatpush1.bf16.xpose.msra.mxu0 0
        %785 = vmatprep.subr.bf16.mxu0 0
        %786 = vmatpush1.bf16.xpose.msra.mxu0 0
        %787 = vmatprep.subr.bf16.mxu0 0
        %788 = vmatpush1.bf16.xpose.msra.mxu0 0
        %789 = vmatprep.subr.bf16.mxu0 0
        %790 = vmatpush1.bf16.xpose.msra.mxu0 0
        %791 = vmatprep.subr.bf16.mxu0 0
        %792 = vmatpush1.bf16.xpose.msra.mxu0 0
        %793 = vmatprep.subr.bf16.mxu0 0
        %794 = vmatpush1.bf16.xpose.msra.mxu0 0
        %795 = vmatprep.subr.bf16.mxu0 0
        %796 = vmatpush1.bf16.xpose.msra.mxu0 0
        %797 = vmatprep.subr.bf16.mxu0 0
        %798 = vmatpush1.bf16.xpose.msra.mxu0 0
        %799 = vmatprep.subr.bf16.mxu0 0
        %800 = vmatpush1.bf16.xpose.msra.mxu0 0
        %801 = vmatprep.mubr.bf16.mxu0 0
        %802 = vmatmul.mubr.bf16.gmra.mrb[0].mxu0 %v764
        %v803 = vpop.f32.mrb[0].mxu0
        %v804 = vadd.f32 0.0, %v803
        %v805 = vpop.f32.mrb[0].mxu0
        %v806 = vpop.f32.mrb[0].mxu0
        %v807 = vpop.f32.mrb[0].mxu0
        %808 = vdwg.mxu0
        %v809 = vsel %vm624, %v666, -inf
        %810 = vmax.xlane.f32.xlu0 %v809
        %v811 = vpop.xlane.xlu0 %810
        %v812 = vsel %vm624, %v712, -inf
        %813 = vmax.xlane.f32.xlu0 %v812
        %v814 = vpop.xlane.xlu0 %813
        %v815 = vsel %vm624, %v758, -inf
        %816 = vmax.xlane.f32.xlu0 %v815
        %v817 = vpop.xlane.xlu0 %816
        %v818 = vsel %vm624, %v804, -inf
        %819 = vmax.xlane.f32.xlu0 %v818
        %v820 = vpop.xlane.xlu0 %819
        %v821 = vmax.f32 %v811, -1e+30
        %v822 = vmax.f32 %v814, -1e+30
        %v823 = vmax.f32 %v817, -1e+30
        %v824 = vmax.f32 %v820, -1e+30
        %v825 = vsub.f32 -1e+30, %v821
        %v826 = vsub.f32 -1e+30, %v822
        %v827 = vsub.f32 -1e+30, %v823
        %v828 = vsub.f32 -1e+30, %v824
        %v829 = vmul.f32 %v825, 1.442695
        %v830 = vpow.pop %v829
        %v831 = vmul.f32 %v826, 1.442695
        %v832 = vpow.pop %v831
        %v833 = vmul.f32 %v827, 1.442695
        %v834 = vpow.pop %v833
        %v835 = vmul.f32 %v828, 1.442695
        %v836 = vpow.pop %v835
        %v837 = vsub.f32 %v666, %v821
        %v838 = vsub.f32 %v712, %v822
        %v839 = vsub.f32 %v758, %v823
        %v840 = vsub.f32 %v804, %v824
        %v841 = vmul.f32 %v837, 1.442695
        %v842 = vpow.pop %v841
        %v843 = vmul.f32 %v838, 1.442695
        %v844 = vpow.pop %v843
        %v845 = vmul.f32 %v839, 1.442695
        %v846 = vpow.pop %v845
        %v847 = vmul.f32 %v840, 1.442695
        %v848 = vpow.pop %v847
        %v849 = vmul.f32 %v830, 0.0
        %v850 = vmul.f32 %v832, 0.0
        %v851 = vmul.f32 %v834, 0.0
        %v852 = vmul.f32 %v836, 0.0
        %v853 = vsel %vm624, %v842, 0.0
        %854 = vadd.xlane.f32.xlu0 %v853
        %v855 = vpop.xlane.xlu0 %854
        %v856 = vsel %vm624, %v844, 0.0
        %857 = vadd.xlane.f32.xlu0 %v856
        %v858 = vpop.xlane.xlu0 %857
        %v859 = vsel %vm624, %v846, 0.0
        %860 = vadd.xlane.f32.xlu0 %v859
        %v861 = vpop.xlane.xlu0 %860
        %v862 = vsel %vm624, %v848, 0.0
        %863 = vadd.xlane.f32.xlu0 %v862
        %v864 = vpop.xlane.xlu0 %863
        %v865 = vadd.f32 %v849, %v855
        %v866 = vadd.f32 %v850, %v858
        %v867 = vadd.f32 %v851, %v861
        %v868 = vadd.f32 %v852, %v864
        %v869 = vpack.c.bf16 %v842, %v842
        %v870 = vpack.c.bf16 %v844, %v844
        %v871 = vpack.c.bf16 %v846, %v846
        %v872 = vpack.c.bf16 %v848, %v848
        %v874 = vsel %vm624, %v869, 0
        %vm876 = vcmask 1043456
        %v878 = vsel %vm876, %v620, 0
        %880 = vmatprep.subr.bf16.mxu0 0
        %881 = vmatpush1.bf16.msra.mxu0 %v878
        %882 = vmatprep.subr.bf16.mxu0 0
        %883 = vmatpush1.bf16.msra.mxu0 0
        %884 = vmatprep.subr.bf16.mxu0 0
        %885 = vmatpush1.bf16.msra.mxu0 0
        %886 = vmatprep.subr.bf16.mxu0 0
        %887 = vmatpush1.bf16.msra.mxu0 0
        %888 = vmatprep.subr.bf16.mxu0 0
        %889 = vmatpush1.bf16.msra.mxu0 0
        %890 = vmatprep.subr.bf16.mxu0 0
        %891 = vmatpush1.bf16.msra.mxu0 0
        %892 = vmatprep.subr.bf16.mxu0 0
        %893 = vmatpush1.bf16.msra.mxu0 0
        %894 = vmatprep.subr.bf16.mxu0 0
        %895 = vmatpush1.bf16.msra.mxu0 0
        %896 = vmatprep.subr.bf16.mxu0 0
        %897 = vmatpush1.bf16.msra.mxu0 0
        %898 = vmatprep.subr.bf16.mxu0 0
        %899 = vmatpush1.bf16.msra.mxu0 0
        %900 = vmatprep.subr.bf16.mxu0 0
        %901 = vmatpush1.bf16.msra.mxu0 0
        %902 = vmatprep.subr.bf16.mxu0 0
        %903 = vmatpush1.bf16.msra.mxu0 0
        %904 = vmatprep.subr.bf16.mxu0 0
        %905 = vmatpush1.bf16.msra.mxu0 0
        %906 = vmatprep.subr.bf16.mxu0 0
        %907 = vmatpush1.bf16.msra.mxu0 0
        %908 = vmatprep.subr.bf16.mxu0 0
        %909 = vmatpush1.bf16.msra.mxu0 0
        %910 = vmatprep.subr.bf16.mxu0 0
        %911 = vmatpush1.bf16.msra.mxu0 0
        %912 = vmatprep.mubr.bf16.mxu0 0
        %913 = vmatmul.mubr.bf16.gmra.mrb[0].mxu0 %v874
        %v914 = vpop.f32.mrb[0].mxu0
        %v915 = vadd.f32 0.0, %v914
        %v916 = vpop.f32.mrb[0].mxu0
        %v917 = vpop.f32.mrb[0].mxu0
        %v918 = vpop.f32.mrb[0].mxu0
        %919 = vdwg.mxu0
        %v921 = vsel %vm624, %v870, 0
        %v924 = vsel %vm876, %v621, 0
        %926 = vmatprep.subr.bf16.mxu0 0
        %927 = vmatpush1.bf16.msra.mxu0 %v924
        %928 = vmatprep.subr.bf16.mxu0 0
        %929 = vmatpush1.bf16.msra.mxu0 0
        %930 = vmatprep.subr.bf16.mxu0 0
        %931 = vmatpush1.bf16.msra.mxu0 0
        %932 = vmatprep.subr.bf16.mxu0 0
        %933 = vmatpush1.bf16.msra.mxu0 0
        %934 = vmatprep.subr.bf16.mxu0 0
        %935 = vmatpush1.bf16.msra.mxu0 0
        %936 = vmatprep.subr.bf16.mxu0 0
        %937 = vmatpush1.bf16.msra.mxu0 0
        %938 = vmatprep.subr.bf16.mxu0 0
        %939 = vmatpush1.bf16.msra.mxu0 0
        %940 = vmatprep.subr.bf16.mxu0 0
        %941 = vmatpush1.bf16.msra.mxu0 0
        %942 = vmatprep.subr.bf16.mxu0 0
        %943 = vmatpush1.bf16.msra.mxu0 0
        %944 = vmatprep.subr.bf16.mxu0 0
        %945 = vmatpush1.bf16.msra.mxu0 0
        %946 = vmatprep.subr.bf16.mxu0 0
        %947 = vmatpush1.bf16.msra.mxu0 0
        %948 = vmatprep.subr.bf16.mxu0 0
        %949 = vmatpush1.bf16.msra.mxu0 0
        %950 = vmatprep.subr.bf16.mxu0 0
        %951 = vmatpush1.bf16.msra.mxu0 0
        %952 = vmatprep.subr.bf16.mxu0 0
        %953 = vmatpush1.bf16.msra.mxu0 0
        %954 = vmatprep.subr.bf16.mxu0 0
        %955 = vmatpush1.bf16.msra.mxu0 0
        %956 = vmatprep.subr.bf16.mxu0 0
        %957 = vmatpush1.bf16.msra.mxu0 0
        %958 = vmatprep.mubr.bf16.mxu0 0
        %959 = vmatmul.mubr.bf16.gmra.mrb[0].mxu0 %v921
        %v960 = vpop.f32.mrb[0].mxu0
        %v961 = vadd.f32 0.0, %v960
        %v962 = vpop.f32.mrb[0].mxu0
        %v963 = vpop.f32.mrb[0].mxu0
        %v964 = vpop.f32.mrb[0].mxu0
        %965 = vdwg.mxu0
        %v967 = vsel %vm624, %v871, 0
        %v970 = vsel %vm876, %v622, 0
        %972 = vmatprep.subr.bf16.mxu0 0
        %973 = vmatpush1.bf16.msra.mxu0 %v970
        %974 = vmatprep.subr.bf16.mxu0 0
        %975 = vmatpush1.bf16.msra.mxu0 0
        %976 = vmatprep.subr.bf16.mxu0 0
        %977 = vmatpush1.bf16.msra.mxu0 0
        %978 = vmatprep.subr.bf16.mxu0 0
        %979 = vmatpush1.bf16.msra.mxu0 0
        %980 = vmatprep.subr.bf16.mxu0 0
        %981 = vmatpush1.bf16.msra.mxu0 0
        %982 = vmatprep.subr.bf16.mxu0 0
        %983 = vmatpush1.bf16.msra.mxu0 0
        %984 = vmatprep.subr.bf16.mxu0 0
        %985 = vmatpush1.bf16.msra.mxu0 0
        %986 = vmatprep.subr.bf16.mxu0 0
        %987 = vmatpush1.bf16.msra.mxu0 0
        %988 = vmatprep.subr.bf16.mxu0 0
        %989 = vmatpush1.bf16.msra.mxu0 0
        %990 = vmatprep.subr.bf16.mxu0 0
        %991 = vmatpush1.bf16.msra.mxu0 0
        %992 = vmatprep.subr.bf16.mxu0 0
        %993 = vmatpush1.bf16.msra.mxu0 0
        %994 = vmatprep.subr.bf16.mxu0 0
        %995 = vmatpush1.bf16.msra.mxu0 0
        %996 = vmatprep.subr.bf16.mxu0 0
        %997 = vmatpush1.bf16.msra.mxu0 0
        %998 = vmatprep.subr.bf16.mxu0 0
        %999 = vmatpush1.bf16.msra.mxu0 0
        %1000 = vmatprep.subr.bf16.mxu0 0
        %1001 = vmatpush1.bf16.msra.mxu0 0
        %1002 = vmatprep.subr.bf16.mxu0 0
        %1003 = vmatpush1.bf16.msra.mxu0 0
        %1004 = vmatprep.mubr.bf16.mxu0 0
        %1005 = vmatmul.mubr.bf16.gmra.mrb[0].mxu0 %v967
        %v1006 = vpop.f32.mrb[0].mxu0
        %v1007 = vadd.f32 0.0, %v1006
        %v1008 = vpop.f32.mrb[0].mxu0
        %v1009 = vpop.f32.mrb[0].mxu0
        %v1010 = vpop.f32.mrb[0].mxu0
        %1011 = vdwg.mxu0
        %v1013 = vsel %vm624, %v872, 0
        %v1016 = vsel %vm876, %v623, 0
        %1018 = vmatprep.subr.bf16.mxu0 0
        %1019 = vmatpush1.bf16.msra.mxu0 %v1016
        %1020 = vmatprep.subr.bf16.mxu0 0
        %1021 = vmatpush1.bf16.msra.mxu0 0
        %1022 = vmatprep.subr.bf16.mxu0 0
        %1023 = vmatpush1.bf16.msra.mxu0 0
        %1024 = vmatprep.subr.bf16.mxu0 0
        %1025 = vmatpush1.bf16.msra.mxu0 0
        %1026 = vmatprep.subr.bf16.mxu0 0
        %1027 = vmatpush1.bf16.msra.mxu0 0
        %1028 = vmatprep.subr.bf16.mxu0 0
        %1029 = vmatpush1.bf16.msra.mxu0 0
        %1030 = vmatprep.subr.bf16.mxu0 0
        %1031 = vmatpush1.bf16.msra.mxu0 0
        %1032 = vmatprep.subr.bf16.mxu0 0
        %1033 = vmatpush1.bf16.msra.mxu0 0
        %1034 = vmatprep.subr.bf16.mxu0 0
        %1035 = vmatpush1.bf16.msra.mxu0 0
        %1036 = vmatprep.subr.bf16.mxu0 0
        %1037 = vmatpush1.bf16.msra.mxu0 0
        %1038 = vmatprep.subr.bf16.mxu0 0
        %1039 = vmatpush1.bf16.msra.mxu0 0
        %1040 = vmatprep.subr.bf16.mxu0 0
        %1041 = vmatpush1.bf16.msra.mxu0 0
        %1042 = vmatprep.subr.bf16.mxu0 0
        %1043 = vmatpush1.bf16.msra.mxu0 0
        %1044 = vmatprep.subr.bf16.mxu0 0
        %1045 = vmatpush1.bf16.msra.mxu0 0
        %1046 = vmatprep.subr.bf16.mxu0 0
        %1047 = vmatpush1.bf16.msra.mxu0 0
        %1048 = vmatprep.subr.bf16.mxu0 0
        %1049 = vmatpush1.bf16.msra.mxu0 0
        %1050 = vmatprep.mubr.bf16.mxu0 0
        %1051 = vmatmul.mubr.bf16.gmra.mrb[0].mxu0 %v1013
        %v1052 = vpop.f32.mrb[0].mxu0
        %v1053 = vadd.f32 0.0, %v1052
        %v1054 = vpop.f32.mrb[0].mxu0
        %v1055 = vpop.f32.mrb[0].mxu0
        %v1056 = vpop.f32.mrb[0].mxu0
        %1057 = vdwg.mxu0
        %v1058 = vadd.f32 %v849, %v915
        %v1059 = vadd.f32 %v850, %v961
        %v1060 = vadd.f32 %v851, %v1007
        %v1061 = vadd.f32 %v852, %v1053
        %v1062 = vrcp.pop %v865
        %v1063 = vrcp.pop %v866
        %v1064 = vrcp.pop %v867
        %v1065 = vrcp.pop %v868
        %v1066 = vmul.f32 %v1058, %v1062
        %v1067 = vmul.f32 %v1059, %v1063
        %v1068 = vmul.f32 %v1060, %v1064
        %v1069 = vmul.f32 %v1061, %v1065
        %1071 = vrot.lane.b32.xlu0 %v1067, 8
        %v1072 = vpop.permute.xlu0 %1071
        %1075 = vrot.lane.b32.xlu0 %v1068, 16
        %v1076 = vpop.permute.xlu0 %1075
        %1079 = vrot.lane.b32.xlu0 %v1069, 24
        %v1080 = vpop.permute.xlu0 %1079
        %v1082 = vsel %vm624, %v1066, %v1072
        %vm1083 = vcmask 130048
        %v1084 = vsel %vm1083, %v1082, %v1076
        %vm1085 = vcmask 195584
        %v1086 = vsel %vm1085, %v1084, %v1080
        %v1087 = vld [vmem:[%s435] sm:$0xff]
        %v1088 = vpack.c.bf16 %v1086, %v1086
        %v1089 = vld [vmem:[%s5] sm:$0xf]
        %v1090 = vld [vmem:[%s5 + $0x4] sm:$0xf]
        %v1091 = vld [vmem:[%s5 + $0x8] sm:$0xf]
        %v1092 = vld [vmem:[%s5 + $0xc] sm:$0xf]
        %v1093 = vld [vmem:[%s6] sm:$0x1]
        %v1095 = vlaneseq
        %v1096 = vshrl.u32 %v1095, 7
        %v1097 = vsub.s32 0, %v1096
        %v1098 = vrot.slane %v1093, %v1097
        %v1104 = vunpack.c.l.b16 %v1089
        %v1105 = vunpack.c.l.b16 %v1090
        %v1106 = vunpack.c.l.b16 %v1091
        %v1107 = vunpack.c.l.b16 %v1092
        %v1108 = vpack.c.b16 %v1105, %v1104
        %v1109 = vpack.c.b16 %v1107, %v1106
        %v1113 = vsel %vm440, %v1088, 0
        %1115 = vmatprep.subr.bf16.mxu0 0
        %1116 = vmatpush1.bf16.msra.mxu0 %v1108
        %1117 = vmatprep.subr.bf16.mxu0 0
        %1118 = vmatpush1.bf16.msra.mxu0 %v1109
        %1119 = vmatprep.subr.bf16.mxu0 0
        %1120 = vmatpush1.bf16.msra.mxu0 0
        %1121 = vmatprep.subr.bf16.mxu0 0
        %1122 = vmatpush1.bf16.msra.mxu0 0
        %1123 = vmatprep.subr.bf16.mxu0 0
        %1124 = vmatpush1.bf16.msra.mxu0 0
        %1125 = vmatprep.subr.bf16.mxu0 0
        %1126 = vmatpush1.bf16.msra.mxu0 0
        %1127 = vmatprep.subr.bf16.mxu0 0
        %1128 = vmatpush1.bf16.msra.mxu0 0
        %1129 = vmatprep.subr.bf16.mxu0 0
        %1130 = vmatpush1.bf16.msra.mxu0 0
        %1131 = vmatprep.subr.bf16.mxu0 0
        %1132 = vmatpush1.bf16.msra.mxu0 0
        %1133 = vmatprep.subr.bf16.mxu0 0
        %1134 = vmatpush1.bf16.msra.mxu0 0
        %1135 = vmatprep.subr.bf16.mxu0 0
        %1136 = vmatpush1.bf16.msra.mxu0 0
        %1137 = vmatprep.subr.bf16.mxu0 0
        %1138 = vmatpush1.bf16.msra.mxu0 0
        %1139 = vmatprep.subr.bf16.mxu0 0
        %1140 = vmatpush1.bf16.msra.mxu0 0
        %1141 = vmatprep.subr.bf16.mxu0 0
        %1142 = vmatpush1.bf16.msra.mxu0 0
        %1143 = vmatprep.subr.bf16.mxu0 0
        %1144 = vmatpush1.bf16.msra.mxu0 0
        %1145 = vmatprep.subr.bf16.mxu0 0
        %1146 = vmatpush1.bf16.msra.mxu0 0
        %1147 = vmatprep.mubr.bf16.mxu0 0
        %1148 = vmatmul.mubr.bf16.gmra.mrb[0].mxu0 %v1113
        %v1149 = vpop.f32.mrb[0].mxu0
        %v1150 = vadd.f32 %v1098, %v1149
        %v1151 = vpop.f32.mrb[0].mxu0
        %v1152 = vpop.f32.mrb[0].mxu0
        %v1153 = vpop.f32.mrb[0].mxu0
        %1154 = vdwg.mxu0
        %v1155 = vadd.f32 %v1087, %v1150
        %v1156 = vld [vmem:[%s7] sm:$0x1]
        %v1157 = vld [vmem:[%s8] sm:$0x1]
        %v1158 = vsel %vm440, %v1155, 0.0
        %1159 = vadd.xlane.f32.xlu0 %v1158
        %v1160 = vpop.xlane.xlu0 %1159
        %v1161 = vmul.f32 %v1160, %v444
        %v1162 = vsub.f32 %v1155, %v1161
        %v1163 = vmul.f32 %v1162, %v1162
        %v1164 = vsel %vm440, %v1163, 0.0
        %1165 = vadd.xlane.f32.xlu0 %v1164
        %v1166 = vpop.xlane.xlu0 %1165
        %v1167 = vmul.f32 %v1166, %v444
        %v1168 = vadd.f32 %v1167, 1e-05
        %v1169 = vrsqrt.pop %v1168
        %v1170 = vmul.f32 %v1162, %v1169
        %v1172 = vlaneseq
        %v1173 = vshrl.u32 %v1172, 7
        %v1174 = vsub.s32 0, %v1173
        %v1175 = vrot.slane %v1156, %v1174
        %v1177 = vmul.f32 %v1170, %v1175
        %v1179 = vlaneseq
        %v1180 = vshrl.u32 %v1179, 7
        %v1181 = vsub.s32 0, %v1180
        %v1182 = vrot.slane %v1157, %v1181
        %v1184 = vadd.f32 %v1177, %v1182
        %v1185 = vpack.c.bf16 %v1184, %v1184
        %v1186 = vld [vmem:[%s9] sm:$0xf]
        %v1187 = vld [vmem:[%s9 + $0x4] sm:$0xf]
        %v1188 = vld [vmem:[%s9 + $0x8] sm:$0xf]
        %v1189 = vld [vmem:[%s9 + $0xc] sm:$0xf]
        %v1190 = vld [vmem:[%s10] sm:$0x1]
        %v1192 = vlaneseq
        %v1193 = vshrl.u32 %v1192, 7
        %v1194 = vsub.s32 0, %v1193
        %v1195 = vrot.slane %v1190, %v1194
        %v1201 = vunpack.c.l.b16 %v1186
        %v1202 = vunpack.c.l.b16 %v1187
        %v1203 = vunpack.c.l.b16 %v1188
        %v1204 = vunpack.c.l.b16 %v1189
        %v1205 = vpack.c.b16 %v1202, %v1201
        %v1206 = vpack.c.b16 %v1204, %v1203
        %v1210 = vsel %vm440, %v1185, 0
        %1212 = vmatprep.subr.bf16.mxu0 0
        %1213 = vmatpush1.bf16.msra.mxu0 %v1205
        %1214 = vmatprep.subr.bf16.mxu0 0
        %1215 = vmatpush1.bf16.msra.mxu0 %v1206
        %1216 = vmatprep.subr.bf16.mxu0 0
        %1217 = vmatpush1.bf16.msra.mxu0 0
        %1218 = vmatprep.subr.bf16.mxu0 0
        %1219 = vmatpush1.bf16.msra.mxu0 0
        %1220 = vmatprep.subr.bf16.mxu0 0
        %1221 = vmatpush1.bf16.msra.mxu0 0
        %1222 = vmatprep.subr.bf16.mxu0 0
        %1223 = vmatpush1.bf16.msra.mxu0 0
        %1224 = vmatprep.subr.bf16.mxu0 0
        %1225 = vmatpush1.bf16.msra.mxu0 0
        %1226 = vmatprep.subr.bf16.mxu0 0
        %1227 = vmatpush1.bf16.msra.mxu0 0
        %1228 = vmatprep.subr.bf16.mxu0 0
        %1229 = vmatpush1.bf16.msra.mxu0 0
        %1230 = vmatprep.subr.bf16.mxu0 0
        %1231 = vmatpush1.bf16.msra.mxu0 0
        %1232 = vmatprep.subr.bf16.mxu0 0
        %1233 = vmatpush1.bf16.msra.mxu0 0
        %1234 = vmatprep.subr.bf16.mxu0 0
        %1235 = vmatpush1.bf16.msra.mxu0 0
        %1236 = vmatprep.subr.bf16.mxu0 0
        %1237 = vmatpush1.bf16.msra.mxu0 0
        %1238 = vmatprep.subr.bf16.mxu0 0
        %1239 = vmatpush1.bf16.msra.mxu0 0
        %1240 = vmatprep.subr.bf16.mxu0 0
        %1241 = vmatpush1.bf16.msra.mxu0 0
        %1242 = vmatprep.subr.bf16.mxu0 0
        %1243 = vmatpush1.bf16.msra.mxu0 0
        %1244 = vmatprep.mubr.bf16.mxu0 0
        %1245 = vmatmul.mubr.bf16.gmra.mrb[0].mxu0 %v1210
        %v1246 = vpop.f32.mrb[0].mxu0
        %v1247 = vadd.f32 %v1195, %v1246
        %v1248 = vpop.f32.mrb[0].mxu0
        %v1249 = vpop.f32.mrb[0].mxu0
        %v1250 = vpop.f32.mrb[0].mxu0
        %1251 = vdwg.mxu0
        %v1252 = vmax.f32 %v1247, 0.0
        %v1253 = vpack.c.bf16 %v1252, %v1252
        %v1254 = vld [vmem:[%s11] sm:$0xf]
        %v1255 = vld [vmem:[%s11 + $0x4] sm:$0xf]
        %v1256 = vld [vmem:[%s11 + $0x8] sm:$0xf]
        %v1257 = vld [vmem:[%s11 + $0xc] sm:$0xf]
        %v1258 = vld [vmem:[%s11 + $0x10] sm:$0xf]
        %v1259 = vld [vmem:[%s11 + $0x14] sm:$0xf]
        %v1260 = vld [vmem:[%s11 + $0x18] sm:$0xf]
        %v1261 = vld [vmem:[%s11 + $0x1c] sm:$0xf]
        %v1262 = vld [vmem:[%s11 + $0x20] sm:$0xf]
        %v1263 = vld [vmem:[%s11 + $0x24] sm:$0xf]
        %v1264 = vld [vmem:[%s11 + $0x28] sm:$0xf]
        %v1265 = vld [vmem:[%s11 + $0x2c] sm:$0xf]
        %v1266 = vld [vmem:[%s11 + $0x30] sm:$0xf]
        %v1267 = vld [vmem:[%s11 + $0x34] sm:$0xf]
        %v1268 = vld [vmem:[%s11 + $0x38] sm:$0xf]
        %v1269 = vld [vmem:[%s11 + $0x3c] sm:$0xf]
        %v1286 = vunpack.c.l.b16 %v1254
        %v1287 = vunpack.c.l.b16 %v1255
        %v1288 = vunpack.c.l.b16 %v1256
        %v1289 = vunpack.c.l.b16 %v1257
        %v1290 = vunpack.c.l.b16 %v1258
        %v1291 = vunpack.c.l.b16 %v1259
        %v1292 = vunpack.c.l.b16 %v1260
        %v1293 = vunpack.c.l.b16 %v1261
        %v1294 = vunpack.c.l.b16 %v1262
        %v1295 = vunpack.c.l.b16 %v1263
        %v1296 = vunpack.c.l.b16 %v1264
        %v1297 = vunpack.c.l.b16 %v1265
        %v1298 = vunpack.c.l.b16 %v1266
        %v1299 = vunpack.c.l.b16 %v1267
        %v1300 = vunpack.c.l.b16 %v1268
        %v1301 = vunpack.c.l.b16 %v1269
        %v1302 = vpack.c.b16 %v1287, %v1286
        %v1303 = vpack.c.b16 %v1289, %v1288
        %v1304 = vpack.c.b16 %v1291, %v1290
        %v1305 = vpack.c.b16 %v1293, %v1292
        %v1306 = vpack.c.b16 %v1295, %v1294
        %v1307 = vpack.c.b16 %v1297, %v1296
        %v1308 = vpack.c.b16 %v1299, %v1298
        %v1309 = vpack.c.b16 %v1301, %v1300
        %1318 = vmatprep.subr.bf16.mxu0 0
        %1319 = vmatpush1.bf16.msra.mxu0 %v1302
        %1320 = vmatprep.subr.bf16.mxu0 0
        %1321 = vmatpush1.bf16.msra.mxu0 %v1303
        %1322 = vmatprep.subr.bf16.mxu0 0
        %1323 = vmatpush1.bf16.msra.mxu0 %v1304
        %1324 = vmatprep.subr.bf16.mxu0 0
        %1325 = vmatpush1.bf16.msra.mxu0 %v1305
        %1326 = vmatprep.subr.bf16.mxu0 0
        %1327 = vmatpush1.bf16.msra.mxu0 %v1306
        %1328 = vmatprep.subr.bf16.mxu0 0
        %1329 = vmatpush1.bf16.msra.mxu0 %v1307
        %1330 = vmatprep.subr.bf16.mxu0 0
        %1331 = vmatpush1.bf16.msra.mxu0 %v1308
        %1332 = vmatprep.subr.bf16.mxu0 0
        %1333 = vmatpush1.bf16.msra.mxu0 %v1309
        %1334 = vmatprep.subr.bf16.mxu0 0
        %1335 = vmatpush1.bf16.msra.mxu0 0
        %1336 = vmatprep.subr.bf16.mxu0 0
        %1337 = vmatpush1.bf16.msra.mxu0 0
        %1338 = vmatprep.subr.bf16.mxu0 0
        %1339 = vmatpush1.bf16.msra.mxu0 0
        %1340 = vmatprep.subr.bf16.mxu0 0
        %1341 = vmatpush1.bf16.msra.mxu0 0
        %1342 = vmatprep.subr.bf16.mxu0 0
        %1343 = vmatpush1.bf16.msra.mxu0 0
        %1344 = vmatprep.subr.bf16.mxu0 0
        %1345 = vmatpush1.bf16.msra.mxu0 0
        %1346 = vmatprep.subr.bf16.mxu0 0
        %1347 = vmatpush1.bf16.msra.mxu0 0
        %1348 = vmatprep.subr.bf16.mxu0 0
        %1349 = vmatpush1.bf16.msra.mxu0 0
        %1350 = vmatprep.mubr.bf16.mxu0 0
        %1351 = vmatmul.mubr.bf16.gmra.mrb[0].mxu0 %v1253
        %v1352 = vpop.f32.mrb[0].mxu0
        %v1353 = vadd.f32 0.0, %v1352
        %v1354 = vpop.f32.mrb[0].mxu0
        %v1355 = vpop.f32.mrb[0].mxu0
        %v1356 = vpop.f32.mrb[0].mxu0
        %1357 = vdwg.mxu0
        %v1358 = vadd.f32 %v1155, %v1353
        %v1359 = vld [vmem:[%s12] sm:$0x1]
        %v1361 = vlaneseq
        %v1362 = vshrl.u32 %v1361, 7
        %v1363 = vsub.s32 0, %v1362
        %v1364 = vrot.slane %v1359, %v1363
        %v1366 = vadd.f32 %v1358, %v1364
        %1367 = vst.msk [vmem:[%s431] sm:$0xff] %vm440, %v1366
        %s1368 = sand.u32 %s313, 1
        %s1369 = scalar_lea.sflag [#allocation6], %s1368
        %s1370 = sand.u32 %s313, 1
        %s1371 = smul.addr %s1370, 8
        %s1372 = scalar_lea.vmem [#allocation5], %s1371
        // Predicated region
        $region73: #{tpu_custom_call.1} parent=71 // pred_check
          %p1373 = pneg %p323
        $region74: #{tpu_custom_call.1} parent=71 // pred_check_branch
          %1375 = sbr.rel (%p1373) target = $region76
        $region75: #{tpu_custom_call.1} parent=71 // pred_region
          %s1377 = ssub.s32 128, 128
          %1378 = vsyncadd %s1369, %s1377
          %s1379 = smul.addr %s27, 128
          %s1380 = scalar_lea.hbm %s13, %s1379
          %s1382 = sshll.u32 %s1372, 4
          %s1383 = int_to_ptr.vmem [resolvable:$true] %s1382
          %1385 = dma.vmem_to_hbm [thread:$0]  %s1383, 128, %s1380, %s1369
        $region76: #{tpu_custom_call.1} parent=71 // pred_fallthru
          _
      $region72: #{tpu_custom_call.1} parent=5 // pred_fallthru
        _
      %p1386 = scmp.le.s32.totalorder 2, %s22
      // Predicated region
      $region77: #{tpu_custom_call.1} parent=5 // pred_check
        %p1387 = pneg %p1386
      $region78: #{tpu_custom_call.1} parent=5 // pred_check_branch
        %1389 = sbr.rel (%p1387) target = $region80
      $region79: #{tpu_custom_call.1} parent=5 // pred_region
        %s1390 = ssub.s32 %s22, 2
        // Predicated region
        $region81: #{tpu_custom_call.1} parent=79 // pred_check
          %p1391 = pneg %p329
        $region82: #{tpu_custom_call.1} parent=79 // pred_check_branch
          %1393 = sbr.rel (%p1391) target = $region84
        $region83: #{tpu_custom_call.1} parent=79 // pred_region
          %s1394 = sand.u32 %s314, 1
          %s1395 = scalar_lea.sflag [#allocation6], %s1394
          %s1396 = sand.u32 %s314, 1
          %s1397 = smul.addr %s1396, 8
          %s1398 = scalar_lea.vmem [#allocation5], %s1397
          %1399 = dma.done %s1395, 128
        $region84: #{tpu_custom_call.1} parent=79 // pred_fallthru
          _
      $region80: #{tpu_custom_call.1} parent=5 // pred_fallthru
        _
    $region6: #{tpu_custom_call.1} parent=1 // loop_footer
      %s26 = sadd.s32 1, %s22
    $region7: #{tpu_custom_call.1} parent=1 // loop_footer_branch
      %21 = sbr.rel target = $region3
    $region8: #{tpu_custom_call.1} parent=1 // loop_exit
      _
    %1400 = vsyncpa [#allocation6], 1
    %s1401 = scalar_lea.sflag [#allocation6], 1
    %1402 = vsyncpa %s1401, 1

</llo_original>
